<compile_context>
chip_gen: v7x
topology: tpu7x:2x2x1
jax: 0.10.0
libtpu: 0.0.40
codegen_flags: <defaults>
</compile_context>

<pallas_src>
import functools

import jax
import jax.numpy as jnp
import numpy as np
from jax.experimental import pallas as pl
from jax.experimental.pallas import tpu as pltpu

_LANE = 128                                  # lane width
_SUBLANE = 8                                 # f32 sublane tile
_VMEM_LIMIT_BYTES = 48 * 1024 * 1024         # > default scoped limit, < physical on v5e/v6e/v7x


def _round_up(x, m):
    return ((x + m - 1) // m) * m


def _pick_tile(dim, pref, align):
    """Largest divisor of `dim` that is <= pref and a multiple of `align`.

    Callers pad dims so a valid aligned divisor always exists; full extent is
    only a last-resort fallback (never a giant un-pipelined block by accident).
    """
    if dim <= pref:
        return dim
    t = (pref // align) * align
    while t >= align:
        if dim % t == 0:
            return t
        t -= align
    return dim


# -----------------------------------------------------------------------------
# Generic tiled matmul + bias (hoisted input projection and dense head).
# Fully parallel grid -> shards across both TCs on v7x. K (= E or Hp) is small
# for an RNN, so it is not tiled; M/N are tiled for the MXU.
# -----------------------------------------------------------------------------
def _matmul_bias_kernel(a_ref, b_ref, bias_ref, o_ref):
    o_ref[...] = (
        jnp.dot(a_ref[...], b_ref[...], preferred_element_type=jnp.float32)
        + bias_ref[...]
    ).astype(o_ref.dtype)


def matmul_bias(a, b, bias, *, out_dtype, tm_pref=256, tn_pref=256):
    """out[M, N] = a[M, K] @ b[K, N] + bias[1, N], f32 MXU accumulation."""
    M, K = a.shape
    K2, N = b.shape
    assert K == K2
    tm = _pick_tile(M, tm_pref, _SUBLANE)
    tn = _pick_tile(N, tn_pref, _LANE)
    grid = (M // tm, N // tn)
    return pl.pallas_call(
        _matmul_bias_kernel,
        out_shape=jax.ShapeDtypeStruct((M, N), out_dtype),
        grid_spec=pltpu.PrefetchScalarGridSpec(
            num_scalar_prefetch=0,
            grid=grid,
            in_specs=[
                pl.BlockSpec((tm, K), lambda i, j: (i, 0)),
                pl.BlockSpec((K, tn), lambda i, j: (0, j)),
                pl.BlockSpec((1, tn), lambda i, j: (0, j)),
            ],
            out_specs=pl.BlockSpec((tm, tn), lambda i, j: (i, j)),
        ),
        compiler_params=pltpu.CompilerParams(
            dimension_semantics=("parallel", "parallel"),
            vmem_limit_bytes=_VMEM_LIMIT_BYTES,
        ),
    )(a, b, bias)


# -----------------------------------------------------------------------------
# Sequential LSTM recurrence.  Grid = (batch tiles [parallel], time blocks
# [arbitrary]).  One grid step processes K time steps (static unroll, K <= 8).
# Gate order (PyTorch): i, f, g, o.  Hp is a multiple of 128 so every gate
# slice is lane-aligned and every h_seq store is lane-dense.
# -----------------------------------------------------------------------------
def _lstm_recurrence_kernel(gx_ref, whh_ref, h0_ref, c0_ref,
                            hseq_ref, hfin_ref, cfin_ref):
    t = pl.program_id(1)

    # h/c state lives directly in the constant-index (VMEM-resident) output
    # blocks; last write is the final LSTM state.  Re-initialized per batch tile.
    @pl.when(t == 0)
    def _():
        hfin_ref[...] = h0_ref[...]
        cfin_ref[...] = c0_ref[...]

    whh = whh_ref[...]                 # (Hp, 4Hp), compute dtype
    h = hfin_ref[...]                  # (tb, Hp) f32 state
    c = cfin_ref[...]                  # (tb, Hp) f32 state
    Hp = h.shape[-1]
    K = gx_ref.shape[1]                # time steps in this block (static, <= 8)

    # TODO(synk): pin W_hh^T in the MXU weight registers across the K-step loop
    # (pltpu.matmul_push_rhs / matmul_acc_lhs / matmul_pop) instead of re-pushing
    # the RHS each step; jnp.dot kept here for lowering robustness.
    for k in range(K):                 # bounded static unroll amortizes grid overhead
        # gates_x already contains x_t @ W_ih^T + (b_ih + b_hh); only the
        # recurrent matmul remains inside the sequential loop.
        gates = gx_ref[:, k, :].astype(jnp.float32) + jnp.dot(
            h.astype(whh.dtype), whh, preferred_element_type=jnp.float32)
        i_g = jax.nn.sigmoid(gates[:, 0 * Hp:1 * Hp])   # lane-aligned slices
        f_g = jax.nn.sigmoid(gates[:, 1 * Hp:2 * Hp])
        g_g = jnp.tanh(gates[:, 2 * Hp:3 * Hp])
        o_g = jax.nn.sigmoid(gates[:, 3 * Hp:4 * Hp])
        c = f_g * c + i_g * g_g
        h = o_g * jnp.tanh(c)
        hseq_ref[:, k, :] = h.astype(hseq_ref.dtype)    # lane-dense (Hp >= 128)

    hfin_ref[...] = h
    cfin_ref[...] = c


def _pick_batch_tile(Bp):
    """Two batch tiles when possible so the parallel batch axis can shard
    across both TensorCores on v7x; otherwise one tile (v5e/v6e: 1 TC)."""
    if Bp >= 16 and Bp % 16 == 0:
        return Bp // 2
    return Bp


def _pick_time_block(T, bytes_per_step, cap=8, budget=16 * 1024 * 1024):
    """K time steps per grid point: divisor of T, capped (bounded unroll /
    vreg pressure), shrunk until double-buffered gx + h_seq blocks fit VMEM."""
    best = 1
    for k in range(1, min(T, cap) + 1):
        if T % k == 0 and 2 * k * bytes_per_step <= budget:
            best = k
    return best


def lstm_recurrence(gates_x, w_hh_t, h0, c0, *, seq_dtype):
    """gates_x: (Bp, T, 4Hp) pre-activations; returns (h_seq, h_fin, c_fin)."""
    Bp, T, G4 = gates_x.shape
    Hp = w_hh_t.shape[0]
    tb = _pick_batch_tile(Bp)
    bytes_per_step = tb * (G4 * gates_x.dtype.itemsize
                           + Hp * jnp.dtype(seq_dtype).itemsize)
    K = _pick_time_block(T, bytes_per_step)
    grid = (Bp // tb, T // K)
    return pl.pallas_call(
        _lstm_recurrence_kernel,
        out_shape=(
            jax.ShapeDtypeStruct((Bp, T, Hp), seq_dtype),   # h for every step
            jax.ShapeDtypeStruct((Bp, Hp), jnp.float32),    # final h
            jax.ShapeDtypeStruct((Bp, Hp), jnp.float32),    # final c
        ),
        grid_spec=pltpu.PrefetchScalarGridSpec(
            num_scalar_prefetch=0,
            grid=grid,
            in_specs=[
                pl.BlockSpec((tb, K, G4), lambda b, t: (b, t, 0)),   # gate pre-acts
                pl.BlockSpec((Hp, G4), lambda b, t: (0, 0)),         # W_hh^T
                pl.BlockSpec((tb, Hp), lambda b, t: (b, 0)),         # h0
                pl.BlockSpec((tb, Hp), lambda b, t: (b, 0)),         # c0
            ],
            out_specs=[
                pl.BlockSpec((tb, K, Hp), lambda b, t: (b, t, 0)),   # h per step
                pl.BlockSpec((tb, Hp), lambda b, t: (b, 0)),         # final h
                pl.BlockSpec((tb, Hp), lambda b, t: (b, 0)),         # final c
            ],
        ),
        compiler_params=pltpu.CompilerParams(
            dimension_semantics=("parallel", "arbitrary"),   # batch || , time = recurrence
            vmem_limit_bytes=_VMEM_LIMIT_BYTES,
        ),
    )(gates_x, w_hh_t, h0, c0)


# -----------------------------------------------------------------------------
# One-time parameter preparation: pad hidden/vocab dims to lane multiples
# (zero padding -> results unchanged) and pre-cast weights to the compute dtype.
# -----------------------------------------------------------------------------
def _pad_gates_last(x, H, Hp):
    """Pad the trailing 4H gate dim to 4Hp per gate (PyTorch order i,f,g,o)."""
    if Hp == H:
        return x
    lead = x.shape[:-1]
    x4 = x.reshape(lead + (4, H))
    x4 = jnp.pad(x4, [(0, 0)] * len(lead) + [(0, 0), (0, Hp - H)])
    return x4.reshape(lead + (4 * Hp,))


def prepare_params(params, compute_dtype=jnp.bfloat16):
    w_ih_t, w_hh_t = params["w_ih_t"], params["w_hh_t"]
    b_gate, w_d_t, b_d = params["b_gate"], params["w_d_t"], params["b_d"]
    H = w_hh_t.shape[0]
    V = w_d_t.shape[1]
    Hp = _round_up(H, _LANE)
    Vp = _round_up(V, _LANE)
    cd = compute_dtype

    w_ih_t_p = _pad_gates_last(w_ih_t, H, Hp)                                   # (E, 4Hp)
    w_hh_t_p = _pad_gates_last(jnp.pad(w_hh_t, ((0, Hp - H), (0, 0))), H, Hp)   # (Hp, 4Hp)
    b_gate_p = _pad_gates_last(b_gate, H, Hp)                                   # (1, 4Hp)
    w_d_t_p = jnp.pad(w_d_t, ((0, Hp - H), (0, Vp - V)))                        # (Hp, Vp)
    b_d_p = jnp.pad(b_d, ((0, 0), (0, Vp - V)))                                 # (1, Vp)

    return {
        "embedding": params["embedding"].astype(cd),
        "w_ih_t": w_ih_t_p.astype(cd),
        "w_hh_t": w_hh_t_p.astype(cd),
        "b_gate": b_gate_p.astype(jnp.float32),
        "w_d_t": w_d_t_p.astype(cd),
        "b_d": b_d_p.astype(jnp.float32),
    }


# -----------------------------------------------------------------------------
# Forward pass (matches RNNModule.forward semantics, batch_first).
# -----------------------------------------------------------------------------
def rnn_forward_pallas(x_ids, dev_params, h0, c0, *, n_vocab):
    """x_ids: int32 [B, T]; h0, c0: [1, B, H].  Returns (logits [B,T,V], (h, c))."""
    emb_table = dev_params["embedding"]      # (V, E)    compute dtype
    w_ih_t = dev_params["w_ih_t"]            # (E, 4Hp)  compute dtype
    w_hh_t = dev_params["w_hh_t"]            # (Hp, 4Hp) compute dtype
    b_gate = dev_params["b_gate"]            # (1, 4Hp)  f32
    w_d_t = dev_params["w_d_t"]              # (Hp, Vp)  compute dtype
    b_d = dev_params["b_d"]                  # (1, Vp)   f32
    cd = w_ih_t.dtype

    B, T = x_ids.shape
    H = h0.shape[-1]
    Hp = w_hh_t.shape[0]
    Vp = w_d_t.shape[1]
    V = n_vocab
    E = emb_table.shape[1]

    # Pad batch to a sublane multiple (no-op when already aligned).
    Bp = _round_up(max(B, _SUBLANE), _SUBLANE)
    x_ids_p = jnp.pad(x_ids, ((0, Bp - B), (0, 0)))
    h0_p = jnp.pad(h0[0].astype(jnp.float32), ((0, Bp - B), (0, Hp - H)))
    c0_p = jnp.pad(c0[0].astype(jnp.float32), ((0, Bp - B), (0, Hp - H)))

    # (1) Embedding gather (plain JAX glue), already in compute dtype.
    # TODO(synk): fuse the row gather into the projection kernel (scalar-prefetch
    # ids + pl.Element) once vocab/embedding sizes make it worthwhile.
    embed = jnp.take(emb_table, x_ids_p, axis=0)                     # (Bp, T, E)
    embed_2d = embed.reshape(Bp * T, E)

    # (2) Hoisted input projection; gates_x emitted in compute dtype.
    gates_x = matmul_bias(embed_2d, w_ih_t, b_gate, out_dtype=cd)    # (Bp*T, 4Hp)
    gates_x = gates_x.reshape(Bp, T, 4 * Hp)

    # (3) Sequential recurrence (only h@W_hh^T + elementwise inside).
    h_seq, h_fin, c_fin = lstm_recurrence(gates_x, w_hh_t, h0_p, c0_p, seq_dtype=cd)

    # (4) Hoisted dense head.
    logits_2d = matmul_bias(h_seq.reshape(Bp * T, Hp), w_d_t, b_d,
                            out_dtype=jnp.float32)                   # (Bp*T, Vp)
    logits = logits_2d.reshape(Bp, T, Vp)[:B, :, :V]                 # batch_first, f32

    return logits, (h_fin[:B, :H][None], c_fin[:B, :H][None])        # (1, B, H) each


# -----------------------------------------------------------------------------
# Pure-JAX reference (lax.scan) with identical math / casts, for correctness.
# -----------------------------------------------------------------------------
def rnn_forward_ref(x_ids, params, h0, c0, *, compute_dtype=jnp.float32):
    cd = compute_dtype
    emb_table = params["embedding"]
    w_ih_t = params["w_ih_t"].astype(cd)
    w_hh_t = params["w_hh_t"].astype(cd)
    b_gate = params["b_gate"]
    w_d_t = params["w_d_t"].astype(cd)
    b_d = params["b_d"]
    Hd = params["w_hh_t"].shape[0]

    embed = jnp.take(emb_table, x_ids, axis=0).astype(cd)             # (B, T, E)
    gx = (jnp.dot(embed, w_ih_t, preferred_element_type=jnp.float32)
          + b_gate).astype(cd)                                        # gates_x in cd (as kernel)
    gx_tm = jnp.transpose(gx, (1, 0, 2))                              # (T, B, 4H)

    def step(carry, g_t):
        h, c = carry
        gates = g_t.astype(jnp.float32) + jnp.dot(
            h.astype(cd), w_hh_t, preferred_element_type=jnp.float32)
        i_g = jax.nn.sigmoid(gates[:, 0 * Hd:1 * Hd])
        f_g = jax.nn.sigmoid(gates[:, 1 * Hd:2 * Hd])
        g_g = jnp.tanh(gates[:, 2 * Hd:3 * Hd])
        o_g = jax.nn.sigmoid(gates[:, 3 * Hd:4 * Hd])
        c_new = f_g * c + i_g * g_g
        h_new = o_g * jnp.tanh(c_new)
        return (h_new, c_new), h_new.astype(cd)

    (h_f, c_f), hs = jax.lax.scan(step, (h0[0], c0[0]), gx_tm)        # hs: (T, B, H)
    logits_tm = jnp.dot(hs, w_d_t, preferred_element_type=jnp.float32) + b_d
    return jnp.transpose(logits_tm, (1, 0, 2)), (h_f[None], c_f[None])


def init_params(key, n_vocab, embedding_size, lstm_size):
    """Deterministic parameter init (uniform, same shapes as the PyTorch module)."""
    k_emb, k_wih, k_whh, k_bih, k_bhh, k_wd, k_bd = jax.random.split(key, 7)
    H, E, V = lstm_size, embedding_size, n_vocab
    s = 1.0 / np.sqrt(H)
    w_ih = jax.random.uniform(k_wih, (4 * H, E), jnp.float32, -s, s)   # PyTorch layout
    w_hh = jax.random.uniform(k_whh, (4 * H, H), jnp.float32, -s, s)
    b_ih = jax.random.uniform(k_bih, (4 * H,), jnp.float32, -s, s)
    b_hh = jax.random.uniform(k_bhh, (4 * H,), jnp.float32, -s, s)
    w_d = jax.random.uniform(k_wd, (V, H), jnp.float32, -s, s)
    b_d = jax.random.uniform(k_bd, (V,), jnp.float32, -s, s)
    return {
        "embedding": jax.random.normal(k_emb, (V, E), jnp.float32),
        "w_ih_t": w_ih.T,                       # (E, 4H)
        "w_hh_t": w_hh.T,                       # (H, 4H)
        "b_gate": (b_ih + b_hh)[None, :],       # (1, 4H)
        "w_d_t": w_d.T,                         # (H, V)
        "b_d": b_d[None, :],                    # (1, V)
    }


if __name__ == "__main__":
    # Small shapes consistent with the module: batch=2, seq=8, embed=32, hidden=32, vocab=64.
    B, T, E, H, V = 2, 8, 32, 32, 64

    key = jax.random.PRNGKey(0)
    k_params, k_x = jax.random.split(key)
    params = init_params(k_params, n_vocab=V, embedding_size=E, lstm_size=H)

    x_ids = jax.random.randint(k_x, (B, T), 0, V, dtype=jnp.int32)
    h0 = jnp.zeros((1, B, H), jnp.float32)     # zero_state(batch_size)
    c0 = jnp.zeros((1, B, H), jnp.float32)

    # One-time weight prep (pad + pre-cast) -- not repeated per forward call.
    dev_params_bf16 = prepare_params(params, compute_dtype=jnp.bfloat16)
    dev_params_f32 = prepare_params(params, compute_dtype=jnp.float32)

    fwd = jax.jit(functools.partial(rnn_forward_pallas, n_vocab=V))

    # bf16-matmul path (performance configuration) vs. matching bf16 reference.
    logits, (h_f, c_f) = fwd(x_ids, dev_params_bf16, h0, c0)
    jax.block_until_ready((logits, h_f, c_f))
    l_ref, (h_ref, c_ref) = rnn_forward_ref(x_ids, params, h0, c0,
                                            compute_dtype=jnp.bfloat16)
    assert logits.shape == (B, T, V) and h_f.shape == (1, B, H) and c_f.shape == (1, B, H)
    np.testing.assert_allclose(np.asarray(logits), np.asarray(l_ref), rtol=1e-2, atol=1e-2)
    np.testing.assert_allclose(np.asarray(h_f), np.asarray(h_ref), rtol=1e-2, atol=1e-2)
    np.testing.assert_allclose(np.asarray(c_f), np.asarray(c_ref), rtol=1e-2, atol=1e-2)

    # f32 path vs. f32 reference (exact PyTorch-equivalent math, tight tolerance).
    logits32, (h32, c32) = fwd(x_ids, dev_params_f32, h0, c0)
    jax.block_until_ready((logits32, h32, c32))
    l_ref32, (h_ref32, c_ref32) = rnn_forward_ref(x_ids, params, h0, c0,
                                                  compute_dtype=jnp.float32)
    np.testing.assert_allclose(np.asarray(logits32), np.asarray(l_ref32), rtol=1e-5, atol=1e-5)
    np.testing.assert_allclose(np.asarray(h32), np.asarray(h_ref32), rtol=1e-5, atol=1e-5)
    np.testing.assert_allclose(np.asarray(c32), np.asarray(c_ref32), rtol=1e-5, atol=1e-5)

    print("KERNEL_OK")
</pallas_src>

<mosaic_0001>
module attributes {stable_mosaic.version = 11 : i64} {
  func.func @_matmul_bias_kernel(%arg0: i32, %arg1: i32, %arg2: memref<64x32xbf16, #tpu.memory_space<vmem>>, %arg3: memref<32x256xbf16, #tpu.memory_space<vmem>>, %arg4: memref<1x256xf32, #tpu.memory_space<vmem>>, %arg5: memref<64x256xbf16, #tpu.memory_space<vmem>>) attributes {dimension_semantics = [#tpu.dimension_semantics<parallel>, #tpu.dimension_semantics<parallel>], iteration_bounds = array<i64: 1, 2>, scalar_prefetch = 0 : i64, scratch_operands = 0 : i64, tpu.core_type = #tpu.core_type<tc>, window_params = [{transform_indices = @transform_0, window_bounds = array<i64: 64, 32>}, {transform_indices = @transform_1, window_bounds = array<i64: 32, 256>}, {transform_indices = @transform_2, window_bounds = array<i64: 1, 256>}, {transform_indices = @transform_3, window_bounds = array<i64: 64, 256>}]} {
    %c0 = arith.constant 0 : index
    %c0_0 = arith.constant 0 : index
    %0 = vector.load %arg2[%c0, %c0_0] : memref<64x32xbf16, #tpu.memory_space<vmem>>, vector<64x32xbf16>
    %c0_1 = arith.constant 0 : index
    %c0_2 = arith.constant 0 : index
    %1 = vector.load %arg3[%c0_1, %c0_2] : memref<32x256xbf16, #tpu.memory_space<vmem>>, vector<32x256xbf16>
    %cst = arith.constant dense<0.000000e+00> : vector<64x256xf32>
    %2 = tpu.matmul %0, %1, %cst {dimension_numbers = #tpu.dot_dimension_numbers<[1], [0], [0], [1], [0, 0, 1, 1], [], []>} : vector<64x32xbf16>, vector<32x256xbf16>, vector<64x256xf32> -> vector<64x256xf32>
    %c0_3 = arith.constant 0 : index
    %c0_4 = arith.constant 0 : index
    %3 = vector.load %arg4[%c0_3, %c0_4] : memref<1x256xf32, #tpu.memory_space<vmem>>, vector<1x256xf32>
    %4 = vector.broadcast %3 : vector<1x256xf32> to vector<64x256xf32>
    %5 = arith.addf %2, %4 : vector<64x256xf32>
    %6 = arith.truncf %5 : vector<64x256xf32> to vector<64x256xbf16>
    %c0_5 = arith.constant 0 : index
    %c0_6 = arith.constant 0 : index
    %7 = vector.load %arg5[%c0_5, %c0_6] : memref<64x256xbf16, #tpu.memory_space<vmem>>, vector<64x256xbf16>
    tpu.vector_store %arg5[%c0_5, %c0_6], %6 {strides = array<i32>} : memref<64x256xbf16, #tpu.memory_space<vmem>>, vector<64x256xbf16>,
    return
  }
  func.func @transform_0(%arg0: i32, %arg1: i32) -> (i32, i32) {
    %c0_i32 = arith.constant 0 : i32
    %c0_i32_0 = arith.constant 0 : i32
    return %arg0, %c0_i32 : i32, i32
  }
  func.func @transform_1(%arg0: i32, %arg1: i32) -> (i32, i32) {
    %c0_i32 = arith.constant 0 : i32
    %c0_i32_0 = arith.constant 0 : i32
    return %c0_i32, %arg1 : i32, i32
  }
  func.func @transform_2(%arg0: i32, %arg1: i32) -> (i32, i32) {
    %c0_i32 = arith.constant 0 : i32
    %c0_i32_0 = arith.constant 0 : i32
    return %c0_i32, %arg1 : i32, i32
  }
  func.func @transform_3(%arg0: i32, %arg1: i32) -> (i32, i32) {
    %c0_i32 = arith.constant 0 : i32
    return %arg0, %arg1 : i32, i32
  }
}

module attributes {stable_mosaic.version = 11 : i64} {
  func.func @_matmul_bias_kernel(%arg0: i32, %arg1: i32, %arg2: memref<64x128xbf16, #tpu.memory_space<vmem>>, %arg3: memref<128x128xbf16, #tpu.memory_space<vmem>>, %arg4: memref<1x128xf32, #tpu.memory_space<vmem>>, %arg5: memref<64x128xf32, #tpu.memory_space<vmem>>) attributes {dimension_semantics = [#tpu.dimension_semantics<parallel>, #tpu.dimension_semantics<parallel>], iteration_bounds = array<i64: 1, 1>, scalar_prefetch = 0 : i64, scratch_operands = 0 : i64, tpu.core_type = #tpu.core_type<tc>, window_params = [{transform_indices = @transform_0, window_bounds = array<i64: 64, 128>}, {transform_indices = @transform_1, window_bounds = array<i64: 128, 128>}, {transform_indices = @transform_2, window_bounds = array<i64: 1, 128>}, {transform_indices = @transform_3, window_bounds = array<i64: 64, 128>}]} {
    %c0 = arith.constant 0 : index
    %c0_0 = arith.constant 0 : index
    %0 = vector.load %arg2[%c0, %c0_0] : memref<64x128xbf16, #tpu.memory_space<vmem>>, vector<64x128xbf16>
    %c0_1 = arith.constant 0 : index
    %c0_2 = arith.constant 0 : index
    %1 = vector.load %arg3[%c0_1, %c0_2] : memref<128x128xbf16, #tpu.memory_space<vmem>>, vector<128x128xbf16>
    %cst = arith.constant dense<0.000000e+00> : vector<64x128xf32>
    %2 = tpu.matmul %0, %1, %cst {dimension_numbers = #tpu.dot_dimension_numbers<[1], [0], [0], [1], [0, 0, 1, 1], [], []>} : vector<64x128xbf16>, vector<128x128xbf16>, vector<64x128xf32> -> vector<64x128xf32>
    %c0_3 = arith.constant 0 : index
    %c0_4 = arith.constant 0 : index
    %3 = vector.load %arg4[%c0_3, %c0_4] : memref<1x128xf32, #tpu.memory_space<vmem>>, vector<1x128xf32>
    %4 = vector.broadcast %3 : vector<1x128xf32> to vector<64x128xf32>
    %5 = arith.addf %2, %4 : vector<64x128xf32>
    %c0_5 = arith.constant 0 : index
    %c0_6 = arith.constant 0 : index
    %6 = vector.load %arg5[%c0_5, %c0_6] : memref<64x128xf32, #tpu.memory_space<vmem>>, vector<64x128xf32>
    tpu.vector_store %arg5[%c0_5, %c0_6], %5 {strides = array<i32>} : memref<64x128xf32, #tpu.memory_space<vmem>>, vector<64x128xf32>,
    return
  }
  func.func @transform_0(%arg0: i32, %arg1: i32) -> (i32, i32) {
    %c0_i32 = arith.constant 0 : i32
    %c0_i32_0 = arith.constant 0 : i32
    return %arg0, %c0_i32 : i32, i32
  }
  func.func @transform_1(%arg0: i32, %arg1: i32) -> (i32, i32) {
    %c0_i32 = arith.constant 0 : i32
    %c0_i32_0 = arith.constant 0 : i32
    return %c0_i32, %arg1 : i32, i32
  }
  func.func @transform_2(%arg0: i32, %arg1: i32) -> (i32, i32) {
    %c0_i32 = arith.constant 0 : i32
    %c0_i32_0 = arith.constant 0 : i32
    return %c0_i32, %arg1 : i32, i32
  }
  func.func @transform_3(%arg0: i32, %arg1: i32) -> (i32, i32) {
    %c0_i32 = arith.constant 0 : i32
    return %arg0, %arg1 : i32, i32
  }
}

module attributes {stable_mosaic.version = 11 : i64} {
  func.func @_lstm_recurrence_kernel(%arg0: i32, %arg1: i32, %arg2: memref<8x8x512xbf16, #tpu.memory_space<vmem>>, %arg3: memref<128x512xbf16, #tpu.memory_space<vmem>>, %arg4: memref<8x128xf32, #tpu.memory_space<vmem>>, %arg5: memref<8x128xf32, #tpu.memory_space<vmem>>, %arg6: memref<8x8x128xbf16, #tpu.memory_space<vmem>>, %arg7: memref<8x128xf32, #tpu.memory_space<vmem>>, %arg8: memref<8x128xf32, #tpu.memory_space<vmem>>) attributes {dimension_semantics = [#tpu.dimension_semantics<parallel>, #tpu.dimension_semantics<arbitrary>], iteration_bounds = array<i64: 1, 1>, scalar_prefetch = 0 : i64, scratch_operands = 0 : i64, tpu.core_type = #tpu.core_type<tc>, window_params = [{transform_indices = @transform_0, window_bounds = array<i64: 8, 8, 512>}, {pipeline_mode = #tpu.pipeline_mode<synchronous>, transform_indices = @transform_1, window_bounds = array<i64: 128, 512>}, {transform_indices = @transform_2, window_bounds = array<i64: 8, 128>}, {transform_indices = @transform_3, window_bounds = array<i64: 8, 128>}, {transform_indices = @transform_4, window_bounds = array<i64: 8, 8, 128>}, {transform_indices = @transform_5, window_bounds = array<i64: 8, 128>}, {transform_indices = @transform_6, window_bounds = array<i64: 8, 128>}]} {
    %c0_i32 = arith.constant 0 : i32
    %0 = arith.cmpi eq, %arg1, %c0_i32 : i32
    %1 = arith.extui %0 : i1 to i32
    %c0_i32_0 = arith.constant 0 : i32
    %2 = arith.cmpi ne, %1, %c0_i32_0 : i32
    scf.if %2 {
      %c0_82 = arith.constant 0 : index
      %c0_83 = arith.constant 0 : index
      %288 = vector.load %arg4[%c0_82, %c0_83] : memref<8x128xf32, #tpu.memory_space<vmem>>, vector<8x128xf32>
      %c0_84 = arith.constant 0 : index
      %c0_85 = arith.constant 0 : index
      %289 = vector.load %arg7[%c0_84, %c0_85] : memref<8x128xf32, #tpu.memory_space<vmem>>, vector<8x128xf32>
      tpu.vector_store %arg7[%c0_84, %c0_85], %288 {strides = array<i32>} : memref<8x128xf32, #tpu.memory_space<vmem>>, vector<8x128xf32>,
      %c0_86 = arith.constant 0 : index
      %c0_87 = arith.constant 0 : index
      %290 = vector.load %arg5[%c0_86, %c0_87] : memref<8x128xf32, #tpu.memory_space<vmem>>, vector<8x128xf32>
      %c0_88 = arith.constant 0 : index
      %c0_89 = arith.constant 0 : index
      %291 = vector.load %arg8[%c0_88, %c0_89] : memref<8x128xf32, #tpu.memory_space<vmem>>, vector<8x128xf32>
      tpu.vector_store %arg8[%c0_88, %c0_89], %290 {strides = array<i32>} : memref<8x128xf32, #tpu.memory_space<vmem>>, vector<8x128xf32>,
    } else {
    }
    %c0 = arith.constant 0 : index
    %c0_1 = arith.constant 0 : index
    %3 = vector.load %arg3[%c0, %c0_1] : memref<128x512xbf16, #tpu.memory_space<vmem>>, vector<128x512xbf16>
    %c0_2 = arith.constant 0 : index
    %c0_3 = arith.constant 0 : index
    %4 = vector.load %arg7[%c0_2, %c0_3] : memref<8x128xf32, #tpu.memory_space<vmem>>, vector<8x128xf32>
    %c0_4 = arith.constant 0 : index
    %c0_5 = arith.constant 0 : index
    %5 = vector.load %arg8[%c0_4, %c0_5] : memref<8x128xf32, #tpu.memory_space<vmem>>, vector<8x128xf32>
    %c0_6 = arith.constant 0 : index
    %c0_7 = arith.constant 0 : index
    %c0_8 = arith.constant 0 : index
    %6 = vector.load %arg2[%c0_6, %c0_7, %c0_8] : memref<8x8x512xbf16, #tpu.memory_space<vmem>>, vector<8x1x512xbf16>
    %7 = vector.shape_cast %6 : vector<8x1x512xbf16> to vector<8x512xbf16>
    %8 = arith.extf %7 : vector<8x512xbf16> to vector<8x512xf32>
    %9 = arith.truncf %4 : vector<8x128xf32> to vector<8x128xbf16>
    %cst = arith.constant dense<0.000000e+00> : vector<8x512xf32>
    %10 = tpu.matmul %9, %3, %cst {dimension_numbers = #tpu.dot_dimension_numbers<[1], [0], [0], [1], [0, 0, 1, 1], [], []>} : vector<8x128xbf16>, vector<128x512xbf16>, vector<8x512xf32> -> vector<8x512xf32>
    %11 = arith.addf %8, %10 : vector<8x512xf32>
    %12 = vector.extract_strided_slice %11 {offsets = [0, 0], sizes = [8, 128], strides = [1, 1]} : vector<8x512xf32> to vector<8x128xf32>
    %13 = arith.negf %12 : vector<8x128xf32>
    %14 = math.exp %13 : vector<8x128xf32>
    %cst_9 = arith.constant 1.000000e+00 : f32
    %15 = vector.broadcast %cst_9 : f32 to vector<8x128xf32>
    %16 = arith.addf %15, %14 : vector<8x128xf32>
    %17 = arith.divf %15, %16 : vector<8x128xf32>
    %18 = vector.extract_strided_slice %11 {offsets = [0, 128], sizes = [8, 128], strides = [1, 1]} : vector<8x512xf32> to vector<8x128xf32>
    %19 = arith.negf %18 : vector<8x128xf32>
    %20 = math.exp %19 : vector<8x128xf32>
    %cst_10 = arith.constant 1.000000e+00 : f32
    %21 = vector.broadcast %cst_10 : f32 to vector<8x128xf32>
    %22 = arith.addf %21, %20 : vector<8x128xf32>
    %23 = arith.divf %21, %22 : vector<8x128xf32>
    %24 = vector.extract_strided_slice %11 {offsets = [0, 256], sizes = [8, 128], strides = [1, 1]} : vector<8x512xf32> to vector<8x128xf32>
    %25 = math.tanh %24 : vector<8x128xf32>
    %26 = vector.extract_strided_slice %11 {offsets = [0, 384], sizes = [8, 128], strides = [1, 1]} : vector<8x512xf32> to vector<8x128xf32>
    %27 = arith.negf %26 : vector<8x128xf32>
    %28 = math.exp %27 : vector<8x128xf32>
    %cst_11 = arith.constant 1.000000e+00 : f32
    %29 = vector.broadcast %cst_11 : f32 to vector<8x128xf32>
    %30 = arith.addf %29, %28 : vector<8x128xf32>
    %31 = arith.divf %29, %30 : vector<8x128xf32>
    %32 = arith.mulf %23, %5 : vector<8x128xf32>
    %33 = arith.mulf %17, %25 : vector<8x128xf32>
    %34 = arith.addf %32, %33 : vector<8x128xf32>
    %35 = math.tanh %34 : vector<8x128xf32>
    %36 = arith.mulf %31, %35 : vector<8x128xf32>
    %37 = arith.truncf %36 : vector<8x128xf32> to vector<8x128xbf16>
    %c0_12 = arith.constant 0 : index
    %c0_13 = arith.constant 0 : index
    %c0_14 = arith.constant 0 : index
    %38 = vector.load %arg6[%c0_12, %c0_13, %c0_14] : memref<8x8x128xbf16, #tpu.memory_space<vmem>>, vector<8x1x128xbf16>
    %39 = vector.shape_cast %38 : vector<8x1x128xbf16> to vector<8x128xbf16>
    %40 = vector.shape_cast %37 : vector<8x128xbf16> to vector<8x1x128xbf16>
    tpu.vector_store %arg6[%c0_12, %c0_13, %c0_14], %40 {strides = array<i32>} : memref<8x8x128xbf16, #tpu.memory_space<vmem>>, vector<8x1x128xbf16>,
    %c0_15 = arith.constant 0 : index
    %c1 = arith.constant 1 : index
    %c0_16 = arith.constant 0 : index
    %41 = vector.load %arg2[%c0_15, %c1, %c0_16] : memref<8x8x512xbf16, #tpu.memory_space<vmem>>, vector<8x1x512xbf16>
    %42 = vector.shape_cast %41 : vector<8x1x512xbf16> to vector<8x512xbf16>
    %43 = arith.extf %42 : vector<8x512xbf16> to vector<8x512xf32>
    %44 = arith.truncf %36 : vector<8x128xf32> to vector<8x128xbf16>
    %cst_17 = arith.constant dense<0.000000e+00> : vector<8x512xf32>
    %45 = tpu.matmul %44, %3, %cst_17 {dimension_numbers = #tpu.dot_dimension_numbers<[1], [0], [0], [1], [0, 0, 1, 1], [], []>} : vector<8x128xbf16>, vector<128x512xbf16>, vector<8x512xf32> -> vector<8x512xf32>
    %46 = arith.addf %43, %45 : vector<8x512xf32>
    %47 = vector.extract_strided_slice %46 {offsets = [0, 0], sizes = [8, 128], strides = [1, 1]} : vector<8x512xf32> to vector<8x128xf32>
    %48 = arith.negf %47 : vector<8x128xf32>
    %49 = math.exp %48 : vector<8x128xf32>
    %cst_18 = arith.constant 1.000000e+00 : f32
    %50 = vector.broadcast %cst_18 : f32 to vector<8x128xf32>
    %51 = arith.addf %50, %49 : vector<8x128xf32>
    %52 = arith.divf %50, %51 : vector<8x128xf32>
    %53 = vector.extract_strided_slice %46 {offsets = [0, 128], sizes = [8, 128], strides = [1, 1]} : vector<8x512xf32> to vector<8x128xf32>
    %54 = arith.negf %53 : vector<8x128xf32>
    %55 = math.exp %54 : vector<8x128xf32>
    %cst_19 = arith.constant 1.000000e+00 : f32
    %56 = vector.broadcast %cst_19 : f32 to vector<8x128xf32>
    %57 = arith.addf %56, %55 : vector<8x128xf32>
    %58 = arith.divf %56, %57 : vector<8x128xf32>
    %59 = vector.extract_strided_slice %46 {offsets = [0, 256], sizes = [8, 128], strides = [1, 1]} : vector<8x512xf32> to vector<8x128xf32>
    %60 = math.tanh %59 : vector<8x128xf32>
    %61 = vector.extract_strided_slice %46 {offsets = [0, 384], sizes = [8, 128], strides = [1, 1]} : vector<8x512xf32> to vector<8x128xf32>
    %62 = arith.negf %61 : vector<8x128xf32>
    %63 = math.exp %62 : vector<8x128xf32>
    %cst_20 = arith.constant 1.000000e+00 : f32
    %64 = vector.broadcast %cst_20 : f32 to vector<8x128xf32>
    %65 = arith.addf %64, %63 : vector<8x128xf32>
    %66 = arith.divf %64, %65 : vector<8x128xf32>
    %67 = arith.mulf %58, %34 : vector<8x128xf32>
    %68 = arith.mulf %52, %60 : vector<8x128xf32>
    %69 = arith.addf %67, %68 : vector<8x128xf32>
    %70 = math.tanh %69 : vector<8x128xf32>
    %71 = arith.mulf %66, %70 : vector<8x128xf32>
    %72 = arith.truncf %71 : vector<8x128xf32> to vector<8x128xbf16>
    %c0_21 = arith.constant 0 : index
    %c1_22 = arith.constant 1 : index
    %c0_23 = arith.constant 0 : index
    %73 = vector.load %arg6[%c0_21, %c1_22, %c0_23] : memref<8x8x128xbf16, #tpu.memory_space<vmem>>, vector<8x1x128xbf16>
    %74 = vector.shape_cast %73 : vector<8x1x128xbf16> to vector<8x128xbf16>
    %75 = vector.shape_cast %72 : vector<8x128xbf16> to vector<8x1x128xbf16>
    tpu.vector_store %arg6[%c0_21, %c1_22, %c0_23], %75 {strides = array<i32>} : memref<8x8x128xbf16, #tpu.memory_space<vmem>>, vector<8x1x128xbf16>,
    %c0_24 = arith.constant 0 : index
    %c2 = arith.constant 2 : index
    %c0_25 = arith.constant 0 : index
    %76 = vector.load %arg2[%c0_24, %c2, %c0_25] : memref<8x8x512xbf16, #tpu.memory_space<vmem>>, vector<8x1x512xbf16>
    %77 = vector.shape_cast %76 : vector<8x1x512xbf16> to vector<8x512xbf16>
    %78 = arith.extf %77 : vector<8x512xbf16> to vector<8x512xf32>
    %79 = arith.truncf %71 : vector<8x128xf32> to vector<8x128xbf16>
    %cst_26 = arith.constant dense<0.000000e+00> : vector<8x512xf32>
    %80 = tpu.matmul %79, %3, %cst_26 {dimension_numbers = #tpu.dot_dimension_numbers<[1], [0], [0], [1], [0, 0, 1, 1], [], []>} : vector<8x128xbf16>, vector<128x512xbf16>, vector<8x512xf32> -> vector<8x512xf32>
    %81 = arith.addf %78, %80 : vector<8x512xf32>
    %82 = vector.extract_strided_slice %81 {offsets = [0, 0], sizes = [8, 128], strides = [1, 1]} : vector<8x512xf32> to vector<8x128xf32>
    %83 = arith.negf %82 : vector<8x128xf32>
    %84 = math.exp %83 : vector<8x128xf32>
    %cst_27 = arith.constant 1.000000e+00 : f32
    %85 = vector.broadcast %cst_27 : f32 to vector<8x128xf32>
    %86 = arith.addf %85, %84 : vector<8x128xf32>
    %87 = arith.divf %85, %86 : vector<8x128xf32>
    %88 = vector.extract_strided_slice %81 {offsets = [0, 128], sizes = [8, 128], strides = [1, 1]} : vector<8x512xf32> to vector<8x128xf32>
    %89 = arith.negf %88 : vector<8x128xf32>
    %90 = math.exp %89 : vector<8x128xf32>
    %cst_28 = arith.constant 1.000000e+00 : f32
    %91 = vector.broadcast %cst_28 : f32 to vector<8x128xf32>
    %92 = arith.addf %91, %90 : vector<8x128xf32>
    %93 = arith.divf %91, %92 : vector<8x128xf32>
    %94 = vector.extract_strided_slice %81 {offsets = [0, 256], sizes = [8, 128], strides = [1, 1]} : vector<8x512xf32> to vector<8x128xf32>
    %95 = math.tanh %94 : vector<8x128xf32>
    %96 = vector.extract_strided_slice %81 {offsets = [0, 384], sizes = [8, 128], strides = [1, 1]} : vector<8x512xf32> to vector<8x128xf32>
    %97 = arith.negf %96 : vector<8x128xf32>
    %98 = math.exp %97 : vector<8x128xf32>
    %cst_29 = arith.constant 1.000000e+00 : f32
    %99 = vector.broadcast %cst_29 : f32 to vector<8x128xf32>
    %100 = arith.addf %99, %98 : vector<8x128xf32>
    %101 = arith.divf %99, %100 : vector<8x128xf32>
    %102 = arith.mulf %93, %69 : vector<8x128xf32>
    %103 = arith.mulf %87, %95 : vector<8x128xf32>
    %104 = arith.addf %102, %103 : vector<8x128xf32>
    %105 = math.tanh %104 : vector<8x128xf32>
    %106 = arith.mulf %101, %105 : vector<8x128xf32>
    %107 = arith.truncf %106 : vector<8x128xf32> to vector<8x128xbf16>
    %c0_30 = arith.constant 0 : index
    %c2_31 = arith.constant 2 : index
    %c0_32 = arith.constant 0 : index
    %108 = vector.load %arg6[%c0_30, %c2_31, %c0_32] : memref<8x8x128xbf16, #tpu.memory_space<vmem>>, vector<8x1x128xbf16>
    %109 = vector.shape_cast %108 : vector<8x1x128xbf16> to vector<8x128xbf16>
    %110 = vector.shape_cast %107 : vector<8x128xbf16> to vector<8x1x128xbf16>
    tpu.vector_store %arg6[%c0_30, %c2_31, %c0_32], %110 {strides = array<i32>} : memref<8x8x128xbf16, #tpu.memory_space<vmem>>, vector<8x1x128xbf16>,
    %c0_33 = arith.constant 0 : index
    %c3 = arith.constant 3 : index
    %c0_34 = arith.constant 0 : index
    %111 = vector.load %arg2[%c0_33, %c3, %c0_34] : memref<8x8x512xbf16, #tpu.memory_space<vmem>>, vector<8x1x512xbf16>
    %112 = vector.shape_cast %111 : vector<8x1x512xbf16> to vector<8x512xbf16>
    %113 = arith.extf %112 : vector<8x512xbf16> to vector<8x512xf32>
    %114 = arith.truncf %106 : vector<8x128xf32> to vector<8x128xbf16>
    %cst_35 = arith.constant dense<0.000000e+00> : vector<8x512xf32>
    %115 = tpu.matmul %114, %3, %cst_35 {dimension_numbers = #tpu.dot_dimension_numbers<[1], [0], [0], [1], [0, 0, 1, 1], [], []>} : vector<8x128xbf16>, vector<128x512xbf16>, vector<8x512xf32> -> vector<8x512xf32>
    %116 = arith.addf %113, %115 : vector<8x512xf32>
    %117 = vector.extract_strided_slice %116 {offsets = [0, 0], sizes = [8, 128], strides = [1, 1]} : vector<8x512xf32> to vector<8x128xf32>
    %118 = arith.negf %117 : vector<8x128xf32>
    %119 = math.exp %118 : vector<8x128xf32>
    %cst_36 = arith.constant 1.000000e+00 : f32
    %120 = vector.broadcast %cst_36 : f32 to vector<8x128xf32>
    %121 = arith.addf %120, %119 : vector<8x128xf32>
    %122 = arith.divf %120, %121 : vector<8x128xf32>
    %123 = vector.extract_strided_slice %116 {offsets = [0, 128], sizes = [8, 128], strides = [1, 1]} : vector<8x512xf32> to vector<8x128xf32>
    %124 = arith.negf %123 : vector<8x128xf32>
    %125 = math.exp %124 : vector<8x128xf32>
    %cst_37 = arith.constant 1.000000e+00 : f32
    %126 = vector.broadcast %cst_37 : f32 to vector<8x128xf32>
    %127 = arith.addf %126, %125 : vector<8x128xf32>
    %128 = arith.divf %126, %127 : vector<8x128xf32>
    %129 = vector.extract_strided_slice %116 {offsets = [0, 256], sizes = [8, 128], strides = [1, 1]} : vector<8x512xf32> to vector<8x128xf32>
    %130 = math.tanh %129 : vector<8x128xf32>
    %131 = vector.extract_strided_slice %116 {offsets = [0, 384], sizes = [8, 128], strides = [1, 1]} : vector<8x512xf32> to vector<8x128xf32>
    %132 = arith.negf %131 : vector<8x128xf32>
    %133 = math.exp %132 : vector<8x128xf32>
    %cst_38 = arith.constant 1.000000e+00 : f32
    %134 = vector.broadcast %cst_38 : f32 to vector<8x128xf32>
    %135 = arith.addf %134, %133 : vector<8x128xf32>
    %136 = arith.divf %134, %135 : vector<8x128xf32>
    %137 = arith.mulf %128, %104 : vector<8x128xf32>
    %138 = arith.mulf %122, %130 : vector<8x128xf32>
    %139 = arith.addf %137, %138 : vector<8x128xf32>
    %140 = math.tanh %139 : vector<8x128xf32>
    %141 = arith.mulf %136, %140 : vector<8x128xf32>
    %142 = arith.truncf %141 : vector<8x128xf32> to vector<8x128xbf16>
    %c0_39 = arith.constant 0 : index
    %c3_40 = arith.constant 3 : index
    %c0_41 = arith.constant 0 : index
    %143 = vector.load %arg6[%c0_39, %c3_40, %c0_41] : memref<8x8x128xbf16, #tpu.memory_space<vmem>>, vector<8x1x128xbf16>
    %144 = vector.shape_cast %143 : vector<8x1x128xbf16> to vector<8x128xbf16>
    %145 = vector.shape_cast %142 : vector<8x128xbf16> to vector<8x1x128xbf16>
    tpu.vector_store %arg6[%c0_39, %c3_40, %c0_41], %145 {strides = array<i32>} : memref<8x8x128xbf16, #tpu.memory_space<vmem>>, vector<8x1x128xbf16>,
    %c0_42 = arith.constant 0 : index
    %c4 = arith.constant 4 : index
    %c0_43 = arith.constant 0 : index
    %146 = vector.load %arg2[%c0_42, %c4, %c0_43] : memref<8x8x512xbf16, #tpu.memory_space<vmem>>, vector<8x1x512xbf16>
    %147 = vector.shape_cast %146 : vector<8x1x512xbf16> to vector<8x512xbf16>
    %148 = arith.extf %147 : vector<8x512xbf16> to vector<8x512xf32>
    %149 = arith.truncf %141 : vector<8x128xf32> to vector<8x128xbf16>
    %cst_44 = arith.constant dense<0.000000e+00> : vector<8x512xf32>
    %150 = tpu.matmul %149, %3, %cst_44 {dimension_numbers = #tpu.dot_dimension_numbers<[1], [0], [0], [1], [0, 0, 1, 1], [], []>} : vector<8x128xbf16>, vector<128x512xbf16>, vector<8x512xf32> -> vector<8x512xf32>
    %151 = arith.addf %148, %150 : vector<8x512xf32>
    %152 = vector.extract_strided_slice %151 {offsets = [0, 0], sizes = [8, 128], strides = [1, 1]} : vector<8x512xf32> to vector<8x128xf32>
    %153 = arith.negf %152 : vector<8x128xf32>
    %154 = math.exp %153 : vector<8x128xf32>
    %cst_45 = arith.constant 1.000000e+00 : f32
    %155 = vector.broadcast %cst_45 : f32 to vector<8x128xf32>
    %156 = arith.addf %155, %154 : vector<8x128xf32>
    %157 = arith.divf %155, %156 : vector<8x128xf32>
    %158 = vector.extract_strided_slice %151 {offsets = [0, 128], sizes = [8, 128], strides = [1, 1]} : vector<8x512xf32> to vector<8x128xf32>
    %159 = arith.negf %158 : vector<8x128xf32>
    %160 = math.exp %159 : vector<8x128xf32>
    %cst_46 = arith.constant 1.000000e+00 : f32
    %161 = vector.broadcast %cst_46 : f32 to vector<8x128xf32>
    %162 = arith.addf %161, %160 : vector<8x128xf32>
    %163 = arith.divf %161, %162 : vector<8x128xf32>
    %164 = vector.extract_strided_slice %151 {offsets = [0, 256], sizes = [8, 128], strides = [1, 1]} : vector<8x512xf32> to vector<8x128xf32>
    %165 = math.tanh %164 : vector<8x128xf32>
    %166 = vector.extract_strided_slice %151 {offsets = [0, 384], sizes = [8, 128], strides = [1, 1]} : vector<8x512xf32> to vector<8x128xf32>
    %167 = arith.negf %166 : vector<8x128xf32>
    %168 = math.exp %167 : vector<8x128xf32>
    %cst_47 = arith.constant 1.000000e+00 : f32
    %169 = vector.broadcast %cst_47 : f32 to vector<8x128xf32>
    %170 = arith.addf %169, %168 : vector<8x128xf32>
    %171 = arith.divf %169, %170 : vector<8x128xf32>
    %172 = arith.mulf %163, %139 : vector<8x128xf32>
    %173 = arith.mulf %157, %165 : vector<8x128xf32>
    %174 = arith.addf %172, %173 : vector<8x128xf32>
    %175 = math.tanh %174 : vector<8x128xf32>
    %176 = arith.mulf %171, %175 : vector<8x128xf32>
    %177 = arith.truncf %176 : vector<8x128xf32> to vector<8x128xbf16>
    %c0_48 = arith.constant 0 : index
    %c4_49 = arith.constant 4 : index
    %c0_50 = arith.constant 0 : index
    %178 = vector.load %arg6[%c0_48, %c4_49, %c0_50] : memref<8x8x128xbf16, #tpu.memory_space<vmem>>, vector<8x1x128xbf16>
    %179 = vector.shape_cast %178 : vector<8x1x128xbf16> to vector<8x128xbf16>
    %180 = vector.shape_cast %177 : vector<8x128xbf16> to vector<8x1x128xbf16>
    tpu.vector_store %arg6[%c0_48, %c4_49, %c0_50], %180 {strides = array<i32>} : memref<8x8x128xbf16, #tpu.memory_space<vmem>>, vector<8x1x128xbf16>,
    %c0_51 = arith.constant 0 : index
    %c5 = arith.constant 5 : index
    %c0_52 = arith.constant 0 : index
    %181 = vector.load %arg2[%c0_51, %c5, %c0_52] : memref<8x8x512xbf16, #tpu.memory_space<vmem>>, vector<8x1x512xbf16>
    %182 = vector.shape_cast %181 : vector<8x1x512xbf16> to vector<8x512xbf16>
    %183 = arith.extf %182 : vector<8x512xbf16> to vector<8x512xf32>
    %184 = arith.truncf %176 : vector<8x128xf32> to vector<8x128xbf16>
    %cst_53 = arith.constant dense<0.000000e+00> : vector<8x512xf32>
    %185 = tpu.matmul %184, %3, %cst_53 {dimension_numbers = #tpu.dot_dimension_numbers<[1], [0], [0], [1], [0, 0, 1, 1], [], []>} : vector<8x128xbf16>, vector<128x512xbf16>, vector<8x512xf32> -> vector<8x512xf32>
    %186 = arith.addf %183, %185 : vector<8x512xf32>
    %187 = vector.extract_strided_slice %186 {offsets = [0, 0], sizes = [8, 128], strides = [1, 1]} : vector<8x512xf32> to vector<8x128xf32>
    %188 = arith.negf %187 : vector<8x128xf32>
    %189 = math.exp %188 : vector<8x128xf32>
    %cst_54 = arith.constant 1.000000e+00 : f32
    %190 = vector.broadcast %cst_54 : f32 to vector<8x128xf32>
    %191 = arith.addf %190, %189 : vector<8x128xf32>
    %192 = arith.divf %190, %191 : vector<8x128xf32>
    %193 = vector.extract_strided_slice %186 {offsets = [0, 128], sizes = [8, 128], strides = [1, 1]} : vector<8x512xf32> to vector<8x128xf32>
    %194 = arith.negf %193 : vector<8x128xf32>
    %195 = math.exp %194 : vector<8x128xf32>
    %cst_55 = arith.constant 1.000000e+00 : f32
    %196 = vector.broadcast %cst_55 : f32 to vector<8x128xf32>
    %197 = arith.addf %196, %195 : vector<8x128xf32>
    %198 = arith.divf %196, %197 : vector<8x128xf32>
    %199 = vector.extract_strided_slice %186 {offsets = [0, 256], sizes = [8, 128], strides = [1, 1]} : vector<8x512xf32> to vector<8x128xf32>
    %200 = math.tanh %199 : vector<8x128xf32>
    %201 = vector.extract_strided_slice %186 {offsets = [0, 384], sizes = [8, 128], strides = [1, 1]} : vector<8x512xf32> to vector<8x128xf32>
    %202 = arith.negf %201 : vector<8x128xf32>
    %203 = math.exp %202 : vector<8x128xf32>
    %cst_56 = arith.constant 1.000000e+00 : f32
    %204 = vector.broadcast %cst_56 : f32 to vector<8x128xf32>
    %205 = arith.addf %204, %203 : vector<8x128xf32>
    %206 = arith.divf %204, %205 : vector<8x128xf32>
    %207 = arith.mulf %198, %174 : vector<8x128xf32>
    %208 = arith.mulf %192, %200 : vector<8x128xf32>
    %209 = arith.addf %207, %208 : vector<8x128xf32>
    %210 = math.tanh %209 : vector<8x128xf32>
    %211 = arith.mulf %206, %210 : vector<8x128xf32>
    %212 = arith.truncf %211 : vector<8x128xf32> to vector<8x128xbf16>
    %c0_57 = arith.constant 0 : index
    %c5_58 = arith.constant 5 : index
    %c0_59 = arith.constant 0 : index
    %213 = vector.load %arg6[%c0_57, %c5_58, %c0_59] : memref<8x8x128xbf16, #tpu.memory_space<vmem>>, vector<8x1x128xbf16>
    %214 = vector.shape_cast %213 : vector<8x1x128xbf16> to vector<8x128xbf16>
    %215 = vector.shape_cast %212 : vector<8x128xbf16> to vector<8x1x128xbf16>
    tpu.vector_store %arg6[%c0_57, %c5_58, %c0_59], %215 {strides = array<i32>} : memref<8x8x128xbf16, #tpu.memory_space<vmem>>, vector<8x1x128xbf16>,
    %c0_60 = arith.constant 0 : index
    %c6 = arith.constant 6 : index
    %c0_61 = arith.constant 0 : index
    %216 = vector.load %arg2[%c0_60, %c6, %c0_61] : memref<8x8x512xbf16, #tpu.memory_space<vmem>>, vector<8x1x512xbf16>
    %217 = vector.shape_cast %216 : vector<8x1x512xbf16> to vector<8x512xbf16>
    %218 = arith.extf %217 : vector<8x512xbf16> to vector<8x512xf32>
    %219 = arith.truncf %211 : vector<8x128xf32> to vector<8x128xbf16>
    %cst_62 = arith.constant dense<0.000000e+00> : vector<8x512xf32>
    %220 = tpu.matmul %219, %3, %cst_62 {dimension_numbers = #tpu.dot_dimension_numbers<[1], [0], [0], [1], [0, 0, 1, 1], [], []>} : vector<8x128xbf16>, vector<128x512xbf16>, vector<8x512xf32> -> vector<8x512xf32>
    %221 = arith.addf %218, %220 : vector<8x512xf32>
    %222 = vector.extract_strided_slice %221 {offsets = [0, 0], sizes = [8, 128], strides = [1, 1]} : vector<8x512xf32> to vector<8x128xf32>
    %223 = arith.negf %222 : vector<8x128xf32>
    %224 = math.exp %223 : vector<8x128xf32>
    %cst_63 = arith.constant 1.000000e+00 : f32
    %225 = vector.broadcast %cst_63 : f32 to vector<8x128xf32>
    %226 = arith.addf %225, %224 : vector<8x128xf32>
    %227 = arith.divf %225, %226 : vector<8x128xf32>
    %228 = vector.extract_strided_slice %221 {offsets = [0, 128], sizes = [8, 128], strides = [1, 1]} : vector<8x512xf32> to vector<8x128xf32>
    %229 = arith.negf %228 : vector<8x128xf32>
    %230 = math.exp %229 : vector<8x128xf32>
    %cst_64 = arith.constant 1.000000e+00 : f32
    %231 = vector.broadcast %cst_64 : f32 to vector<8x128xf32>
    %232 = arith.addf %231, %230 : vector<8x128xf32>
    %233 = arith.divf %231, %232 : vector<8x128xf32>
    %234 = vector.extract_strided_slice %221 {offsets = [0, 256], sizes = [8, 128], strides = [1, 1]} : vector<8x512xf32> to vector<8x128xf32>
    %235 = math.tanh %234 : vector<8x128xf32>
    %236 = vector.extract_strided_slice %221 {offsets = [0, 384], sizes = [8, 128], strides = [1, 1]} : vector<8x512xf32> to vector<8x128xf32>
    %237 = arith.negf %236 : vector<8x128xf32>
    %238 = math.exp %237 : vector<8x128xf32>
    %cst_65 = arith.constant 1.000000e+00 : f32
    %239 = vector.broadcast %cst_65 : f32 to vector<8x128xf32>
    %240 = arith.addf %239, %238 : vector<8x128xf32>
    %241 = arith.divf %239, %240 : vector<8x128xf32>
    %242 = arith.mulf %233, %209 : vector<8x128xf32>
    %243 = arith.mulf %227, %235 : vector<8x128xf32>
    %244 = arith.addf %242, %243 : vector<8x128xf32>
    %245 = math.tanh %244 : vector<8x128xf32>
    %246 = arith.mulf %241, %245 : vector<8x128xf32>
    %247 = arith.truncf %246 : vector<8x128xf32> to vector<8x128xbf16>
    %c0_66 = arith.constant 0 : index
    %c6_67 = arith.constant 6 : index
    %c0_68 = arith.constant 0 : index
    %248 = vector.load %arg6[%c0_66, %c6_67, %c0_68] : memref<8x8x128xbf16, #tpu.memory_space<vmem>>, vector<8x1x128xbf16>
    %249 = vector.shape_cast %248 : vector<8x1x128xbf16> to vector<8x128xbf16>
    %250 = vector.shape_cast %247 : vector<8x128xbf16> to vector<8x1x128xbf16>
    tpu.vector_store %arg6[%c0_66, %c6_67, %c0_68], %250 {strides = array<i32>} : memref<8x8x128xbf16, #tpu.memory_space<vmem>>, vector<8x1x128xbf16>,
    %c0_69 = arith.constant 0 : index
    %c7 = arith.constant 7 : index
    %c0_70 = arith.constant 0 : index
    %251 = vector.load %arg2[%c0_69, %c7, %c0_70] : memref<8x8x512xbf16, #tpu.memory_space<vmem>>, vector<8x1x512xbf16>
    %252 = vector.shape_cast %251 : vector<8x1x512xbf16> to vector<8x512xbf16>
    %253 = arith.extf %252 : vector<8x512xbf16> to vector<8x512xf32>
    %254 = arith.truncf %246 : vector<8x128xf32> to vector<8x128xbf16>
    %cst_71 = arith.constant dense<0.000000e+00> : vector<8x512xf32>
    %255 = tpu.matmul %254, %3, %cst_71 {dimension_numbers = #tpu.dot_dimension_numbers<[1], [0], [0], [1], [0, 0, 1, 1], [], []>} : vector<8x128xbf16>, vector<128x512xbf16>, vector<8x512xf32> -> vector<8x512xf32>
    %256 = arith.addf %253, %255 : vector<8x512xf32>
    %257 = vector.extract_strided_slice %256 {offsets = [0, 0], sizes = [8, 128], strides = [1, 1]} : vector<8x512xf32> to vector<8x128xf32>
    %258 = arith.negf %257 : vector<8x128xf32>
    %259 = math.exp %258 : vector<8x128xf32>
    %cst_72 = arith.constant 1.000000e+00 : f32
    %260 = vector.broadcast %cst_72 : f32 to vector<8x128xf32>
    %261 = arith.addf %260, %259 : vector<8x128xf32>
    %262 = arith.divf %260, %261 : vector<8x128xf32>
    %263 = vector.extract_strided_slice %256 {offsets = [0, 128], sizes = [8, 128], strides = [1, 1]} : vector<8x512xf32> to vector<8x128xf32>
    %264 = arith.negf %263 : vector<8x128xf32>
    %265 = math.exp %264 : vector<8x128xf32>
    %cst_73 = arith.constant 1.000000e+00 : f32
    %266 = vector.broadcast %cst_73 : f32 to vector<8x128xf32>
    %267 = arith.addf %266, %265 : vector<8x128xf32>
    %268 = arith.divf %266, %267 : vector<8x128xf32>
    %269 = vector.extract_strided_slice %256 {offsets = [0, 256], sizes = [8, 128], strides = [1, 1]} : vector<8x512xf32> to vector<8x128xf32>
    %270 = math.tanh %269 : vector<8x128xf32>
    %271 = vector.extract_strided_slice %256 {offsets = [0, 384], sizes = [8, 128], strides = [1, 1]} : vector<8x512xf32> to vector<8x128xf32>
    %272 = arith.negf %271 : vector<8x128xf32>
    %273 = math.exp %272 : vector<8x128xf32>
    %cst_74 = arith.constant 1.000000e+00 : f32
    %274 = vector.broadcast %cst_74 : f32 to vector<8x128xf32>
    %275 = arith.addf %274, %273 : vector<8x128xf32>
    %276 = arith.divf %274, %275 : vector<8x128xf32>
    %277 = arith.mulf %268, %244 : vector<8x128xf32>
    %278 = arith.mulf %262, %270 : vector<8x128xf32>
    %279 = arith.addf %277, %278 : vector<8x128xf32>
    %280 = math.tanh %279 : vector<8x128xf32>
    %281 = arith.mulf %276, %280 : vector<8x128xf32>
    %282 = arith.truncf %281 : vector<8x128xf32> to vector<8x128xbf16>
    %c0_75 = arith.constant 0 : index
    %c7_76 = arith.constant 7 : index
    %c0_77 = arith.constant 0 : index
    %283 = vector.load %arg6[%c0_75, %c7_76, %c0_77] : memref<8x8x128xbf16, #tpu.memory_space<vmem>>, vector<8x1x128xbf16>
    %284 = vector.shape_cast %283 : vector<8x1x128xbf16> to vector<8x128xbf16>
    %285 = vector.shape_cast %282 : vector<8x128xbf16> to vector<8x1x128xbf16>
    tpu.vector_store %arg6[%c0_75, %c7_76, %c0_77], %285 {strides = array<i32>} : memref<8x8x128xbf16, #tpu.memory_space<vmem>>, vector<8x1x128xbf16>,
    %c0_78 = arith.constant 0 : index
    %c0_79 = arith.constant 0 : index
    %286 = vector.load %arg7[%c0_78, %c0_79] : memref<8x128xf32, #tpu.memory_space<vmem>>, vector<8x128xf32>
    tpu.vector_store %arg7[%c0_78, %c0_79], %281 {strides = array<i32>} : memref<8x128xf32, #tpu.memory_space<vmem>>, vector<8x128xf32>,
    %c0_80 = arith.constant 0 : index
    %c0_81 = arith.constant 0 : index
    %287 = vector.load %arg8[%c0_80, %c0_81] : memref<8x128xf32, #tpu.memory_space<vmem>>, vector<8x128xf32>
    tpu.vector_store %arg8[%c0_80, %c0_81], %279 {strides = array<i32>} : memref<8x128xf32, #tpu.memory_space<vmem>>, vector<8x128xf32>,
    return
  }
  func.func @transform_0(%arg0: i32, %arg1: i32) -> (i32, i32, i32) {
    %c0_i32 = arith.constant 0 : i32
    %c0_i32_0 = arith.constant 0 : i32
    return %arg0, %arg1, %c0_i32 : i32, i32, i32
  }
  func.func @transform_1(%arg0: i32, %arg1: i32) -> (i32, i32) {
    %c0_i32 = arith.constant 0 : i32
    %c0_i32_0 = arith.constant 0 : i32
    %c0_i32_1 = arith.constant 0 : i32
    return %c0_i32, %c0_i32_0 : i32, i32
  }
  func.func @transform_2(%arg0: i32, %arg1: i32) -> (i32, i32) {
    %c0_i32 = arith.constant 0 : i32
    %c0_i32_0 = arith.constant 0 : i32
    return %arg0, %c0_i32 : i32, i32
  }
  func.func @transform_3(%arg0: i32, %arg1: i32) -> (i32, i32) {
    %c0_i32 = arith.constant 0 : i32
    %c0_i32_0 = arith.constant 0 : i32
    return %arg0, %c0_i32 : i32, i32
  }
  func.func @transform_4(%arg0: i32, %arg1: i32) -> (i32, i32, i32) {
    %c0_i32 = arith.constant 0 : i32
    %c0_i32_0 = arith.constant 0 : i32
    return %arg0, %arg1, %c0_i32 : i32, i32, i32
  }
  func.func @transform_5(%arg0: i32, %arg1: i32) -> (i32, i32) {
    %c0_i32 = arith.constant 0 : i32
    %c0_i32_0 = arith.constant 0 : i32
    return %arg0, %c0_i32 : i32, i32
  }
  func.func @transform_6(%arg0: i32, %arg1: i32) -> (i32, i32) {
    %c0_i32 = arith.constant 0 : i32
    %c0_i32_0 = arith.constant 0 : i32
    return %arg0, %c0_i32 : i32, i32
  }
}

</mosaic_0001>

<llo_original>
// kernel: rnn_forward_pallas.3
$region0: #{rnn_forward_pallas.3}
  #allocation0 [shape = 'u32[]', space=smem, size = 0x4, offset = 0x4, fixed_abs, tag = 'smem constant byte address 0x4 - core index']
  #allocation1 [shape = 'u32[144,128]{1,0:T(1,128)}', space=vmem, size = 0x12000, scoped, tag = 'internal scratch']
  %s0 = inlined_call_operand.vmem [shape: bf16[64,32], index: 0, kind: input, shape index: {}]
  %s1 = inlined_call_operand.vmem [shape: bf16[32,512], index: 1, kind: input, shape index: {}]
  %s2 = inlined_call_operand.vmem [shape: f32[1,512], index: 2, kind: input, shape index: {}]
  %s3 = inlined_call_operand.vmem [shape: bf16[64,512], index: 3, kind: output, shape index: {}]
  %s4 = sld [smem:[#allocation0]]
  $region117: #{rnn_forward_pallas.3} parent=0
    _
  %s6 = ssub.s32 1, %s4
  %s7 = scalar_select 0, %s6, %s4
  $region1: #{rnn_forward_pallas.3} parent=0
    #allocation2 [shape = 'u8[32768]{0}', space=vmem, size = 0x8000, scoped, tag = 'input window, operand 1']
    #allocation3 [shape = 'u8[65536]{0}', space=vmem, size = 0x10000, scoped, tag = 'output window, operand 0']
    loop: start=0, step=1, limit=4
    $region2: #{rnn_forward_pallas.3} parent=1 // loop_pre_header
      _
    $region3: #{rnn_forward_pallas.3} parent=1 // loop_header
      %s9 = sphi 0, %s13
      %p10 = scmp.ge.s32.totalorder %s9, 4
      %s16 = sphi 0, %s28
      %s17 = sphi 0, %s24
      %s18 = sphi 0, %s16
      %s19 = sphi 0, %s17
      %s20 = sphi 0, %s18
      %s21 = sphi 0, %s19
      %s31 = sphi 0, %s33
      %s34 = sphi 0, %s31
      %s35 = sphi 0, %s34
      %s51 = sphi 0, %s35
      %s57 = sphi 0, %s59
      %s60 = sphi 0, %s57
      %s61 = sphi 0, %s60
      %s77 = sphi 0, %s61
      %s83 = sphi 0, %s85
      %s86 = sphi 0, %s83
      %s87 = sphi 0, %s86
      %s103 = sphi 0, %s87
      %s111 = sphi 0, %s113
      %s114 = sphi 0, %s111
      %s115 = sphi 0, %s114
      %s131 = sphi 0, %s115
    $region4: #{rnn_forward_pallas.3} parent=1 // loop_header_branch
      %12 = sbr.rel (%p10) target = $region8
    $region5: #{rnn_forward_pallas.3} parent=1 // loop_body
      %s14 = ssub.s32 %s9, 1
      %s15 = ssub.s32 %s9, 2
      %s22 = sadd.s32 1, %s17
      %p23 = scmp.ge.s32.totalorder %s22, 2
      %s24 = scalar_select %p23, 0, %s22
      %s25 = sadd.s32 1, %s16
      %s26 = scalar_select %p23, %s25, %s16
      %p27 = scmp.ge.s32.totalorder %s26, 1
      %s28 = scalar_select %p27, 0, %s26
      %s29 = ssub.s32 %s16, %s28
      %p30 = scmp.eq.s32.totalorder %s29, 0
      %s32 = sadd.s32 %s31, 1
      %s33 = scalar_select %p30, %s31, %s32
      %p36 = pneg %p30
      %p37 = scmp.eq.s32.totalorder %s9, 1
      %p38 = por %p36, %p37
      %p39 = scmp.ne.s32.totalorder %s31, %s34
      %p40 = scmp.eq.s32.totalorder %s9, 0
      %p41 = por %p39, %p40
      %p42 = scmp.ne.s32.totalorder %s31, %s34
      %p43 = scmp.eq.s32.totalorder %s14, 1
      %p44 = por %p42, %p43
      %p45 = scmp.ne.s32.totalorder %s34, %s35
      %p46 = scmp.eq.s32.totalorder %s14, 0
      %p47 = por %p45, %p46
      %p48 = scmp.ne.s32.totalorder %s34, %s35
      %p49 = scmp.eq.s32.totalorder %s15, 1
      %p50 = por %p48, %p49
      %p52 = scmp.ne.s32.totalorder %s35, %s51
      %p53 = scmp.eq.s32.totalorder %s15, 0
      %p54 = por %p52, %p53
      %s55 = ssub.s32 %s17, %s24
      %p56 = scmp.eq.s32.totalorder %s55, 0
      %s58 = sadd.s32 %s57, 1
      %s59 = scalar_select %p56, %s57, %s58
      %p62 = pneg %p56
      %p63 = scmp.eq.s32.totalorder %s9, 1
      %p64 = por %p62, %p63
      %p65 = scmp.ne.s32.totalorder %s57, %s60
      %p66 = scmp.eq.s32.totalorder %s9, 0
      %p67 = por %p65, %p66
      %p68 = scmp.ne.s32.totalorder %s57, %s60
      %p69 = scmp.eq.s32.totalorder %s14, 1
      %p70 = por %p68, %p69
      %p71 = scmp.ne.s32.totalorder %s60, %s61
      %p72 = scmp.eq.s32.totalorder %s14, 0
      %p73 = por %p71, %p72
      %p74 = scmp.ne.s32.totalorder %s60, %s61
      %p75 = scmp.eq.s32.totalorder %s15, 1
      %p76 = por %p74, %p75
      %p78 = scmp.ne.s32.totalorder %s61, %s77
      %p79 = scmp.eq.s32.totalorder %s15, 0
      %p80 = por %p78, %p79
      %s81 = ssub.s32 %s17, %s24
      %p82 = scmp.eq.s32.totalorder %s81, 0
      %s84 = sadd.s32 %s83, 1
      %s85 = scalar_select %p82, %s83, %s84
      %p88 = pneg %p82
      %p89 = scmp.eq.s32.totalorder %s9, 1
      %p90 = por %p88, %p89
      %p91 = scmp.ne.s32.totalorder %s83, %s86
      %p92 = scmp.eq.s32.totalorder %s9, 0
      %p93 = por %p91, %p92
      %p94 = scmp.ne.s32.totalorder %s83, %s86
      %p95 = scmp.eq.s32.totalorder %s14, 1
      %p96 = por %p94, %p95
      %p97 = scmp.ne.s32.totalorder %s86, %s87
      %p98 = scmp.eq.s32.totalorder %s14, 0
      %p99 = por %p97, %p98
      %p100 = scmp.ne.s32.totalorder %s86, %s87
      %p101 = scmp.eq.s32.totalorder %s15, 1
      %p102 = por %p100, %p101
      %p104 = scmp.ne.s32.totalorder %s87, %s103
      %p105 = scmp.eq.s32.totalorder %s15, 0
      %p106 = por %p104, %p105
      %s107 = ssub.s32 %s16, %s28
      %s108 = ssub.s32 %s17, %s24
      %s109 = sor.u32 %s107, %s108
      %p110 = scmp.eq.s32.totalorder %s109, 0
      %s112 = sadd.s32 %s111, 1
      %s113 = scalar_select %p110, %s111, %s112
      %p116 = pneg %p110
      %p117 = scmp.eq.s32.totalorder %s9, 1
      %p118 = por %p116, %p117
      %p119 = scmp.ne.s32.totalorder %s111, %s114
      %p120 = scmp.eq.s32.totalorder %s9, 0
      %p121 = por %p119, %p120
      %p122 = scmp.ne.s32.totalorder %s111, %s114
      %p123 = scmp.eq.s32.totalorder %s14, 1
      %p124 = por %p122, %p123
      %p125 = scmp.ne.s32.totalorder %s114, %s115
      %p126 = scmp.eq.s32.totalorder %s14, 0
      %p127 = por %p125, %p126
      %p128 = scmp.ne.s32.totalorder %s114, %s115
      %p129 = scmp.eq.s32.totalorder %s15, 1
      %p130 = por %p128, %p129
      %p132 = scmp.ne.s32.totalorder %s115, %s131
      %p133 = scmp.eq.s32.totalorder %s15, 0
      %p134 = por %p132, %p133
      %p135 = scmp.le.s32.totalorder 1, %s9
      %p136 = scmp.lt.s32.totalorder %s9, 3
      %p137 = pnand %p135, %p136
      %p138 = pneg %p137
      // Predicated region
      $region9: #{rnn_forward_pallas.3} parent=5 // pred_check
        _
      $region10: #{rnn_forward_pallas.3} parent=5 // pred_check_branch
        %140 = sbr.rel (%p137) target = $region12
      $region11: #{rnn_forward_pallas.3} parent=5 // pred_region
        %s141 = ssub.s32 %s9, 1
        // Predicated region
        $region13: #{rnn_forward_pallas.3} parent=11 // pred_check
          %p142 = pneg %p47
        $region14: #{rnn_forward_pallas.3} parent=11 // pred_check_branch
          %144 = sbr.rel (%p142) target = $region16
        $region15: #{rnn_forward_pallas.3} parent=11 // pred_region
          %s145 = smul.u32 8, %s18
          %p146 = scmp.lt.s32.totalorder %s145, 7
          %s147 = scalar_select %p146, %s145, 7
          %s148 = smul.addr %s147, 4
          %s149 = scalar_lea.vmem %s0, %s148
          %s150 = smul.u32 8, %s18
        $region16: #{rnn_forward_pallas.3} parent=11 // pred_fallthru
          _
      $region12: #{rnn_forward_pallas.3} parent=5 // pred_fallthru
        _
      %p151 = scmp.lt.s32.totalorder %s9, 2
      // Predicated region
      $region17: #{rnn_forward_pallas.3} parent=5 // pred_check
        %p152 = pneg %p151
      $region18: #{rnn_forward_pallas.3} parent=5 // pred_check_branch
        %154 = sbr.rel (%p152) target = $region20
      $region19: #{rnn_forward_pallas.3} parent=5 // pred_region
        // Predicated region
        $region21: #{rnn_forward_pallas.3} parent=19 // pred_check
          %p155 = pneg %p67
        $region22: #{rnn_forward_pallas.3} parent=19 // pred_check_branch
          %157 = sbr.rel (%p155) target = $region24
        $region23: #{rnn_forward_pallas.3} parent=19 // pred_region
          %s158 = sand.u32 %s57, 1
          %s159 = sand.u32 %s57, 1
          %s160 = smul.addr %s159, 32
          %s161 = scalar_lea.vmem [#allocation2], %s160
          %s162 = smul.u32 2, %s17
          %s163 = smul.addr %s162, 4
          %s164 = scalar_lea.vmem %s1, %s163
          // Predicated region
          $region25: #{rnn_forward_pallas.3} parent=23 // pred_check
            _
          $region26: #{rnn_forward_pallas.3} parent=23 // pred_check_branch
            %166 = sbr.rel (0) target = $region28
          $region27: #{rnn_forward_pallas.3} parent=23 // pred_region
            // Predicated region
            $region29: #{rnn_forward_pallas.3} parent=27 // pred_check
              _
            $region30: #{rnn_forward_pallas.3} parent=27 // pred_check_branch
              %168 = sbr.rel (0) target = $region32
            $region31: #{rnn_forward_pallas.3} parent=27 // pred_region
              // Predicated region
              $region44: #{rnn_forward_pallas.3} parent=31 // pred_check
                _
              $region45: #{rnn_forward_pallas.3} parent=31 // pred_check_branch
                %189 = sbr.rel (0) target = $region47
              $region46: #{rnn_forward_pallas.3} parent=31 // pred_region
                loop: start=0, step=1, limit=1
                $region48: #{rnn_forward_pallas.3} parent=46 // loop_pre_header
                  _
                $region49: #{rnn_forward_pallas.3} parent=46 // loop_header
                  %s191 = sphi 0, %s195
                  %p192 = scmp.ge.s32.totalorder %s191, 1
                  %s196 = sphi %s164, %s164
                  %s197 = sphi %s161, %s161
                $region50: #{rnn_forward_pallas.3} parent=46 // loop_header_branch
                  %194 = sbr.rel (%p192) target = $region54
                $region51: #{rnn_forward_pallas.3} parent=46 // loop_body
                  %v198 = vld [vmem:[%s196] sm:$0xff]
                  %199 = vst [vmem:[%s197] sm:$0xff] %v198
                  %v200 = vld [vmem:[%s196 + $0x10] sm:$0xff]
                  %201 = vst [vmem:[%s197 + $0x8] sm:$0xff] %v200
                  %v202 = vld [vmem:[%s196 + $0x20] sm:$0xff]
                  %203 = vst [vmem:[%s197 + $0x10] sm:$0xff] %v202
                  %v204 = vld [vmem:[%s196 + $0x30] sm:$0xff]
                  %205 = vst [vmem:[%s197 + $0x18] sm:$0xff] %v204
                $region52: #{rnn_forward_pallas.3} parent=46 // loop_footer
                  %s195 = sadd.s32 1, %s191
                $region53: #{rnn_forward_pallas.3} parent=46 // loop_footer_branch
                  %190 = sbr.rel target = $region49
                $region54: #{rnn_forward_pallas.3} parent=46 // loop_exit
                  _
              $region47: #{rnn_forward_pallas.3} parent=31 // pred_fallthru
                _
              // Predicated region
              $region55: #{rnn_forward_pallas.3} parent=31 // pred_check
                _
              $region56: #{rnn_forward_pallas.3} parent=31 // pred_check_branch
                %207 = sbr.rel target = $region58
              $region57: #{rnn_forward_pallas.3} parent=31 // pred_region
                _
              $region58: #{rnn_forward_pallas.3} parent=31 // pred_fallthru
                _
            $region32: #{rnn_forward_pallas.3} parent=27 // pred_fallthru
              _
            // Predicated region
            $region33: #{rnn_forward_pallas.3} parent=27 // pred_check
              _
            $region34: #{rnn_forward_pallas.3} parent=27 // pred_check_branch
              %170 = sbr.rel target = $region36
            $region35: #{rnn_forward_pallas.3} parent=27 // pred_region
              loop: start=0, step=1, limit=1
              $region37: #{rnn_forward_pallas.3} parent=35 // loop_pre_header
                _
              $region38: #{rnn_forward_pallas.3} parent=35 // loop_header
                %s173 = sphi 0, %s177
                %p174 = scmp.ge.s32.totalorder %s173, 1
                %s178 = sphi %s164, %s164
                %s179 = sphi %s161, %s161
              $region39: #{rnn_forward_pallas.3} parent=35 // loop_header_branch
                %176 = sbr.rel (%p174) target = $region43
              $region40: #{rnn_forward_pallas.3} parent=35 // loop_body
                %v180 = vld [vmem:[%s178] sm:$0xff]
                %181 = vst [vmem:[%s179] sm:$0xff] %v180
                %v182 = vld [vmem:[%s178 + $0x10] sm:$0xff]
                %183 = vst [vmem:[%s179 + $0x8] sm:$0xff] %v182
                %v184 = vld [vmem:[%s178 + $0x20] sm:$0xff]
                %185 = vst [vmem:[%s179 + $0x10] sm:$0xff] %v184
                %v186 = vld [vmem:[%s178 + $0x30] sm:$0xff]
                %187 = vst [vmem:[%s179 + $0x18] sm:$0xff] %v186
              $region41: #{rnn_forward_pallas.3} parent=35 // loop_footer
                %s177 = sadd.s32 1, %s173
              $region42: #{rnn_forward_pallas.3} parent=35 // loop_footer_branch
                %172 = sbr.rel target = $region38
              $region43: #{rnn_forward_pallas.3} parent=35 // loop_exit
                _
            $region36: #{rnn_forward_pallas.3} parent=27 // pred_fallthru
              _
          $region28: #{rnn_forward_pallas.3} parent=23 // pred_fallthru
            _
          %208 = vnop
        $region24: #{rnn_forward_pallas.3} parent=19 // pred_fallthru
          _
        // Predicated region
        $region59: #{rnn_forward_pallas.3} parent=19 // pred_check
          %p209 = pneg %p93
        $region60: #{rnn_forward_pallas.3} parent=19 // pred_check_branch
          %211 = sbr.rel (%p209) target = $region62
        $region61: #{rnn_forward_pallas.3} parent=19 // pred_region
          %s212 = smul.u32 2, %s17
          %p213 = scmp.lt.s32.totalorder %s212, 3
          %s214 = scalar_select %p213, %s212, 3
          %s215 = scalar_lea.vmem %s2, %s214
          %s216 = smul.u32 2, %s17
        $region62: #{rnn_forward_pallas.3} parent=19 // pred_fallthru
          _
      $region20: #{rnn_forward_pallas.3} parent=5 // pred_fallthru
        _
      %p217 = scmp.le.s32.totalorder 1, %s9
      %p218 = scmp.lt.s32.totalorder %s9, 3
      %p219 = pnand %p217, %p218
      %p220 = pneg %p219
      // Predicated region
      $region63: #{rnn_forward_pallas.3} parent=5 // pred_check
        _
      $region64: #{rnn_forward_pallas.3} parent=5 // pred_check_branch
        %222 = sbr.rel (%p219) target = $region66
      $region65: #{rnn_forward_pallas.3} parent=5 // pred_region
        %s223 = ssub.s32 %s9, 1
        %s224 = sand.u32 %s60, 1
        %s225 = sand.u32 %s60, 1
        %s226 = smul.addr %s225, 32
        %s227 = scalar_lea.vmem [#allocation2], %s226
        // Predicated region
        $region67: #{rnn_forward_pallas.3} parent=65 // pred_check
          %p228 = pneg %p73
        $region68: #{rnn_forward_pallas.3} parent=65 // pred_check_branch
          %230 = sbr.rel (%p228) target = $region70
        $region69: #{rnn_forward_pallas.3} parent=65 // pred_region
          _
        $region70: #{rnn_forward_pallas.3} parent=65 // pred_fallthru
          _
        %s231 = smul.u32 8, %s18
        %p232 = scmp.lt.s32.totalorder %s231, 7
        %s233 = scalar_select %p232, %s231, 7
        %s234 = smul.addr %s233, 4
        %s235 = scalar_lea.vmem %s0, %s234
        %p236 = pneg %p47
        %p237 = pneg %p44
        %s238 = sand.u32 %s60, 1
        %s239 = sand.u32 %s60, 1
        %s240 = smul.addr %s239, 32
        %s241 = scalar_lea.vmem [#allocation2], %s240
        %p242 = pneg %p73
        %p243 = pneg %p70
        %s244 = smul.u32 2, %s19
        %p245 = scmp.lt.s32.totalorder %s244, 3
        %s246 = scalar_select %p245, %s244, 3
        %s247 = scalar_lea.vmem %s2, %s246
        %p248 = pneg %p99
        %p249 = pneg %p96
        %p250 = pneg %p127
        %p251 = pneg %p124
        %s252 = sand.u32 %s114, 1
        %s253 = sand.u32 %s114, 1
        %s254 = smul.addr %s253, 64
        %s255 = scalar_lea.vmem [#allocation3], %s254
        %s256 = smul.u32 8, %s18
        %p257 = scmp.lt.s32.totalorder %s256, 7
        %s258 = scalar_select %p257, %s256, 7
        %s259 = smul.addr %s258, 4
        %s260 = scalar_lea.vmem %s0, %s259
        %s261 = smul.u32 8, %s18
        %s262 = smul.u32 2, %s19
        %s263 = smul.u32 2, %s19
        %p264 = scmp.lt.s32.totalorder %s263, 3
        %s265 = scalar_select %p264, %s263, 3
        %s266 = scalar_lea.vmem %s2, %s265
        %s267 = smul.u32 2, %s19
        %s268 = smul.u32 8, %s18
        %s269 = smul.u32 2, %s19
        %v271 = vld [vmem:[%s260] sm:$0xf]
        %v272 = vld [vmem:[%s260 + $0x4] sm:$0xf]
        %v273 = vld [vmem:[%s260 + $0x8] sm:$0xf]
        %v274 = vld [vmem:[%s260 + $0xc] sm:$0xf]
        %v275 = vld [vmem:[%s260 + $0x10] sm:$0xf]
        %v276 = vld [vmem:[%s260 + $0x14] sm:$0xf]
        %v277 = vld [vmem:[%s260 + $0x18] sm:$0xf]
        %v278 = vld [vmem:[%s260 + $0x1c] sm:$0xf]
        %v279 = vld [vmem:[%s227] sm:$0xff]
        %v280 = vld [vmem:[%s227 + $0x8] sm:$0xff]
        %v281 = vld [vmem:[%s227 + $0x10] sm:$0xff]
        %v282 = vld [vmem:[%s227 + $0x18] sm:$0xff]
        %v283 = vld [vmem:[%s266] sm:$0x3]
        %v285 = vlaneseq
        %v286 = vshrl.u32 %v285, 7
        %v287 = vsub.s32 0, %v286
        %v288 = vrot.slane %v283, %v287
        %v289 = vlaneseq
        %v290 = vshrl.u32 %v289, 7
        %v291 = vsub.s32 1, %v290
        %v292 = vrot.slane %v283, %v291
        %v303 = vunpack.c.l.b16 %v271
        %v304 = vunpack.c.l.b16 %v272
        %v305 = vunpack.c.l.b16 %v273
        %v306 = vunpack.c.l.b16 %v274
        %v307 = vunpack.c.l.b16 %v275
        %v308 = vunpack.c.l.b16 %v276
        %v309 = vunpack.c.l.b16 %v277
        %v310 = vunpack.c.l.b16 %v278
        %v311 = vpack.c.b16 %v304, %v303
        %v312 = vpack.c.b16 %v306, %v305
        %v313 = vpack.c.b16 %v308, %v307
        %v314 = vpack.c.b16 %v310, %v309
        %v319 = vunpack.c.l.b16 %v279
        %v320 = vunpack.c.h.b16 %v279
        %v321 = vunpack.c.l.b16 %v280
        %v322 = vunpack.c.h.b16 %v280
        %v323 = vunpack.c.l.b16 %v281
        %v324 = vunpack.c.h.b16 %v281
        %v325 = vunpack.c.l.b16 %v282
        %v326 = vunpack.c.h.b16 %v282
        %v327 = vpack.c.b16 %v321, %v319
        %v328 = vpack.c.b16 %v322, %v320
        %v329 = vpack.c.b16 %v325, %v323
        %v330 = vpack.c.b16 %v326, %v324
        %vm335 = vcmask 261120
        %v337 = vsel %vm335, %v311, 0
        %v340 = vsel %vm335, %v312, 0
        %v343 = vsel %vm335, %v313, 0
        %v346 = vsel %vm335, %v314, 0
        %348 = vmatprep.subr.bf16.mxu0 %v328
        %349 = vmatpush1.bf16.msra.mxu0 %v327
        %350 = vmatprep.subr.bf16.mxu0 %v330
        %351 = vmatpush1.bf16.msra.mxu0 %v329
        %352 = vmatprep.subr.bf16.mxu0 0
        %353 = vmatpush1.bf16.msra.mxu0 0
        %354 = vmatprep.subr.bf16.mxu0 0
        %355 = vmatpush1.bf16.msra.mxu0 0
        %356 = vmatprep.subr.bf16.mxu0 0
        %357 = vmatpush1.bf16.msra.mxu0 0
        %358 = vmatprep.subr.bf16.mxu0 0
        %359 = vmatpush1.bf16.msra.mxu0 0
        %360 = vmatprep.subr.bf16.mxu0 0
        %361 = vmatpush1.bf16.msra.mxu0 0
        %362 = vmatprep.subr.bf16.mxu0 0
        %363 = vmatpush1.bf16.msra.mxu0 0
        %364 = vmatprep.subr.bf16.mxu0 0
        %365 = vmatpush1.bf16.msra.mxu0 0
        %366 = vmatprep.subr.bf16.mxu0 0
        %367 = vmatpush1.bf16.msra.mxu0 0
        %368 = vmatprep.subr.bf16.mxu0 0
        %369 = vmatpush1.bf16.msra.mxu0 0
        %370 = vmatprep.subr.bf16.mxu0 0
        %371 = vmatpush1.bf16.msra.mxu0 0
        %372 = vmatprep.subr.bf16.mxu0 0
        %373 = vmatpush1.bf16.msra.mxu0 0
        %374 = vmatprep.subr.bf16.mxu0 0
        %375 = vmatpush1.bf16.msra.mxu0 0
        %376 = vmatprep.subr.bf16.mxu0 0
        %377 = vmatpush1.bf16.msra.mxu0 0
        %378 = vmatprep.subr.bf16.mxu0 0
        %379 = vmatpush1.bf16.msra.mxu0 0
        %380 = vmatprep.mubr.bf16.mxu0 0
        %381 = vmatmul.mubr.bf16.gmra.mrb[0].mxu0 %v337
        %v382 = vpop.f32.mrb[0].mxu0
        %v383 = vadd.f32 %v288, %v382
        %v384 = vpop.f32.mrb[0].mxu0
        %v385 = vadd.f32 %v292, %v384
        %v386 = vpop.f32.mrb[0].mxu0
        %v387 = vadd.f32 %v288, %v386
        %v388 = vpop.f32.mrb[0].mxu0
        %v389 = vadd.f32 %v292, %v388
        %390 = vmatprep.mubr.bf16.mxu0 0
        %391 = vmatmul.mubr.bf16.gmra.mrb[0].mxu0 %v340
        %v392 = vpop.f32.mrb[0].mxu0
        %v393 = vadd.f32 %v288, %v392
        %v394 = vpop.f32.mrb[0].mxu0
        %v395 = vadd.f32 %v292, %v394
        %v396 = vpop.f32.mrb[0].mxu0
        %v397 = vadd.f32 %v288, %v396
        %v398 = vpop.f32.mrb[0].mxu0
        %v399 = vadd.f32 %v292, %v398
        %400 = vmatprep.mubr.bf16.mxu0 0
        %401 = vmatmul.mubr.bf16.gmra.mrb[0].mxu0 %v343
        %v402 = vpop.f32.mrb[0].mxu0
        %v403 = vadd.f32 %v288, %v402
        %v404 = vpop.f32.mrb[0].mxu0
        %v405 = vadd.f32 %v292, %v404
        %v406 = vpop.f32.mrb[0].mxu0
        %v407 = vadd.f32 %v288, %v406
        %v408 = vpop.f32.mrb[0].mxu0
        %v409 = vadd.f32 %v292, %v408
        %410 = vmatprep.mubr.bf16.mxu0 0
        %411 = vmatmul.mubr.bf16.gmra.mrb[0].mxu0 %v346
        %v412 = vpop.f32.mrb[0].mxu0
        %v413 = vadd.f32 %v288, %v412
        %v414 = vpop.f32.mrb[0].mxu0
        %v415 = vadd.f32 %v292, %v414
        %v416 = vpop.f32.mrb[0].mxu0
        %v417 = vadd.f32 %v288, %v416
        %v418 = vpop.f32.mrb[0].mxu0
        %v419 = vadd.f32 %v292, %v418
        %420 = vdwg.mxu0
        %v421 = vpack.c.bf16 %v387, %v383
        %v422 = vpack.c.bf16 %v389, %v385
        %v423 = vpack.c.bf16 %v397, %v393
        %v424 = vpack.c.bf16 %v399, %v395
        %v425 = vpack.c.bf16 %v407, %v403
        %v426 = vpack.c.bf16 %v409, %v405
        %v427 = vpack.c.bf16 %v417, %v413
        %v428 = vpack.c.bf16 %v419, %v415
        %v437 = vunpack.c.l.b16 %v421
        %v438 = vunpack.c.l.b16 %v422
        %v439 = vunpack.c.h.b16 %v421
        %v440 = vunpack.c.h.b16 %v422
        %v441 = vunpack.c.l.b16 %v423
        %v442 = vunpack.c.l.b16 %v424
        %v443 = vunpack.c.h.b16 %v423
        %v444 = vunpack.c.h.b16 %v424
        %v445 = vunpack.c.l.b16 %v425
        %v446 = vunpack.c.l.b16 %v426
        %v447 = vunpack.c.h.b16 %v425
        %v448 = vunpack.c.h.b16 %v426
        %v449 = vunpack.c.l.b16 %v427
        %v450 = vunpack.c.l.b16 %v428
        %v451 = vunpack.c.h.b16 %v427
        %v452 = vunpack.c.h.b16 %v428
        %v453 = vpack.c.b16 %v438, %v437
        %v454 = vpack.c.b16 %v440, %v439
        %v455 = vpack.c.b16 %v442, %v441
        %v456 = vpack.c.b16 %v444, %v443
        %v457 = vpack.c.b16 %v446, %v445
        %v458 = vpack.c.b16 %v448, %v447
        %v459 = vpack.c.b16 %v450, %v449
        %v460 = vpack.c.b16 %v452, %v451
        %469 = vst [vmem:[%s255] sm:$0xff] %v453
        %470 = vst [vmem:[%s255 + $0x8] sm:$0xff] %v454
        %471 = vst [vmem:[%s255 + $0x10] sm:$0xff] %v455
        %472 = vst [vmem:[%s255 + $0x18] sm:$0xff] %v456
        %473 = vst [vmem:[%s255 + $0x20] sm:$0xff] %v457
        %474 = vst [vmem:[%s255 + $0x28] sm:$0xff] %v458
        %475 = vst [vmem:[%s255 + $0x30] sm:$0xff] %v459
        %476 = vst [vmem:[%s255 + $0x38] sm:$0xff] %v460
        %s477 = sand.u32 %s114, 1
        %s478 = sand.u32 %s114, 1
        %s479 = smul.addr %s478, 64
        %s480 = scalar_lea.vmem [#allocation3], %s479
        // Predicated region
        $region71: #{rnn_forward_pallas.3} parent=65 // pred_check
          %p481 = pneg %p124
        $region72: #{rnn_forward_pallas.3} parent=65 // pred_check_branch
          %483 = sbr.rel (%p481) target = $region74
        $region73: #{rnn_forward_pallas.3} parent=65 // pred_region
          %s484 = smul.u32 8, %s18
          %s485 = smul.u32 2, %s19
          %s486 = smul.addr %s484, 4
          %s487 = sadd.s32 %s485, %s486
          %s488 = smul.addr %s487, 4
          %s489 = scalar_lea.vmem %s3, %s488
          // Predicated region
          $region75: #{rnn_forward_pallas.3} parent=73 // pred_check
            _
          $region76: #{rnn_forward_pallas.3} parent=73 // pred_check_branch
            %491 = sbr.rel (0) target = $region78
          $region77: #{rnn_forward_pallas.3} parent=73 // pred_region
            // Predicated region
            $region79: #{rnn_forward_pallas.3} parent=77 // pred_check
              _
            $region80: #{rnn_forward_pallas.3} parent=77 // pred_check_branch
              %493 = sbr.rel (0) target = $region82
            $region81: #{rnn_forward_pallas.3} parent=77 // pred_region
              // Predicated region
              $region94: #{rnn_forward_pallas.3} parent=81 // pred_check
                _
              $region95: #{rnn_forward_pallas.3} parent=81 // pred_check_branch
                %522 = sbr.rel (0) target = $region97
              $region96: #{rnn_forward_pallas.3} parent=81 // pred_region
                loop: start=0, step=1, limit=1
                $region98: #{rnn_forward_pallas.3} parent=96 // loop_pre_header
                  _
                $region99: #{rnn_forward_pallas.3} parent=96 // loop_header
                  %s524 = sphi 0, %s528
                  %p525 = scmp.ge.s32.totalorder %s524, 1
                  %s529 = sphi %s480, %s480
                  %s530 = sphi %s489, %s489
                $region100: #{rnn_forward_pallas.3} parent=96 // loop_header_branch
                  %527 = sbr.rel (%p525) target = $region104
                $region101: #{rnn_forward_pallas.3} parent=96 // loop_body
                  %v531 = vld [vmem:[%s529] sm:$0xff]
                  %532 = vst [vmem:[%s530] sm:$0xff] %v531
                  %v533 = vld [vmem:[%s529 + $0x8] sm:$0xff]
                  %534 = vst [vmem:[%s530 + $0x10] sm:$0xff] %v533
                  %v535 = vld [vmem:[%s529 + $0x10] sm:$0xff]
                  %536 = vst [vmem:[%s530 + $0x20] sm:$0xff] %v535
                  %v537 = vld [vmem:[%s529 + $0x18] sm:$0xff]
                  %538 = vst [vmem:[%s530 + $0x30] sm:$0xff] %v537
                  %v539 = vld [vmem:[%s529 + $0x20] sm:$0xff]
                  %540 = vst [vmem:[%s530 + $0x40] sm:$0xff] %v539
                  %v541 = vld [vmem:[%s529 + $0x28] sm:$0xff]
                  %542 = vst [vmem:[%s530 + $0x50] sm:$0xff] %v541
                  %v543 = vld [vmem:[%s529 + $0x30] sm:$0xff]
                  %544 = vst [vmem:[%s530 + $0x60] sm:$0xff] %v543
                  %v545 = vld [vmem:[%s529 + $0x38] sm:$0xff]
                  %546 = vst [vmem:[%s530 + $0x70] sm:$0xff] %v545
                $region102: #{rnn_forward_pallas.3} parent=96 // loop_footer
                  %s528 = sadd.s32 1, %s524
                $region103: #{rnn_forward_pallas.3} parent=96 // loop_footer_branch
                  %523 = sbr.rel target = $region99
                $region104: #{rnn_forward_pallas.3} parent=96 // loop_exit
                  _
              $region97: #{rnn_forward_pallas.3} parent=81 // pred_fallthru
                _
              // Predicated region
              $region105: #{rnn_forward_pallas.3} parent=81 // pred_check
                _
              $region106: #{rnn_forward_pallas.3} parent=81 // pred_check_branch
                %548 = sbr.rel target = $region108
              $region107: #{rnn_forward_pallas.3} parent=81 // pred_region
                _
              $region108: #{rnn_forward_pallas.3} parent=81 // pred_fallthru
                _
            $region82: #{rnn_forward_pallas.3} parent=77 // pred_fallthru
              _
            // Predicated region
            $region83: #{rnn_forward_pallas.3} parent=77 // pred_check
              _
            $region84: #{rnn_forward_pallas.3} parent=77 // pred_check_branch
              %495 = sbr.rel target = $region86
            $region85: #{rnn_forward_pallas.3} parent=77 // pred_region
              loop: start=0, step=1, limit=1
              $region87: #{rnn_forward_pallas.3} parent=85 // loop_pre_header
                _
              $region88: #{rnn_forward_pallas.3} parent=85 // loop_header
                %s498 = sphi 0, %s502
                %p499 = scmp.ge.s32.totalorder %s498, 1
                %s503 = sphi %s480, %s480
                %s504 = sphi %s489, %s489
              $region89: #{rnn_forward_pallas.3} parent=85 // loop_header_branch
                %501 = sbr.rel (%p499) target = $region93
              $region90: #{rnn_forward_pallas.3} parent=85 // loop_body
                %v505 = vld [vmem:[%s503] sm:$0xff]
                %506 = vst [vmem:[%s504] sm:$0xff] %v505
                %v507 = vld [vmem:[%s503 + $0x8] sm:$0xff]
                %508 = vst [vmem:[%s504 + $0x10] sm:$0xff] %v507
                %v509 = vld [vmem:[%s503 + $0x10] sm:$0xff]
                %510 = vst [vmem:[%s504 + $0x20] sm:$0xff] %v509
                %v511 = vld [vmem:[%s503 + $0x18] sm:$0xff]
                %512 = vst [vmem:[%s504 + $0x30] sm:$0xff] %v511
                %v513 = vld [vmem:[%s503 + $0x20] sm:$0xff]
                %514 = vst [vmem:[%s504 + $0x40] sm:$0xff] %v513
                %v515 = vld [vmem:[%s503 + $0x28] sm:$0xff]
                %516 = vst [vmem:[%s504 + $0x50] sm:$0xff] %v515
                %v517 = vld [vmem:[%s503 + $0x30] sm:$0xff]
                %518 = vst [vmem:[%s504 + $0x60] sm:$0xff] %v517
                %v519 = vld [vmem:[%s503 + $0x38] sm:$0xff]
                %520 = vst [vmem:[%s504 + $0x70] sm:$0xff] %v519
              $region91: #{rnn_forward_pallas.3} parent=85 // loop_footer
                %s502 = sadd.s32 1, %s498
              $region92: #{rnn_forward_pallas.3} parent=85 // loop_footer_branch
                %497 = sbr.rel target = $region88
              $region93: #{rnn_forward_pallas.3} parent=85 // loop_exit
                _
            $region86: #{rnn_forward_pallas.3} parent=77 // pred_fallthru
              _
          $region78: #{rnn_forward_pallas.3} parent=73 // pred_fallthru
            _
          %549 = vnop
        $region74: #{rnn_forward_pallas.3} parent=65 // pred_fallthru
          _
      $region66: #{rnn_forward_pallas.3} parent=5 // pred_fallthru
        _
      %p550 = scmp.le.s32.totalorder 2, %s9
      // Predicated region
      $region109: #{rnn_forward_pallas.3} parent=5 // pred_check
        %p551 = pneg %p550
      $region110: #{rnn_forward_pallas.3} parent=5 // pred_check_branch
        %553 = sbr.rel (%p551) target = $region112
      $region111: #{rnn_forward_pallas.3} parent=5 // pred_region
        %s554 = ssub.s32 %s9, 2
        // Predicated region
        $region113: #{rnn_forward_pallas.3} parent=111 // pred_check
          %p555 = pneg %p130
        $region114: #{rnn_forward_pallas.3} parent=111 // pred_check_branch
          %557 = sbr.rel (%p555) target = $region116
        $region115: #{rnn_forward_pallas.3} parent=111 // pred_region
          %s558 = sand.u32 %s115, 1
          %s559 = sand.u32 %s115, 1
          %s560 = smul.addr %s559, 64
          %s561 = scalar_lea.vmem [#allocation3], %s560
        $region116: #{rnn_forward_pallas.3} parent=111 // pred_fallthru
          _
      $region112: #{rnn_forward_pallas.3} parent=5 // pred_fallthru
        _
    $region6: #{rnn_forward_pallas.3} parent=1 // loop_footer
      %s13 = sadd.s32 1, %s9
    $region7: #{rnn_forward_pallas.3} parent=1 // loop_footer_branch
      %8 = sbr.rel target = $region3
    $region8: #{rnn_forward_pallas.3} parent=1 // loop_exit
      _

// kernel: rnn_forward_pallas.5
$region0: #{rnn_forward_pallas.5}
  #allocation0 [shape = 'u32[]', space=smem, size = 0x4, offset = 0x4, fixed_abs, tag = 'smem constant byte address 0x4 - core index']
  #allocation1 [shape = 'u32[144,128]{1,0:T(1,128)}', space=vmem, size = 0x12000, scoped, tag = 'internal scratch']
  %s0 = inlined_call_operand.vmem [shape: bf16[64,128], index: 0, kind: input, shape index: {}]
  %s1 = inlined_call_operand.vmem [shape: bf16[128,128], index: 1, kind: input, shape index: {}]
  %s2 = inlined_call_operand.vmem [shape: f32[1,128], index: 2, kind: input, shape index: {}]
  %s3 = inlined_call_operand.vmem [shape: f32[64,128], index: 3, kind: output, shape index: {}]
  %s4 = sld [smem:[#allocation0]]
  $region22: #{rnn_forward_pallas.5} parent=0
    _
  %s6 = ssub.s32 1, %s4
  %s7 = scalar_select 0, %s6, %s4
  // Predicated region
  $region2: #{rnn_forward_pallas.5} parent=0 // pred_check
    _
  $region3: #{rnn_forward_pallas.5} parent=0 // pred_check_branch
    %9 = sbr.rel (0) target = $region5
  $region4: #{rnn_forward_pallas.5} parent=0 // pred_region
    _
  $region5: #{rnn_forward_pallas.5} parent=0 // pred_fallthru
    _
  // Predicated region
  $region6: #{rnn_forward_pallas.5} parent=0 // pred_check
    _
  $region7: #{rnn_forward_pallas.5} parent=0 // pred_check_branch
    %11 = sbr.rel (0) target = $region9
  $region8: #{rnn_forward_pallas.5} parent=0 // pred_region
    _
  $region9: #{rnn_forward_pallas.5} parent=0 // pred_fallthru
    _
  // Predicated region
  $region10: #{rnn_forward_pallas.5} parent=0 // pred_check
    _
  $region11: #{rnn_forward_pallas.5} parent=0 // pred_check_branch
    %13 = sbr.rel (0) target = $region13
  $region12: #{rnn_forward_pallas.5} parent=0 // pred_region
    _
  $region13: #{rnn_forward_pallas.5} parent=0 // pred_fallthru
    _
  %v15 = vld [vmem:[%s0] sm:$0xf]
  %v16 = vld [vmem:[%s0 + $0x4] sm:$0xf]
  %v17 = vld [vmem:[%s0 + $0x8] sm:$0xf]
  %v18 = vld [vmem:[%s0 + $0xc] sm:$0xf]
  %v19 = vld [vmem:[%s0 + $0x10] sm:$0xf]
  %v20 = vld [vmem:[%s0 + $0x14] sm:$0xf]
  %v21 = vld [vmem:[%s0 + $0x18] sm:$0xf]
  %v22 = vld [vmem:[%s0 + $0x1c] sm:$0xf]
  %v23 = vld [vmem:[%s1] sm:$0xf]
  %v24 = vld [vmem:[%s1 + $0x4] sm:$0xf]
  %v25 = vld [vmem:[%s1 + $0x8] sm:$0xf]
  %v26 = vld [vmem:[%s1 + $0xc] sm:$0xf]
  %v27 = vld [vmem:[%s1 + $0x10] sm:$0xf]
  %v28 = vld [vmem:[%s1 + $0x14] sm:$0xf]
  %v29 = vld [vmem:[%s1 + $0x18] sm:$0xf]
  %v30 = vld [vmem:[%s1 + $0x1c] sm:$0xf]
  %v31 = vld [vmem:[%s1 + $0x20] sm:$0xf]
  %v32 = vld [vmem:[%s1 + $0x24] sm:$0xf]
  %v33 = vld [vmem:[%s1 + $0x28] sm:$0xf]
  %v34 = vld [vmem:[%s1 + $0x2c] sm:$0xf]
  %v35 = vld [vmem:[%s1 + $0x30] sm:$0xf]
  %v36 = vld [vmem:[%s1 + $0x34] sm:$0xf]
  %v37 = vld [vmem:[%s1 + $0x38] sm:$0xf]
  %v38 = vld [vmem:[%s1 + $0x3c] sm:$0xf]
  %v39 = vld [vmem:[%s2] sm:$0x1]
  %v41 = vlaneseq
  %v42 = vshrl.u32 %v41, 7
  %v43 = vsub.s32 0, %v42
  %v44 = vrot.slane %v39, %v43
  %v54 = vunpack.c.l.b16 %v15
  %v55 = vunpack.c.l.b16 %v16
  %v56 = vunpack.c.l.b16 %v17
  %v57 = vunpack.c.l.b16 %v18
  %v58 = vunpack.c.l.b16 %v19
  %v59 = vunpack.c.l.b16 %v20
  %v60 = vunpack.c.l.b16 %v21
  %v61 = vunpack.c.l.b16 %v22
  %v62 = vpack.c.b16 %v55, %v54
  %v63 = vpack.c.b16 %v57, %v56
  %v64 = vpack.c.b16 %v59, %v58
  %v65 = vpack.c.b16 %v61, %v60
  %v86 = vunpack.c.l.b16 %v23
  %v87 = vunpack.c.l.b16 %v24
  %v88 = vunpack.c.l.b16 %v25
  %v89 = vunpack.c.l.b16 %v26
  %v90 = vunpack.c.l.b16 %v27
  %v91 = vunpack.c.l.b16 %v28
  %v92 = vunpack.c.l.b16 %v29
  %v93 = vunpack.c.l.b16 %v30
  %v94 = vunpack.c.l.b16 %v31
  %v95 = vunpack.c.l.b16 %v32
  %v96 = vunpack.c.l.b16 %v33
  %v97 = vunpack.c.l.b16 %v34
  %v98 = vunpack.c.l.b16 %v35
  %v99 = vunpack.c.l.b16 %v36
  %v100 = vunpack.c.l.b16 %v37
  %v101 = vunpack.c.l.b16 %v38
  %v102 = vpack.c.b16 %v87, %v86
  %v103 = vpack.c.b16 %v89, %v88
  %v104 = vpack.c.b16 %v91, %v90
  %v105 = vpack.c.b16 %v93, %v92
  %v106 = vpack.c.b16 %v95, %v94
  %v107 = vpack.c.b16 %v97, %v96
  %v108 = vpack.c.b16 %v99, %v98
  %v109 = vpack.c.b16 %v101, %v100
  %118 = vmatprep.subr.bf16.mxu0 0
  %119 = vmatpush1.bf16.msra.mxu0 %v102
  %120 = vmatprep.subr.bf16.mxu0 0
  %121 = vmatpush1.bf16.msra.mxu0 %v103
  %122 = vmatprep.subr.bf16.mxu0 0
  %123 = vmatpush1.bf16.msra.mxu0 %v104
  %124 = vmatprep.subr.bf16.mxu0 0
  %125 = vmatpush1.bf16.msra.mxu0 %v105
  %126 = vmatprep.subr.bf16.mxu0 0
  %127 = vmatpush1.bf16.msra.mxu0 %v106
  %128 = vmatprep.subr.bf16.mxu0 0
  %129 = vmatpush1.bf16.msra.mxu0 %v107
  %130 = vmatprep.subr.bf16.mxu0 0
  %131 = vmatpush1.bf16.msra.mxu0 %v108
  %132 = vmatprep.subr.bf16.mxu0 0
  %133 = vmatpush1.bf16.msra.mxu0 %v109
  %134 = vmatprep.subr.bf16.mxu0 0
  %135 = vmatpush1.bf16.msra.mxu0 0
  %136 = vmatprep.subr.bf16.mxu0 0
  %137 = vmatpush1.bf16.msra.mxu0 0
  %138 = vmatprep.subr.bf16.mxu0 0
  %139 = vmatpush1.bf16.msra.mxu0 0
  %140 = vmatprep.subr.bf16.mxu0 0
  %141 = vmatpush1.bf16.msra.mxu0 0
  %142 = vmatprep.subr.bf16.mxu0 0
  %143 = vmatpush1.bf16.msra.mxu0 0
  %144 = vmatprep.subr.bf16.mxu0 0
  %145 = vmatpush1.bf16.msra.mxu0 0
  %146 = vmatprep.subr.bf16.mxu0 0
  %147 = vmatpush1.bf16.msra.mxu0 0
  %148 = vmatprep.subr.bf16.mxu0 0
  %149 = vmatpush1.bf16.msra.mxu0 0
  %150 = vmatprep.mubr.bf16.mxu0 0
  %151 = vmatmul.mubr.bf16.gmra.mrb[0].mxu0 %v62
  %v152 = vpop.f32.mrb[0].mxu0
  %v153 = vadd.f32 %v44, %v152
  %v154 = vpop.f32.mrb[0].mxu0
  %v155 = vpop.f32.mrb[0].mxu0
  %v156 = vadd.f32 %v44, %v155
  %v157 = vpop.f32.mrb[0].mxu0
  %158 = vmatprep.mubr.bf16.mxu0 0
  %159 = vmatmul.mubr.bf16.gmra.mrb[0].mxu0 %v63
  %v160 = vpop.f32.mrb[0].mxu0
  %v161 = vadd.f32 %v44, %v160
  %v162 = vpop.f32.mrb[0].mxu0
  %v163 = vpop.f32.mrb[0].mxu0
  %v164 = vadd.f32 %v44, %v163
  %v165 = vpop.f32.mrb[0].mxu0
  %166 = vmatprep.mubr.bf16.mxu0 0
  %167 = vmatmul.mubr.bf16.gmra.mrb[0].mxu0 %v64
  %v168 = vpop.f32.mrb[0].mxu0
  %v169 = vadd.f32 %v44, %v168
  %v170 = vpop.f32.mrb[0].mxu0
  %v171 = vpop.f32.mrb[0].mxu0
  %v172 = vadd.f32 %v44, %v171
  %v173 = vpop.f32.mrb[0].mxu0
  %174 = vmatprep.mubr.bf16.mxu0 0
  %175 = vmatmul.mubr.bf16.gmra.mrb[0].mxu0 %v65
  %v176 = vpop.f32.mrb[0].mxu0
  %v177 = vadd.f32 %v44, %v176
  %v178 = vpop.f32.mrb[0].mxu0
  %v179 = vpop.f32.mrb[0].mxu0
  %v180 = vadd.f32 %v44, %v179
  %v181 = vpop.f32.mrb[0].mxu0
  %182 = vdwg.mxu0
  %183 = vst [vmem:[%s3] sm:$0xff] %v153
  %184 = vst [vmem:[%s3 + $0x8] sm:$0xff] %v156
  %185 = vst [vmem:[%s3 + $0x10] sm:$0xff] %v161
  %186 = vst [vmem:[%s3 + $0x18] sm:$0xff] %v164
  %187 = vst [vmem:[%s3 + $0x20] sm:$0xff] %v169
  %188 = vst [vmem:[%s3 + $0x28] sm:$0xff] %v172
  %189 = vst [vmem:[%s3 + $0x30] sm:$0xff] %v177
  %190 = vst [vmem:[%s3 + $0x38] sm:$0xff] %v180
  // Predicated region
  $region14: #{rnn_forward_pallas.5} parent=0 // pred_check
    _
  $region15: #{rnn_forward_pallas.5} parent=0 // pred_check_branch
    %192 = sbr.rel (0) target = $region17
  $region16: #{rnn_forward_pallas.5} parent=0 // pred_region
    _
  $region17: #{rnn_forward_pallas.5} parent=0 // pred_fallthru
    _
  // Predicated region
  $region18: #{rnn_forward_pallas.5} parent=0 // pred_check
    _
  $region19: #{rnn_forward_pallas.5} parent=0 // pred_check_branch
    %194 = sbr.rel (0) target = $region21
  $region20: #{rnn_forward_pallas.5} parent=0 // pred_region
    _
  $region21: #{rnn_forward_pallas.5} parent=0 // pred_fallthru
    _

// kernel: rnn_forward_pallas.4
$region0: #{rnn_forward_pallas.4}
  #allocation0 [shape = 'u32[]', space=smem, size = 0x4, offset = 0x4, fixed_abs, tag = 'smem constant byte address 0x4 - core index']
  #allocation1 [shape = 'u32[144,128]{1,0:T(1,128)}', space=vmem, size = 0x12000, scoped, tag = 'internal scratch']
  %s0 = inlined_call_operand.vmem [shape: bf16[8,8,512], index: 0, kind: input, shape index: {}]
  %s1 = inlined_call_operand.vmem [shape: bf16[128,512], index: 1, kind: input, shape index: {}]
  %s2 = inlined_call_operand.vmem [shape: f32[8,128], index: 2, kind: input, shape index: {}]
  %s3 = inlined_call_operand.vmem [shape: f32[8,128], index: 3, kind: input, shape index: {}]
  %s4 = inlined_call_operand.vmem [shape: bf16[8,8,128], index: 4, kind: output, shape index: {0}]
  %s5 = inlined_call_operand.vmem [shape: f32[8,128], index: 5, kind: output, shape index: {1}]
  %s6 = inlined_call_operand.vmem [shape: f32[8,128], index: 6, kind: output, shape index: {2}]
  %7 = xla_tuple %s4, %s5, %s6
  %s8 = sld [smem:[#allocation0]]
  $region46: #{rnn_forward_pallas.4} parent=0
    _
  %s10 = ssub.s32 1, %s8
  %s11 = scalar_select 0, %s10, %s8
  // Predicated region
  $region2: #{rnn_forward_pallas.4} parent=0 // pred_check
    _
  $region3: #{rnn_forward_pallas.4} parent=0 // pred_check_branch
    %13 = sbr.rel (0) target = $region5
  $region4: #{rnn_forward_pallas.4} parent=0 // pred_region
    _
  $region5: #{rnn_forward_pallas.4} parent=0 // pred_fallthru
    _
  // Predicated region
  $region6: #{rnn_forward_pallas.4} parent=0 // pred_check
    _
  $region7: #{rnn_forward_pallas.4} parent=0 // pred_check_branch
    %15 = sbr.rel (0) target = $region9
  $region8: #{rnn_forward_pallas.4} parent=0 // pred_region
    _
  $region9: #{rnn_forward_pallas.4} parent=0 // pred_fallthru
    _
  // Predicated region
  $region10: #{rnn_forward_pallas.4} parent=0 // pred_check
    _
  $region11: #{rnn_forward_pallas.4} parent=0 // pred_check_branch
    %17 = sbr.rel (0) target = $region13
  $region12: #{rnn_forward_pallas.4} parent=0 // pred_region
    _
  $region13: #{rnn_forward_pallas.4} parent=0 // pred_fallthru
    _
  // Predicated region
  $region14: #{rnn_forward_pallas.4} parent=0 // pred_check
    _
  $region15: #{rnn_forward_pallas.4} parent=0 // pred_check_branch
    %19 = sbr.rel (0) target = $region17
  $region16: #{rnn_forward_pallas.4} parent=0 // pred_region
    _
  $region17: #{rnn_forward_pallas.4} parent=0 // pred_fallthru
    _
  %p21 = scmp.eq.s32.totalorder 0, 0
  // Predicated region
  $region18: #{rnn_forward_pallas.4} parent=0 // pred_check
    %p22 = pneg %p21
  $region19: #{rnn_forward_pallas.4} parent=0 // pred_check_branch
    %24 = sbr.rel (%p22) target = $region21
  $region20: #{rnn_forward_pallas.4} parent=0 // pred_region
    %v25 = vld [vmem:[%s2] sm:$0xff]
    %26 = vst [vmem:[%s5] sm:$0xff] %v25
    %v27 = vld [vmem:[%s3] sm:$0xff]
    %28 = vst [vmem:[%s6] sm:$0xff] %v27
  $region21: #{rnn_forward_pallas.4} parent=0 // pred_fallthru
    _
  %v29 = vld [vmem:[%s1] sm:$0xff]
  %v30 = vld [vmem:[%s1 + $0x8] sm:$0xff]
  %v31 = vld [vmem:[%s1 + $0x10] sm:$0xff]
  %v32 = vld [vmem:[%s1 + $0x18] sm:$0xff]
  %v33 = vld [vmem:[%s1 + $0x20] sm:$0xff]
  %v34 = vld [vmem:[%s1 + $0x28] sm:$0xff]
  %v35 = vld [vmem:[%s1 + $0x30] sm:$0xff]
  %v36 = vld [vmem:[%s1 + $0x38] sm:$0xff]
  %v37 = vld [vmem:[%s1 + $0x40] sm:$0xff]
  %v38 = vld [vmem:[%s1 + $0x48] sm:$0xff]
  %v39 = vld [vmem:[%s1 + $0x50] sm:$0xff]
  %v40 = vld [vmem:[%s1 + $0x58] sm:$0xff]
  %v41 = vld [vmem:[%s1 + $0x60] sm:$0xff]
  %v42 = vld [vmem:[%s1 + $0x68] sm:$0xff]
  %v43 = vld [vmem:[%s1 + $0x70] sm:$0xff]
  %v44 = vld [vmem:[%s1 + $0x78] sm:$0xff]
  %v45 = vld [vmem:[%s1 + $0x80] sm:$0xff]
  %v46 = vld [vmem:[%s1 + $0x88] sm:$0xff]
  %v47 = vld [vmem:[%s1 + $0x90] sm:$0xff]
  %v48 = vld [vmem:[%s1 + $0x98] sm:$0xff]
  %v49 = vld [vmem:[%s1 + $0xa0] sm:$0xff]
  %v50 = vld [vmem:[%s1 + $0xa8] sm:$0xff]
  %v51 = vld [vmem:[%s1 + $0xb0] sm:$0xff]
  %v52 = vld [vmem:[%s1 + $0xb8] sm:$0xff]
  %v53 = vld [vmem:[%s1 + $0xc0] sm:$0xff]
  %v54 = vld [vmem:[%s1 + $0xc8] sm:$0xff]
  %v55 = vld [vmem:[%s1 + $0xd0] sm:$0xff]
  %v56 = vld [vmem:[%s1 + $0xd8] sm:$0xff]
  %v57 = vld [vmem:[%s1 + $0xe0] sm:$0xff]
  %v58 = vld [vmem:[%s1 + $0xe8] sm:$0xff]
  %v59 = vld [vmem:[%s1 + $0xf0] sm:$0xff]
  %v60 = vld [vmem:[%s1 + $0xf8] sm:$0xff]
  %v61 = vld [vmem:[%s5] sm:$0xff]
  %v62 = vld [vmem:[%s6] sm:$0xff]
  %v63 = vld [vmem:[%s0] sm:$0x11]
  %v64 = vld [vmem:[%s0 + $0x8] sm:$0x11]
  %v65 = vld [vmem:[%s0 + $0x10] sm:$0x11]
  %v66 = vld [vmem:[%s0 + $0x18] sm:$0x11]
  %v67 = vld [vmem:[%s0 + $0x20] sm:$0x11]
  %v68 = vld [vmem:[%s0 + $0x28] sm:$0x11]
  %v69 = vld [vmem:[%s0 + $0x30] sm:$0x11]
  %v70 = vld [vmem:[%s0 + $0x38] sm:$0x11]
  %v71 = vld [vmem:[%s0 + $0x40] sm:$0x11]
  %v72 = vld [vmem:[%s0 + $0x48] sm:$0x11]
  %v73 = vld [vmem:[%s0 + $0x50] sm:$0x11]
  %v74 = vld [vmem:[%s0 + $0x58] sm:$0x11]
  %v75 = vld [vmem:[%s0 + $0x60] sm:$0x11]
  %v76 = vld [vmem:[%s0 + $0x68] sm:$0x11]
  %v77 = vld [vmem:[%s0 + $0x70] sm:$0x11]
  %v78 = vld [vmem:[%s0 + $0x78] sm:$0x11]
  %v79 = vunpack.c.l.bf16 %v63
  %v80 = vunpack.c.h.bf16 %v63
  %v81 = vunpack.c.l.bf16 %v64
  %v82 = vunpack.c.h.bf16 %v64
  %v83 = vunpack.c.l.bf16 %v65
  %v84 = vunpack.c.h.bf16 %v65
  %v85 = vunpack.c.l.bf16 %v66
  %v86 = vunpack.c.h.bf16 %v66
  %v87 = vunpack.c.l.bf16 %v67
  %v88 = vunpack.c.h.bf16 %v67
  %v89 = vunpack.c.l.bf16 %v68
  %v90 = vunpack.c.h.bf16 %v68
  %v91 = vunpack.c.l.bf16 %v69
  %v92 = vunpack.c.h.bf16 %v69
  %v93 = vunpack.c.l.bf16 %v70
  %v94 = vunpack.c.h.bf16 %v70
  %v95 = vunpack.c.l.bf16 %v71
  %v96 = vunpack.c.h.bf16 %v71
  %v97 = vunpack.c.l.bf16 %v72
  %v98 = vunpack.c.h.bf16 %v72
  %v99 = vunpack.c.l.bf16 %v73
  %v100 = vunpack.c.h.bf16 %v73
  %v101 = vunpack.c.l.bf16 %v74
  %v102 = vunpack.c.h.bf16 %v74
  %v103 = vunpack.c.l.bf16 %v75
  %v104 = vunpack.c.h.bf16 %v75
  %v105 = vunpack.c.l.bf16 %v76
  %v106 = vunpack.c.h.bf16 %v76
  %v107 = vunpack.c.l.bf16 %v77
  %v108 = vunpack.c.h.bf16 %v77
  %v109 = vunpack.c.l.bf16 %v78
  %v110 = vunpack.c.h.bf16 %v78
  %v111 = vpack.c.bf16 %v61, %v61
  %v144 = vunpack.c.l.b16 %v29
  %v145 = vunpack.c.h.b16 %v29
  %v146 = vunpack.c.l.b16 %v30
  %v147 = vunpack.c.h.b16 %v30
  %v148 = vunpack.c.l.b16 %v31
  %v149 = vunpack.c.h.b16 %v31
  %v150 = vunpack.c.l.b16 %v32
  %v151 = vunpack.c.h.b16 %v32
  %v152 = vunpack.c.l.b16 %v33
  %v153 = vunpack.c.h.b16 %v33
  %v154 = vunpack.c.l.b16 %v34
  %v155 = vunpack.c.h.b16 %v34
  %v156 = vunpack.c.l.b16 %v35
  %v157 = vunpack.c.h.b16 %v35
  %v158 = vunpack.c.l.b16 %v36
  %v159 = vunpack.c.h.b16 %v36
  %v160 = vunpack.c.l.b16 %v37
  %v161 = vunpack.c.h.b16 %v37
  %v162 = vunpack.c.l.b16 %v38
  %v163 = vunpack.c.h.b16 %v38
  %v164 = vunpack.c.l.b16 %v39
  %v165 = vunpack.c.h.b16 %v39
  %v166 = vunpack.c.l.b16 %v40
  %v167 = vunpack.c.h.b16 %v40
  %v168 = vunpack.c.l.b16 %v41
  %v169 = vunpack.c.h.b16 %v41
  %v170 = vunpack.c.l.b16 %v42
  %v171 = vunpack.c.h.b16 %v42
  %v172 = vunpack.c.l.b16 %v43
  %v173 = vunpack.c.h.b16 %v43
  %v174 = vunpack.c.l.b16 %v44
  %v175 = vunpack.c.h.b16 %v44
  %v176 = vunpack.c.l.b16 %v45
  %v177 = vunpack.c.h.b16 %v45
  %v178 = vunpack.c.l.b16 %v46
  %v179 = vunpack.c.h.b16 %v46
  %v180 = vunpack.c.l.b16 %v47
  %v181 = vunpack.c.h.b16 %v47
  %v182 = vunpack.c.l.b16 %v48
  %v183 = vunpack.c.h.b16 %v48
  %v184 = vunpack.c.l.b16 %v49
  %v185 = vunpack.c.h.b16 %v49
  %v186 = vunpack.c.l.b16 %v50
  %v187 = vunpack.c.h.b16 %v50
  %v188 = vunpack.c.l.b16 %v51
  %v189 = vunpack.c.h.b16 %v51
  %v190 = vunpack.c.l.b16 %v52
  %v191 = vunpack.c.h.b16 %v52
  %v192 = vunpack.c.l.b16 %v53
  %v193 = vunpack.c.h.b16 %v53
  %v194 = vunpack.c.l.b16 %v54
  %v195 = vunpack.c.h.b16 %v54
  %v196 = vunpack.c.l.b16 %v55
  %v197 = vunpack.c.h.b16 %v55
  %v198 = vunpack.c.l.b16 %v56
  %v199 = vunpack.c.h.b16 %v56
  %v200 = vunpack.c.l.b16 %v57
  %v201 = vunpack.c.h.b16 %v57
  %v202 = vunpack.c.l.b16 %v58
  %v203 = vunpack.c.h.b16 %v58
  %v204 = vunpack.c.l.b16 %v59
  %v205 = vunpack.c.h.b16 %v59
  %v206 = vunpack.c.l.b16 %v60
  %v207 = vunpack.c.h.b16 %v60
  %v208 = vpack.c.b16 %v148, %v144
  %v209 = vpack.c.b16 %v149, %v145
  %v210 = vpack.c.b16 %v150, %v146
  %v211 = vpack.c.b16 %v151, %v147
  %v212 = vpack.c.b16 %v156, %v152
  %v213 = vpack.c.b16 %v157, %v153
  %v214 = vpack.c.b16 %v158, %v154
  %v215 = vpack.c.b16 %v159, %v155
  %v216 = vpack.c.b16 %v164, %v160
  %v217 = vpack.c.b16 %v165, %v161
  %v218 = vpack.c.b16 %v166, %v162
  %v219 = vpack.c.b16 %v167, %v163
  %v220 = vpack.c.b16 %v172, %v168
  %v221 = vpack.c.b16 %v173, %v169
  %v222 = vpack.c.b16 %v174, %v170
  %v223 = vpack.c.b16 %v175, %v171
  %v224 = vpack.c.b16 %v180, %v176
  %v225 = vpack.c.b16 %v181, %v177
  %v226 = vpack.c.b16 %v182, %v178
  %v227 = vpack.c.b16 %v183, %v179
  %v228 = vpack.c.b16 %v188, %v184
  %v229 = vpack.c.b16 %v189, %v185
  %v230 = vpack.c.b16 %v190, %v186
  %v231 = vpack.c.b16 %v191, %v187
  %v232 = vpack.c.b16 %v196, %v192
  %v233 = vpack.c.b16 %v197, %v193
  %v234 = vpack.c.b16 %v198, %v194
  %v235 = vpack.c.b16 %v199, %v195
  %v236 = vpack.c.b16 %v204, %v200
  %v237 = vpack.c.b16 %v205, %v201
  %v238 = vpack.c.b16 %v206, %v202
  %v239 = vpack.c.b16 %v207, %v203
  %272 = vmatprep.subr.bf16.mxu0 %v209
  %273 = vmatpush1.bf16.msra.mxu0 %v208
  %274 = vmatprep.subr.bf16.mxu0 %v213
  %275 = vmatpush1.bf16.msra.mxu0 %v212
  %276 = vmatprep.subr.bf16.mxu0 %v217
  %277 = vmatpush1.bf16.msra.mxu0 %v216
  %278 = vmatprep.subr.bf16.mxu0 %v221
  %279 = vmatpush1.bf16.msra.mxu0 %v220
  %280 = vmatprep.subr.bf16.mxu0 %v225
  %281 = vmatpush1.bf16.msra.mxu0 %v224
  %282 = vmatprep.subr.bf16.mxu0 %v229
  %283 = vmatpush1.bf16.msra.mxu0 %v228
  %284 = vmatprep.subr.bf16.mxu0 %v233
  %285 = vmatpush1.bf16.msra.mxu0 %v232
  %286 = vmatprep.subr.bf16.mxu0 %v237
  %287 = vmatpush1.bf16.msra.mxu0 %v236
  %288 = vmatprep.subr.bf16.mxu0 0
  %289 = vmatpush1.bf16.msra.mxu0 0
  %290 = vmatprep.subr.bf16.mxu0 0
  %291 = vmatpush1.bf16.msra.mxu0 0
  %292 = vmatprep.subr.bf16.mxu0 0
  %293 = vmatpush1.bf16.msra.mxu0 0
  %294 = vmatprep.subr.bf16.mxu0 0
  %295 = vmatpush1.bf16.msra.mxu0 0
  %296 = vmatprep.subr.bf16.mxu0 0
  %297 = vmatpush1.bf16.msra.mxu0 0
  %298 = vmatprep.subr.bf16.mxu0 0
  %299 = vmatpush1.bf16.msra.mxu0 0
  %300 = vmatprep.subr.bf16.mxu0 0
  %301 = vmatpush1.bf16.msra.mxu0 0
  %302 = vmatprep.subr.bf16.mxu0 0
  %303 = vmatpush1.bf16.msra.mxu0 0
  %304 = vmatprep.mubr.bf16.mxu0 0
  %305 = vmatmul.mubr.bf16.gmra.mrb[0].mxu0 %v111
  %v306 = vpop.f32.mrb[0].mxu0
  %v307 = vadd.f32 0.0, %v306
  %v308 = vpop.f32.mrb[0].mxu0
  %v309 = vadd.f32 0.0, %v308
  %v310 = vpop.f32.mrb[0].mxu0
  %v311 = vpop.f32.mrb[0].mxu0
  %312 = vdwg.mxu0
  %313 = vmatprep.subr.bf16.mxu0 %v211
  %314 = vmatpush1.bf16.msra.mxu0 %v210
  %315 = vmatprep.subr.bf16.mxu0 %v215
  %316 = vmatpush1.bf16.msra.mxu0 %v214
  %317 = vmatprep.subr.bf16.mxu0 %v219
  %318 = vmatpush1.bf16.msra.mxu0 %v218
  %319 = vmatprep.subr.bf16.mxu0 %v223
  %320 = vmatpush1.bf16.msra.mxu0 %v222
  %321 = vmatprep.subr.bf16.mxu0 %v227
  %322 = vmatpush1.bf16.msra.mxu0 %v226
  %323 = vmatprep.subr.bf16.mxu0 %v231
  %324 = vmatpush1.bf16.msra.mxu0 %v230
  %325 = vmatprep.subr.bf16.mxu0 %v235
  %326 = vmatpush1.bf16.msra.mxu0 %v234
  %327 = vmatprep.subr.bf16.mxu0 %v239
  %328 = vmatpush1.bf16.msra.mxu0 %v238
  %329 = vmatprep.subr.bf16.mxu0 0
  %330 = vmatpush1.bf16.msra.mxu0 0
  %331 = vmatprep.subr.bf16.mxu0 0
  %332 = vmatpush1.bf16.msra.mxu0 0
  %333 = vmatprep.subr.bf16.mxu0 0
  %334 = vmatpush1.bf16.msra.mxu0 0
  %335 = vmatprep.subr.bf16.mxu0 0
  %336 = vmatpush1.bf16.msra.mxu0 0
  %337 = vmatprep.subr.bf16.mxu0 0
  %338 = vmatpush1.bf16.msra.mxu0 0
  %339 = vmatprep.subr.bf16.mxu0 0
  %340 = vmatpush1.bf16.msra.mxu0 0
  %341 = vmatprep.subr.bf16.mxu0 0
  %342 = vmatpush1.bf16.msra.mxu0 0
  %343 = vmatprep.subr.bf16.mxu0 0
  %344 = vmatpush1.bf16.msra.mxu0 0
  %345 = vmatprep.mubr.bf16.mxu0 0
  %346 = vmatmul.mubr.bf16.gmra.mrb[0].mxu0 %v111
  %v347 = vpop.f32.mrb[0].mxu0
  %v348 = vadd.f32 0.0, %v347
  %v349 = vpop.f32.mrb[0].mxu0
  %v350 = vadd.f32 0.0, %v349
  %v351 = vpop.f32.mrb[0].mxu0
  %v352 = vpop.f32.mrb[0].mxu0
  %353 = vdwg.mxu0
  %v358 = vrot.slane %v307, 1
  %v359 = vrot.slane %v309, 1
  %v360 = vrot.slane %v348, 1
  %v361 = vrot.slane %v350, 1
  %v362 = vrot.slane %v307, 2
  %v363 = vrot.slane %v309, 2
  %v364 = vrot.slane %v348, 2
  %v365 = vrot.slane %v350, 2
  %v366 = vrot.slane %v307, 3
  %v367 = vrot.slane %v309, 3
  %v368 = vrot.slane %v348, 3
  %v369 = vrot.slane %v350, 3
  %v370 = vrot.slane %v307, 4
  %v371 = vrot.slane %v309, 4
  %v372 = vrot.slane %v348, 4
  %v373 = vrot.slane %v350, 4
  %v374 = vrot.slane %v307, 5
  %v375 = vrot.slane %v309, 5
  %v376 = vrot.slane %v348, 5
  %v377 = vrot.slane %v350, 5
  %v378 = vrot.slane %v307, 6
  %v379 = vrot.slane %v309, 6
  %v380 = vrot.slane %v348, 6
  %v381 = vrot.slane %v350, 6
  %v382 = vrot.slane %v307, 7
  %v383 = vrot.slane %v309, 7
  %v384 = vrot.slane %v348, 7
  %v385 = vrot.slane %v350, 7
  %v418 = vadd.f32 %v79, %v307
  %v419 = vadd.f32 %v80, %v309
  %v420 = vadd.f32 %v81, %v348
  %v421 = vadd.f32 %v82, %v350
  %v422 = vadd.f32 %v83, %v358
  %v423 = vadd.f32 %v84, %v359
  %v424 = vadd.f32 %v85, %v360
  %v425 = vadd.f32 %v86, %v361
  %v426 = vadd.f32 %v87, %v362
  %v427 = vadd.f32 %v88, %v363
  %v428 = vadd.f32 %v89, %v364
  %v429 = vadd.f32 %v90, %v365
  %v430 = vadd.f32 %v91, %v366
  %v431 = vadd.f32 %v92, %v367
  %v432 = vadd.f32 %v93, %v368
  %v433 = vadd.f32 %v94, %v369
  %v434 = vadd.f32 %v95, %v370
  %v435 = vadd.f32 %v96, %v371
  %v436 = vadd.f32 %v97, %v372
  %v437 = vadd.f32 %v98, %v373
  %v438 = vadd.f32 %v99, %v374
  %v439 = vadd.f32 %v100, %v375
  %v440 = vadd.f32 %v101, %v376
  %v441 = vadd.f32 %v102, %v377
  %v442 = vadd.f32 %v103, %v378
  %v443 = vadd.f32 %v104, %v379
  %v444 = vadd.f32 %v105, %v380
  %v445 = vadd.f32 %v106, %v381
  %v446 = vadd.f32 %v107, %v382
  %v447 = vadd.f32 %v108, %v383
  %v448 = vadd.f32 %v109, %v384
  %v449 = vadd.f32 %v110, %v385
  %v450 = vxor.u32 %v418, 2147483648
  %v451 = vxor.u32 %v422, 2147483648
  %v452 = vxor.u32 %v426, 2147483648
  %v453 = vxor.u32 %v430, 2147483648
  %v454 = vxor.u32 %v434, 2147483648
  %v455 = vxor.u32 %v438, 2147483648
  %v456 = vxor.u32 %v442, 2147483648
  %v457 = vxor.u32 %v446, 2147483648
  %v458 = vmul.f32 %v450, 1.442695
  %v459 = vpow.pop %v458
  %v460 = vmul.f32 %v451, 1.442695
  %v461 = vpow.pop %v460
  %v462 = vmul.f32 %v452, 1.442695
  %v463 = vpow.pop %v462
  %v464 = vmul.f32 %v453, 1.442695
  %v465 = vpow.pop %v464
  %v466 = vmul.f32 %v454, 1.442695
  %v467 = vpow.pop %v466
  %v468 = vmul.f32 %v455, 1.442695
  %v469 = vpow.pop %v468
  %v470 = vmul.f32 %v456, 1.442695
  %v471 = vpow.pop %v470
  %v472 = vmul.f32 %v457, 1.442695
  %v473 = vpow.pop %v472
  %v474 = vadd.f32 %v459, 1.0
  %v475 = vadd.f32 %v461, 1.0
  %v476 = vadd.f32 %v463, 1.0
  %v477 = vadd.f32 %v465, 1.0
  %v478 = vadd.f32 %v467, 1.0
  %v479 = vadd.f32 %v469, 1.0
  %v480 = vadd.f32 %v471, 1.0
  %v481 = vadd.f32 %v473, 1.0
  %v482 = vrcp.pop %v474
  %v483 = vmul.f32 1.0, %v482
  %v484 = vrcp.pop %v475
  %v485 = vmul.f32 1.0, %v484
  %v486 = vrcp.pop %v476
  %v487 = vmul.f32 1.0, %v486
  %v488 = vrcp.pop %v477
  %v489 = vmul.f32 1.0, %v488
  %v490 = vrcp.pop %v478
  %v491 = vmul.f32 1.0, %v490
  %v492 = vrcp.pop %v479
  %v493 = vmul.f32 1.0, %v492
  %v494 = vrcp.pop %v480
  %v495 = vmul.f32 1.0, %v494
  %v496 = vrcp.pop %v481
  %v497 = vmul.f32 1.0, %v496
  %v498 = vxor.u32 %v419, 2147483648
  %v499 = vxor.u32 %v423, 2147483648
  %v500 = vxor.u32 %v427, 2147483648
  %v501 = vxor.u32 %v431, 2147483648
  %v502 = vxor.u32 %v435, 2147483648
  %v503 = vxor.u32 %v439, 2147483648
  %v504 = vxor.u32 %v443, 2147483648
  %v505 = vxor.u32 %v447, 2147483648
  %v506 = vmul.f32 %v498, 1.442695
  %v507 = vpow.pop %v506
  %v508 = vmul.f32 %v499, 1.442695
  %v509 = vpow.pop %v508
  %v510 = vmul.f32 %v500, 1.442695
  %v511 = vpow.pop %v510
  %v512 = vmul.f32 %v501, 1.442695
  %v513 = vpow.pop %v512
  %v514 = vmul.f32 %v502, 1.442695
  %v515 = vpow.pop %v514
  %v516 = vmul.f32 %v503, 1.442695
  %v517 = vpow.pop %v516
  %v518 = vmul.f32 %v504, 1.442695
  %v519 = vpow.pop %v518
  %v520 = vmul.f32 %v505, 1.442695
  %v521 = vpow.pop %v520
  %v522 = vadd.f32 %v507, 1.0
  %v523 = vadd.f32 %v509, 1.0
  %v524 = vadd.f32 %v511, 1.0
  %v525 = vadd.f32 %v513, 1.0
  %v526 = vadd.f32 %v515, 1.0
  %v527 = vadd.f32 %v517, 1.0
  %v528 = vadd.f32 %v519, 1.0
  %v529 = vadd.f32 %v521, 1.0
  %v530 = vrcp.pop %v522
  %v531 = vmul.f32 1.0, %v530
  %v532 = vrcp.pop %v523
  %v533 = vmul.f32 1.0, %v532
  %v534 = vrcp.pop %v524
  %v535 = vmul.f32 1.0, %v534
  %v536 = vrcp.pop %v525
  %v537 = vmul.f32 1.0, %v536
  %v538 = vrcp.pop %v526
  %v539 = vmul.f32 1.0, %v538
  %v540 = vrcp.pop %v527
  %v541 = vmul.f32 1.0, %v540
  %v542 = vrcp.pop %v528
  %v543 = vmul.f32 1.0, %v542
  %v544 = vrcp.pop %v529
  %v545 = vmul.f32 1.0, %v544
  %v546 = vtanh.pop %v420
  %v547 = vtanh.pop %v424
  %v548 = vtanh.pop %v428
  %v549 = vtanh.pop %v432
  %v550 = vtanh.pop %v436
  %v551 = vtanh.pop %v440
  %v552 = vtanh.pop %v444
  %v553 = vtanh.pop %v448
  %v554 = vxor.u32 %v421, 2147483648
  %v555 = vxor.u32 %v425, 2147483648
  %v556 = vxor.u32 %v429, 2147483648
  %v557 = vxor.u32 %v433, 2147483648
  %v558 = vxor.u32 %v437, 2147483648
  %v559 = vxor.u32 %v441, 2147483648
  %v560 = vxor.u32 %v445, 2147483648
  %v561 = vxor.u32 %v449, 2147483648
  %v562 = vmul.f32 %v554, 1.442695
  %v563 = vpow.pop %v562
  %v564 = vmul.f32 %v555, 1.442695
  %v565 = vpow.pop %v564
  %v566 = vmul.f32 %v556, 1.442695
  %v567 = vpow.pop %v566
  %v568 = vmul.f32 %v557, 1.442695
  %v569 = vpow.pop %v568
  %v570 = vmul.f32 %v558, 1.442695
  %v571 = vpow.pop %v570
  %v572 = vmul.f32 %v559, 1.442695
  %v573 = vpow.pop %v572
  %v574 = vmul.f32 %v560, 1.442695
  %v575 = vpow.pop %v574
  %v576 = vmul.f32 %v561, 1.442695
  %v577 = vpow.pop %v576
  %v578 = vadd.f32 %v563, 1.0
  %v579 = vadd.f32 %v565, 1.0
  %v580 = vadd.f32 %v567, 1.0
  %v581 = vadd.f32 %v569, 1.0
  %v582 = vadd.f32 %v571, 1.0
  %v583 = vadd.f32 %v573, 1.0
  %v584 = vadd.f32 %v575, 1.0
  %v585 = vadd.f32 %v577, 1.0
  %v586 = vrcp.pop %v578
  %v587 = vmul.f32 1.0, %v586
  %v588 = vrcp.pop %v579
  %v589 = vmul.f32 1.0, %v588
  %v590 = vrcp.pop %v580
  %v591 = vmul.f32 1.0, %v590
  %v592 = vrcp.pop %v581
  %v593 = vmul.f32 1.0, %v592
  %v594 = vrcp.pop %v582
  %v595 = vmul.f32 1.0, %v594
  %v596 = vrcp.pop %v583
  %v597 = vmul.f32 1.0, %v596
  %v598 = vrcp.pop %v584
  %v599 = vmul.f32 1.0, %v598
  %v600 = vrcp.pop %v585
  %v601 = vmul.f32 1.0, %v600
  %v603 = vrot.slane %v62, 1
  %v604 = vrot.slane %v62, 2
  %v605 = vrot.slane %v62, 3
  %v606 = vrot.slane %v62, 4
  %v607 = vrot.slane %v62, 5
  %v608 = vrot.slane %v62, 6
  %v609 = vrot.slane %v62, 7
  %v618 = vmul.f32 %v531, %v62
  %v619 = vmul.f32 %v533, %v603
  %v620 = vmul.f32 %v535, %v604
  %v621 = vmul.f32 %v537, %v605
  %v622 = vmul.f32 %v539, %v606
  %v623 = vmul.f32 %v541, %v607
  %v624 = vmul.f32 %v543, %v608
  %v625 = vmul.f32 %v545, %v609
  %v626 = vmul.f32 %v483, %v546
  %v627 = vmul.f32 %v485, %v547
  %v628 = vmul.f32 %v487, %v548
  %v629 = vmul.f32 %v489, %v549
  %v630 = vmul.f32 %v491, %v550
  %v631 = vmul.f32 %v493, %v551
  %v632 = vmul.f32 %v495, %v552
  %v633 = vmul.f32 %v497, %v553
  %v634 = vadd.f32 %v618, %v626
  %v635 = vadd.f32 %v619, %v627
  %v636 = vadd.f32 %v620, %v628
  %v637 = vadd.f32 %v621, %v629
  %v638 = vadd.f32 %v622, %v630
  %v639 = vadd.f32 %v623, %v631
  %v640 = vadd.f32 %v624, %v632
  %v641 = vadd.f32 %v625, %v633
  %v642 = vtanh.pop %v634
  %v643 = vtanh.pop %v635
  %v644 = vtanh.pop %v636
  %v645 = vtanh.pop %v637
  %v646 = vtanh.pop %v638
  %v647 = vtanh.pop %v639
  %v648 = vtanh.pop %v640
  %v649 = vtanh.pop %v641
  %v650 = vmul.f32 %v587, %v642
  %v651 = vmul.f32 %v589, %v643
  %v652 = vmul.f32 %v591, %v644
  %v653 = vmul.f32 %v593, %v645
  %v654 = vmul.f32 %v595, %v646
  %v655 = vmul.f32 %v597, %v647
  %v656 = vmul.f32 %v599, %v648
  %v657 = vmul.f32 %v601, %v649
  %v658 = vpack.c.bf16 %v650, %v650
  %v659 = vpack.c.bf16 %v651, %v651
  %v660 = vpack.c.bf16 %v652, %v652
  %v661 = vpack.c.bf16 %v653, %v653
  %v662 = vpack.c.bf16 %v654, %v654
  %v663 = vpack.c.bf16 %v655, %v655
  %v664 = vpack.c.bf16 %v656, %v656
  %v665 = vpack.c.bf16 %v657, %v657
  %vm666 = vcmask 1040384
  %vm667 = vsmask.f32 256
  %vm668 = vmand %vm666, %vm667
  %v669 = vld [vmem:[%s4] sm:$0x1]
  %v670 = vsel %vm668, %v658, %v669
  %671 = vst [vmem:[%s4] sm:$0x1] %v670
  %v672 = vld [vmem:[%s4 + $0x4] sm:$0x1]
  %v673 = vsel %vm668, %v659, %v672
  %674 = vst [vmem:[%s4 + $0x4] sm:$0x1] %v673
  %v675 = vld [vmem:[%s4 + $0x8] sm:$0x1]
  %v676 = vsel %vm668, %v660, %v675
  %677 = vst [vmem:[%s4 + $0x8] sm:$0x1] %v676
  %v678 = vld [vmem:[%s4 + $0xc] sm:$0x1]
  %v679 = vsel %vm668, %v661, %v678
  %680 = vst [vmem:[%s4 + $0xc] sm:$0x1] %v679
  %v681 = vld [vmem:[%s4 + $0x10] sm:$0x1]
  %v682 = vsel %vm668, %v662, %v681
  %683 = vst [vmem:[%s4 + $0x10] sm:$0x1] %v682
  %v684 = vld [vmem:[%s4 + $0x14] sm:$0x1]
  %v685 = vsel %vm668, %v663, %v684
  %686 = vst [vmem:[%s4 + $0x14] sm:$0x1] %v685
  %v687 = vld [vmem:[%s4 + $0x18] sm:$0x1]
  %v688 = vsel %vm668, %v664, %v687
  %689 = vst [vmem:[%s4 + $0x18] sm:$0x1] %v688
  %v690 = vld [vmem:[%s4 + $0x1c] sm:$0x1]
  %v691 = vsel %vm668, %v665, %v690
  %692 = vst [vmem:[%s4 + $0x1c] sm:$0x1] %v691
  %v693 = vld [vmem:[%s0] sm:$0x11]
  %v694 = vld [vmem:[%s0 + $0x8] sm:$0x11]
  %v695 = vld [vmem:[%s0 + $0x10] sm:$0x11]
  %v696 = vld [vmem:[%s0 + $0x18] sm:$0x11]
  %v697 = vld [vmem:[%s0 + $0x20] sm:$0x11]
  %v698 = vld [vmem:[%s0 + $0x28] sm:$0x11]
  %v699 = vld [vmem:[%s0 + $0x30] sm:$0x11]
  %v700 = vld [vmem:[%s0 + $0x38] sm:$0x11]
  %v701 = vld [vmem:[%s0 + $0x40] sm:$0x11]
  %v702 = vld [vmem:[%s0 + $0x48] sm:$0x11]
  %v703 = vld [vmem:[%s0 + $0x50] sm:$0x11]
  %v704 = vld [vmem:[%s0 + $0x58] sm:$0x11]
  %v705 = vld [vmem:[%s0 + $0x60] sm:$0x11]
  %v706 = vld [vmem:[%s0 + $0x68] sm:$0x11]
  %v707 = vld [vmem:[%s0 + $0x70] sm:$0x11]
  %v708 = vld [vmem:[%s0 + $0x78] sm:$0x11]
  %v709 = vunpack.c.l.bf16 %v693
  %v710 = vunpack.c.h.bf16 %v693
  %v711 = vunpack.c.l.bf16 %v694
  %v712 = vunpack.c.h.bf16 %v694
  %v713 = vunpack.c.l.bf16 %v695
  %v714 = vunpack.c.h.bf16 %v695
  %v715 = vunpack.c.l.bf16 %v696
  %v716 = vunpack.c.h.bf16 %v696
  %v717 = vunpack.c.l.bf16 %v697
  %v718 = vunpack.c.h.bf16 %v697
  %v719 = vunpack.c.l.bf16 %v698
  %v720 = vunpack.c.h.bf16 %v698
  %v721 = vunpack.c.l.bf16 %v699
  %v722 = vunpack.c.h.bf16 %v699
  %v723 = vunpack.c.l.bf16 %v700
  %v724 = vunpack.c.h.bf16 %v700
  %v725 = vunpack.c.l.bf16 %v701
  %v726 = vunpack.c.h.bf16 %v701
  %v727 = vunpack.c.l.bf16 %v702
  %v728 = vunpack.c.h.bf16 %v702
  %v729 = vunpack.c.l.bf16 %v703
  %v730 = vunpack.c.h.bf16 %v703
  %v731 = vunpack.c.l.bf16 %v704
  %v732 = vunpack.c.h.bf16 %v704
  %v733 = vunpack.c.l.bf16 %v705
  %v734 = vunpack.c.h.bf16 %v705
  %v735 = vunpack.c.l.bf16 %v706
  %v736 = vunpack.c.h.bf16 %v706
  %v737 = vunpack.c.l.bf16 %v707
  %v738 = vunpack.c.h.bf16 %v707
  %v739 = vunpack.c.l.bf16 %v708
  %v740 = vunpack.c.h.bf16 %v708
  %v749 = vunpack.c.l.b16 %v658
  %v750 = vunpack.c.l.b16 %v659
  %v751 = vunpack.c.l.b16 %v660
  %v752 = vunpack.c.l.b16 %v661
  %v753 = vunpack.c.l.b16 %v662
  %v754 = vunpack.c.l.b16 %v663
  %v755 = vunpack.c.l.b16 %v664
  %v756 = vunpack.c.l.b16 %v665
  %v757 = vrot.slane %v750, 7
  %vm758 = vcmask 1041409
  %v759 = vsel %vm758, %v757, %v749
  %v760 = vrot.slane %v751, 6
  %vm761 = vcmask 1042434
  %v762 = vsel %vm761, %v760, %v759
  %v763 = vrot.slane %v752, 5
  %vm764 = vcmask 1043459
  %v765 = vsel %vm764, %v763, %v762
  %v766 = vrot.slane %v753, 4
  %vm767 = vcmask 1044484
  %v768 = vsel %vm767, %v766, %v765
  %v769 = vrot.slane %v754, 3
  %vm770 = vcmask 1045509
  %v771 = vsel %vm770, %v769, %v768
  %v772 = vrot.slane %v755, 2
  %vm773 = vcmask 1046534
  %v774 = vsel %vm773, %v772, %v771
  %v775 = vrot.slane %v756, 1
  %vm776 = vcmask 1047559
  %v777 = vsel %vm776, %v775, %v774
  %v778 = vpack.c.b16 %v777, %v777
  %780 = vmatprep.subr.bf16.mxu0 %v209
  %781 = vmatpush1.bf16.msra.mxu0 %v208
  %782 = vmatprep.subr.bf16.mxu0 %v213
  %783 = vmatpush1.bf16.msra.mxu0 %v212
  %784 = vmatprep.subr.bf16.mxu0 %v217
  %785 = vmatpush1.bf16.msra.mxu0 %v216
  %786 = vmatprep.subr.bf16.mxu0 %v221
  %787 = vmatpush1.bf16.msra.mxu0 %v220
  %788 = vmatprep.subr.bf16.mxu0 %v225
  %789 = vmatpush1.bf16.msra.mxu0 %v224
  %790 = vmatprep.subr.bf16.mxu0 %v229
  %791 = vmatpush1.bf16.msra.mxu0 %v228
  %792 = vmatprep.subr.bf16.mxu0 %v233
  %793 = vmatpush1.bf16.msra.mxu0 %v232
  %794 = vmatprep.subr.bf16.mxu0 %v237
  %795 = vmatpush1.bf16.msra.mxu0 %v236
  %796 = vmatprep.subr.bf16.mxu0 0
  %797 = vmatpush1.bf16.msra.mxu0 0
  %798 = vmatprep.subr.bf16.mxu0 0
  %799 = vmatpush1.bf16.msra.mxu0 0
  %800 = vmatprep.subr.bf16.mxu0 0
  %801 = vmatpush1.bf16.msra.mxu0 0
  %802 = vmatprep.subr.bf16.mxu0 0
  %803 = vmatpush1.bf16.msra.mxu0 0
  %804 = vmatprep.subr.bf16.mxu0 0
  %805 = vmatpush1.bf16.msra.mxu0 0
  %806 = vmatprep.subr.bf16.mxu0 0
  %807 = vmatpush1.bf16.msra.mxu0 0
  %808 = vmatprep.subr.bf16.mxu0 0
  %809 = vmatpush1.bf16.msra.mxu0 0
  %810 = vmatprep.subr.bf16.mxu0 0
  %811 = vmatpush1.bf16.msra.mxu0 0
  %812 = vmatprep.mubr.bf16.mxu0 0
  %813 = vmatmul.mubr.bf16.gmra.mrb[0].mxu0 %v778
  %v814 = vpop.f32.mrb[0].mxu0
  %v815 = vadd.f32 0.0, %v814
  %v816 = vpop.f32.mrb[0].mxu0
  %v817 = vadd.f32 0.0, %v816
  %v818 = vpop.f32.mrb[0].mxu0
  %v819 = vpop.f32.mrb[0].mxu0
  %820 = vdwg.mxu0
  %821 = vmatprep.subr.bf16.mxu0 %v211
  %822 = vmatpush1.bf16.msra.mxu0 %v210
  %823 = vmatprep.subr.bf16.mxu0 %v215
  %824 = vmatpush1.bf16.msra.mxu0 %v214
  %825 = vmatprep.subr.bf16.mxu0 %v219
  %826 = vmatpush1.bf16.msra.mxu0 %v218
  %827 = vmatprep.subr.bf16.mxu0 %v223
  %828 = vmatpush1.bf16.msra.mxu0 %v222
  %829 = vmatprep.subr.bf16.mxu0 %v227
  %830 = vmatpush1.bf16.msra.mxu0 %v226
  %831 = vmatprep.subr.bf16.mxu0 %v231
  %832 = vmatpush1.bf16.msra.mxu0 %v230
  %833 = vmatprep.subr.bf16.mxu0 %v235
  %834 = vmatpush1.bf16.msra.mxu0 %v234
  %835 = vmatprep.subr.bf16.mxu0 %v239
  %836 = vmatpush1.bf16.msra.mxu0 %v238
  %837 = vmatprep.subr.bf16.mxu0 0
  %838 = vmatpush1.bf16.msra.mxu0 0
  %839 = vmatprep.subr.bf16.mxu0 0
  %840 = vmatpush1.bf16.msra.mxu0 0
  %841 = vmatprep.subr.bf16.mxu0 0
  %842 = vmatpush1.bf16.msra.mxu0 0
  %843 = vmatprep.subr.bf16.mxu0 0
  %844 = vmatpush1.bf16.msra.mxu0 0
  %845 = vmatprep.subr.bf16.mxu0 0
  %846 = vmatpush1.bf16.msra.mxu0 0
  %847 = vmatprep.subr.bf16.mxu0 0
  %848 = vmatpush1.bf16.msra.mxu0 0
  %849 = vmatprep.subr.bf16.mxu0 0
  %850 = vmatpush1.bf16.msra.mxu0 0
  %851 = vmatprep.subr.bf16.mxu0 0
  %852 = vmatpush1.bf16.msra.mxu0 0
  %853 = vmatprep.mubr.bf16.mxu0 0
  %854 = vmatmul.mubr.bf16.gmra.mrb[0].mxu0 %v778
  %v855 = vpop.f32.mrb[0].mxu0
  %v856 = vadd.f32 0.0, %v855
  %v857 = vpop.f32.mrb[0].mxu0
  %v858 = vadd.f32 0.0, %v857
  %v859 = vpop.f32.mrb[0].mxu0
  %v860 = vpop.f32.mrb[0].mxu0
  %861 = vdwg.mxu0
  %v866 = vrot.slane %v815, 7
  %v867 = vrot.slane %v817, 7
  %v868 = vrot.slane %v856, 7
  %v869 = vrot.slane %v858, 7
  %v870 = vrot.slane %v815, 1
  %v871 = vrot.slane %v817, 1
  %v872 = vrot.slane %v856, 1
  %v873 = vrot.slane %v858, 1
  %v874 = vrot.slane %v815, 2
  %v875 = vrot.slane %v817, 2
  %v876 = vrot.slane %v856, 2
  %v877 = vrot.slane %v858, 2
  %v878 = vrot.slane %v815, 3
  %v879 = vrot.slane %v817, 3
  %v880 = vrot.slane %v856, 3
  %v881 = vrot.slane %v858, 3
  %v882 = vrot.slane %v815, 4
  %v883 = vrot.slane %v817, 4
  %v884 = vrot.slane %v856, 4
  %v885 = vrot.slane %v858, 4
  %v886 = vrot.slane %v815, 5
  %v887 = vrot.slane %v817, 5
  %v888 = vrot.slane %v856, 5
  %v889 = vrot.slane %v858, 5
  %v890 = vrot.slane %v815, 6
  %v891 = vrot.slane %v817, 6
  %v892 = vrot.slane %v856, 6
  %v893 = vrot.slane %v858, 6
  %v926 = vadd.f32 %v709, %v866
  %v927 = vadd.f32 %v710, %v867
  %v928 = vadd.f32 %v711, %v868
  %v929 = vadd.f32 %v712, %v869
  %v930 = vadd.f32 %v713, %v815
  %v931 = vadd.f32 %v714, %v817
  %v932 = vadd.f32 %v715, %v856
  %v933 = vadd.f32 %v716, %v858
  %v934 = vadd.f32 %v717, %v870
  %v935 = vadd.f32 %v718, %v871
  %v936 = vadd.f32 %v719, %v872
  %v937 = vadd.f32 %v720, %v873
  %v938 = vadd.f32 %v721, %v874
  %v939 = vadd.f32 %v722, %v875
  %v940 = vadd.f32 %v723, %v876
  %v941 = vadd.f32 %v724, %v877
  %v942 = vadd.f32 %v725, %v878
  %v943 = vadd.f32 %v726, %v879
  %v944 = vadd.f32 %v727, %v880
  %v945 = vadd.f32 %v728, %v881
  %v946 = vadd.f32 %v729, %v882
  %v947 = vadd.f32 %v730, %v883
  %v948 = vadd.f32 %v731, %v884
  %v949 = vadd.f32 %v732, %v885
  %v950 = vadd.f32 %v733, %v886
  %v951 = vadd.f32 %v734, %v887
  %v952 = vadd.f32 %v735, %v888
  %v953 = vadd.f32 %v736, %v889
  %v954 = vadd.f32 %v737, %v890
  %v955 = vadd.f32 %v738, %v891
  %v956 = vadd.f32 %v739, %v892
  %v957 = vadd.f32 %v740, %v893
  %v958 = vxor.u32 %v926, 2147483648
  %v959 = vxor.u32 %v930, 2147483648
  %v960 = vxor.u32 %v934, 2147483648
  %v961 = vxor.u32 %v938, 2147483648
  %v962 = vxor.u32 %v942, 2147483648
  %v963 = vxor.u32 %v946, 2147483648
  %v964 = vxor.u32 %v950, 2147483648
  %v965 = vxor.u32 %v954, 2147483648
  %v966 = vmul.f32 %v958, 1.442695
  %v967 = vpow.pop %v966
  %v968 = vmul.f32 %v959, 1.442695
  %v969 = vpow.pop %v968
  %v970 = vmul.f32 %v960, 1.442695
  %v971 = vpow.pop %v970
  %v972 = vmul.f32 %v961, 1.442695
  %v973 = vpow.pop %v972
  %v974 = vmul.f32 %v962, 1.442695
  %v975 = vpow.pop %v974
  %v976 = vmul.f32 %v963, 1.442695
  %v977 = vpow.pop %v976
  %v978 = vmul.f32 %v964, 1.442695
  %v979 = vpow.pop %v978
  %v980 = vmul.f32 %v965, 1.442695
  %v981 = vpow.pop %v980
  %v982 = vadd.f32 %v967, 1.0
  %v983 = vadd.f32 %v969, 1.0
  %v984 = vadd.f32 %v971, 1.0
  %v985 = vadd.f32 %v973, 1.0
  %v986 = vadd.f32 %v975, 1.0
  %v987 = vadd.f32 %v977, 1.0
  %v988 = vadd.f32 %v979, 1.0
  %v989 = vadd.f32 %v981, 1.0
  %v990 = vrcp.pop %v982
  %v991 = vmul.f32 1.0, %v990
  %v992 = vrcp.pop %v983
  %v993 = vmul.f32 1.0, %v992
  %v994 = vrcp.pop %v984
  %v995 = vmul.f32 1.0, %v994
  %v996 = vrcp.pop %v985
  %v997 = vmul.f32 1.0, %v996
  %v998 = vrcp.pop %v986
  %v999 = vmul.f32 1.0, %v998
  %v1000 = vrcp.pop %v987
  %v1001 = vmul.f32 1.0, %v1000
  %v1002 = vrcp.pop %v988
  %v1003 = vmul.f32 1.0, %v1002
  %v1004 = vrcp.pop %v989
  %v1005 = vmul.f32 1.0, %v1004
  %v1006 = vxor.u32 %v927, 2147483648
  %v1007 = vxor.u32 %v931, 2147483648
  %v1008 = vxor.u32 %v935, 2147483648
  %v1009 = vxor.u32 %v939, 2147483648
  %v1010 = vxor.u32 %v943, 2147483648
  %v1011 = vxor.u32 %v947, 2147483648
  %v1012 = vxor.u32 %v951, 2147483648
  %v1013 = vxor.u32 %v955, 2147483648
  %v1014 = vmul.f32 %v1006, 1.442695
  %v1015 = vpow.pop %v1014
  %v1016 = vmul.f32 %v1007, 1.442695
  %v1017 = vpow.pop %v1016
  %v1018 = vmul.f32 %v1008, 1.442695
  %v1019 = vpow.pop %v1018
  %v1020 = vmul.f32 %v1009, 1.442695
  %v1021 = vpow.pop %v1020
  %v1022 = vmul.f32 %v1010, 1.442695
  %v1023 = vpow.pop %v1022
  %v1024 = vmul.f32 %v1011, 1.442695
  %v1025 = vpow.pop %v1024
  %v1026 = vmul.f32 %v1012, 1.442695
  %v1027 = vpow.pop %v1026
  %v1028 = vmul.f32 %v1013, 1.442695
  %v1029 = vpow.pop %v1028
  %v1030 = vadd.f32 %v1015, 1.0
  %v1031 = vadd.f32 %v1017, 1.0
  %v1032 = vadd.f32 %v1019, 1.0
  %v1033 = vadd.f32 %v1021, 1.0
  %v1034 = vadd.f32 %v1023, 1.0
  %v1035 = vadd.f32 %v1025, 1.0
  %v1036 = vadd.f32 %v1027, 1.0
  %v1037 = vadd.f32 %v1029, 1.0
  %v1038 = vrcp.pop %v1030
  %v1039 = vmul.f32 1.0, %v1038
  %v1040 = vrcp.pop %v1031
  %v1041 = vmul.f32 1.0, %v1040
  %v1042 = vrcp.pop %v1032
  %v1043 = vmul.f32 1.0, %v1042
  %v1044 = vrcp.pop %v1033
  %v1045 = vmul.f32 1.0, %v1044
  %v1046 = vrcp.pop %v1034
  %v1047 = vmul.f32 1.0, %v1046
  %v1048 = vrcp.pop %v1035
  %v1049 = vmul.f32 1.0, %v1048
  %v1050 = vrcp.pop %v1036
  %v1051 = vmul.f32 1.0, %v1050
  %v1052 = vrcp.pop %v1037
  %v1053 = vmul.f32 1.0, %v1052
  %v1054 = vtanh.pop %v928
  %v1055 = vtanh.pop %v932
  %v1056 = vtanh.pop %v936
  %v1057 = vtanh.pop %v940
  %v1058 = vtanh.pop %v944
  %v1059 = vtanh.pop %v948
  %v1060 = vtanh.pop %v952
  %v1061 = vtanh.pop %v956
  %v1062 = vxor.u32 %v929, 2147483648
  %v1063 = vxor.u32 %v933, 2147483648
  %v1064 = vxor.u32 %v937, 2147483648
  %v1065 = vxor.u32 %v941, 2147483648
  %v1066 = vxor.u32 %v945, 2147483648
  %v1067 = vxor.u32 %v949, 2147483648
  %v1068 = vxor.u32 %v953, 2147483648
  %v1069 = vxor.u32 %v957, 2147483648
  %v1070 = vmul.f32 %v1062, 1.442695
  %v1071 = vpow.pop %v1070
  %v1072 = vmul.f32 %v1063, 1.442695
  %v1073 = vpow.pop %v1072
  %v1074 = vmul.f32 %v1064, 1.442695
  %v1075 = vpow.pop %v1074
  %v1076 = vmul.f32 %v1065, 1.442695
  %v1077 = vpow.pop %v1076
  %v1078 = vmul.f32 %v1066, 1.442695
  %v1079 = vpow.pop %v1078
  %v1080 = vmul.f32 %v1067, 1.442695
  %v1081 = vpow.pop %v1080
  %v1082 = vmul.f32 %v1068, 1.442695
  %v1083 = vpow.pop %v1082
  %v1084 = vmul.f32 %v1069, 1.442695
  %v1085 = vpow.pop %v1084
  %v1086 = vadd.f32 %v1071, 1.0
  %v1087 = vadd.f32 %v1073, 1.0
  %v1088 = vadd.f32 %v1075, 1.0
  %v1089 = vadd.f32 %v1077, 1.0
  %v1090 = vadd.f32 %v1079, 1.0
  %v1091 = vadd.f32 %v1081, 1.0
  %v1092 = vadd.f32 %v1083, 1.0
  %v1093 = vadd.f32 %v1085, 1.0
  %v1094 = vrcp.pop %v1086
  %v1095 = vmul.f32 1.0, %v1094
  %v1096 = vrcp.pop %v1087
  %v1097 = vmul.f32 1.0, %v1096
  %v1098 = vrcp.pop %v1088
  %v1099 = vmul.f32 1.0, %v1098
  %v1100 = vrcp.pop %v1089
  %v1101 = vmul.f32 1.0, %v1100
  %v1102 = vrcp.pop %v1090
  %v1103 = vmul.f32 1.0, %v1102
  %v1104 = vrcp.pop %v1091
  %v1105 = vmul.f32 1.0, %v1104
  %v1106 = vrcp.pop %v1092
  %v1107 = vmul.f32 1.0, %v1106
  %v1108 = vrcp.pop %v1093
  %v1109 = vmul.f32 1.0, %v1108
  %v1118 = vrot.slane %v634, 7
  %v1119 = vrot.slane %v635, 7
  %v1120 = vrot.slane %v636, 7
  %v1121 = vrot.slane %v637, 7
  %v1122 = vrot.slane %v638, 7
  %v1123 = vrot.slane %v639, 7
  %v1124 = vrot.slane %v640, 7
  %v1125 = vrot.slane %v641, 7
  %v1134 = vmul.f32 %v1039, %v1118
  %v1135 = vmul.f32 %v1041, %v1119
  %v1136 = vmul.f32 %v1043, %v1120
  %v1137 = vmul.f32 %v1045, %v1121
  %v1138 = vmul.f32 %v1047, %v1122
  %v1139 = vmul.f32 %v1049, %v1123
  %v1140 = vmul.f32 %v1051, %v1124
  %v1141 = vmul.f32 %v1053, %v1125
  %v1142 = vmul.f32 %v991, %v1054
  %v1143 = vmul.f32 %v993, %v1055
  %v1144 = vmul.f32 %v995, %v1056
  %v1145 = vmul.f32 %v997, %v1057
  %v1146 = vmul.f32 %v999, %v1058
  %v1147 = vmul.f32 %v1001, %v1059
  %v1148 = vmul.f32 %v1003, %v1060
  %v1149 = vmul.f32 %v1005, %v1061
  %v1150 = vadd.f32 %v1134, %v1142
  %v1151 = vadd.f32 %v1135, %v1143
  %v1152 = vadd.f32 %v1136, %v1144
  %v1153 = vadd.f32 %v1137, %v1145
  %v1154 = vadd.f32 %v1138, %v1146
  %v1155 = vadd.f32 %v1139, %v1147
  %v1156 = vadd.f32 %v1140, %v1148
  %v1157 = vadd.f32 %v1141, %v1149
  %v1158 = vtanh.pop %v1150
  %v1159 = vtanh.pop %v1151
  %v1160 = vtanh.pop %v1152
  %v1161 = vtanh.pop %v1153
  %v1162 = vtanh.pop %v1154
  %v1163 = vtanh.pop %v1155
  %v1164 = vtanh.pop %v1156
  %v1165 = vtanh.pop %v1157
  %v1166 = vmul.f32 %v1095, %v1158
  %v1167 = vmul.f32 %v1097, %v1159
  %v1168 = vmul.f32 %v1099, %v1160
  %v1169 = vmul.f32 %v1101, %v1161
  %v1170 = vmul.f32 %v1103, %v1162
  %v1171 = vmul.f32 %v1105, %v1163
  %v1172 = vmul.f32 %v1107, %v1164
  %v1173 = vmul.f32 %v1109, %v1165
  %v1174 = vpack.c.bf16 %v1166, %v1166
  %v1175 = vpack.c.bf16 %v1167, %v1167
  %v1176 = vpack.c.bf16 %v1168, %v1168
  %v1177 = vpack.c.bf16 %v1169, %v1169
  %v1178 = vpack.c.bf16 %v1170, %v1170
  %v1179 = vpack.c.bf16 %v1171, %v1171
  %v1180 = vpack.c.bf16 %v1172, %v1172
  %v1181 = vpack.c.bf16 %v1173, %v1173
  %vm1182 = vsmask.f32 7938
  %vm1183 = vmand %vm666, %vm1182
  %v1184 = vld [vmem:[%s4] sm:$0x1]
  %v1185 = vsel %vm1183, %v1174, %v1184
  %1186 = vst [vmem:[%s4] sm:$0x1] %v1185
  %v1187 = vld [vmem:[%s4 + $0x4] sm:$0x1]
  %v1188 = vsel %vm1183, %v1175, %v1187
  %1189 = vst [vmem:[%s4 + $0x4] sm:$0x1] %v1188
  %v1190 = vld [vmem:[%s4 + $0x8] sm:$0x1]
  %v1191 = vsel %vm1183, %v1176, %v1190
  %1192 = vst [vmem:[%s4 + $0x8] sm:$0x1] %v1191
  %v1193 = vld [vmem:[%s4 + $0xc] sm:$0x1]
  %v1194 = vsel %vm1183, %v1177, %v1193
  %1195 = vst [vmem:[%s4 + $0xc] sm:$0x1] %v1194
  %v1196 = vld [vmem:[%s4 + $0x10] sm:$0x1]
  %v1197 = vsel %vm1183, %v1178, %v1196
  %1198 = vst [vmem:[%s4 + $0x10] sm:$0x1] %v1197
  %v1199 = vld [vmem:[%s4 + $0x14] sm:$0x1]
  %v1200 = vsel %vm1183, %v1179, %v1199
  %1201 = vst [vmem:[%s4 + $0x14] sm:$0x1] %v1200
  %v1202 = vld [vmem:[%s4 + $0x18] sm:$0x1]
  %v1203 = vsel %vm1183, %v1180, %v1202
  %1204 = vst [vmem:[%s4 + $0x18] sm:$0x1] %v1203
  %v1205 = vld [vmem:[%s4 + $0x1c] sm:$0x1]
  %v1206 = vsel %vm1183, %v1181, %v1205
  %1207 = vst [vmem:[%s4 + $0x1c] sm:$0x1] %v1206
  %v1208 = vld [vmem:[%s0] sm:$0x22]
  %v1209 = vld [vmem:[%s0 + $0x8] sm:$0x22]
  %v1210 = vld [vmem:[%s0 + $0x10] sm:$0x22]
  %v1211 = vld [vmem:[%s0 + $0x18] sm:$0x22]
  %v1212 = vld [vmem:[%s0 + $0x20] sm:$0x22]
  %v1213 = vld [vmem:[%s0 + $0x28] sm:$0x22]
  %v1214 = vld [vmem:[%s0 + $0x30] sm:$0x22]
  %v1215 = vld [vmem:[%s0 + $0x38] sm:$0x22]
  %v1216 = vld [vmem:[%s0 + $0x40] sm:$0x22]
  %v1217 = vld [vmem:[%s0 + $0x48] sm:$0x22]
  %v1218 = vld [vmem:[%s0 + $0x50] sm:$0x22]
  %v1219 = vld [vmem:[%s0 + $0x58] sm:$0x22]
  %v1220 = vld [vmem:[%s0 + $0x60] sm:$0x22]
  %v1221 = vld [vmem:[%s0 + $0x68] sm:$0x22]
  %v1222 = vld [vmem:[%s0 + $0x70] sm:$0x22]
  %v1223 = vld [vmem:[%s0 + $0x78] sm:$0x22]
  %v1224 = vunpack.c.l.bf16 %v1208
  %v1225 = vunpack.c.h.bf16 %v1208
  %v1226 = vunpack.c.l.bf16 %v1209
  %v1227 = vunpack.c.h.bf16 %v1209
  %v1228 = vunpack.c.l.bf16 %v1210
  %v1229 = vunpack.c.h.bf16 %v1210
  %v1230 = vunpack.c.l.bf16 %v1211
  %v1231 = vunpack.c.h.bf16 %v1211
  %v1232 = vunpack.c.l.bf16 %v1212
  %v1233 = vunpack.c.h.bf16 %v1212
  %v1234 = vunpack.c.l.bf16 %v1213
  %v1235 = vunpack.c.h.bf16 %v1213
  %v1236 = vunpack.c.l.bf16 %v1214
  %v1237 = vunpack.c.h.bf16 %v1214
  %v1238 = vunpack.c.l.bf16 %v1215
  %v1239 = vunpack.c.h.bf16 %v1215
  %v1240 = vunpack.c.l.bf16 %v1216
  %v1241 = vunpack.c.h.bf16 %v1216
  %v1242 = vunpack.c.l.bf16 %v1217
  %v1243 = vunpack.c.h.bf16 %v1217
  %v1244 = vunpack.c.l.bf16 %v1218
  %v1245 = vunpack.c.h.bf16 %v1218
  %v1246 = vunpack.c.l.bf16 %v1219
  %v1247 = vunpack.c.h.bf16 %v1219
  %v1248 = vunpack.c.l.bf16 %v1220
  %v1249 = vunpack.c.h.bf16 %v1220
  %v1250 = vunpack.c.l.bf16 %v1221
  %v1251 = vunpack.c.h.bf16 %v1221
  %v1252 = vunpack.c.l.bf16 %v1222
  %v1253 = vunpack.c.h.bf16 %v1222
  %v1254 = vunpack.c.l.bf16 %v1223
  %v1255 = vunpack.c.h.bf16 %v1223
  %v1264 = vunpack.c.l.b16 %v1174
  %v1265 = vunpack.c.l.b16 %v1175
  %v1266 = vunpack.c.l.b16 %v1176
  %v1267 = vunpack.c.l.b16 %v1177
  %v1268 = vunpack.c.l.b16 %v1178
  %v1269 = vunpack.c.l.b16 %v1179
  %v1270 = vunpack.c.l.b16 %v1180
  %v1271 = vunpack.c.l.b16 %v1181
  %v1272 = vrot.slane %v1264, 1
  %v1273 = vsel %vm758, %v1265, %v1272
  %v1274 = vrot.slane %v1266, 7
  %v1275 = vsel %vm761, %v1274, %v1273
  %v1276 = vrot.slane %v1267, 6
  %v1277 = vsel %vm764, %v1276, %v1275
  %v1278 = vrot.slane %v1268, 5
  %v1279 = vsel %vm767, %v1278, %v1277
  %v1280 = vrot.slane %v1269, 4
  %v1281 = vsel %vm770, %v1280, %v1279
  %v1282 = vrot.slane %v1270, 3
  %v1283 = vsel %vm773, %v1282, %v1281
  %v1284 = vrot.slane %v1271, 2
  %v1285 = vsel %vm776, %v1284, %v1283
  %v1286 = vpack.c.b16 %v1285, %v1285
  %1288 = vmatprep.subr.bf16.mxu0 %v209
  %1289 = vmatpush1.bf16.msra.mxu0 %v208
  %1290 = vmatprep.subr.bf16.mxu0 %v213
  %1291 = vmatpush1.bf16.msra.mxu0 %v212
  %1292 = vmatprep.subr.bf16.mxu0 %v217
  %1293 = vmatpush1.bf16.msra.mxu0 %v216
  %1294 = vmatprep.subr.bf16.mxu0 %v221
  %1295 = vmatpush1.bf16.msra.mxu0 %v220
  %1296 = vmatprep.subr.bf16.mxu0 %v225
  %1297 = vmatpush1.bf16.msra.mxu0 %v224
  %1298 = vmatprep.subr.bf16.mxu0 %v229
  %1299 = vmatpush1.bf16.msra.mxu0 %v228
  %1300 = vmatprep.subr.bf16.mxu0 %v233
  %1301 = vmatpush1.bf16.msra.mxu0 %v232
  %1302 = vmatprep.subr.bf16.mxu0 %v237
  %1303 = vmatpush1.bf16.msra.mxu0 %v236
  %1304 = vmatprep.subr.bf16.mxu0 0
  %1305 = vmatpush1.bf16.msra.mxu0 0
  %1306 = vmatprep.subr.bf16.mxu0 0
  %1307 = vmatpush1.bf16.msra.mxu0 0
  %1308 = vmatprep.subr.bf16.mxu0 0
  %1309 = vmatpush1.bf16.msra.mxu0 0
  %1310 = vmatprep.subr.bf16.mxu0 0
  %1311 = vmatpush1.bf16.msra.mxu0 0
  %1312 = vmatprep.subr.bf16.mxu0 0
  %1313 = vmatpush1.bf16.msra.mxu0 0
  %1314 = vmatprep.subr.bf16.mxu0 0
  %1315 = vmatpush1.bf16.msra.mxu0 0
  %1316 = vmatprep.subr.bf16.mxu0 0
  %1317 = vmatpush1.bf16.msra.mxu0 0
  %1318 = vmatprep.subr.bf16.mxu0 0
  %1319 = vmatpush1.bf16.msra.mxu0 0
  %1320 = vmatprep.mubr.bf16.mxu0 0
  %1321 = vmatmul.mubr.bf16.gmra.mrb[0].mxu0 %v1286
  %v1322 = vpop.f32.mrb[0].mxu0
  %v1323 = vadd.f32 0.0, %v1322
  %v1324 = vpop.f32.mrb[0].mxu0
  %v1325 = vadd.f32 0.0, %v1324
  %v1326 = vpop.f32.mrb[0].mxu0
  %v1327 = vpop.f32.mrb[0].mxu0
  %1328 = vdwg.mxu0
  %1329 = vmatprep.subr.bf16.mxu0 %v211
  %1330 = vmatpush1.bf16.msra.mxu0 %v210
  %1331 = vmatprep.subr.bf16.mxu0 %v215
  %1332 = vmatpush1.bf16.msra.mxu0 %v214
  %1333 = vmatprep.subr.bf16.mxu0 %v219
  %1334 = vmatpush1.bf16.msra.mxu0 %v218
  %1335 = vmatprep.subr.bf16.mxu0 %v223
  %1336 = vmatpush1.bf16.msra.mxu0 %v222
  %1337 = vmatprep.subr.bf16.mxu0 %v227
  %1338 = vmatpush1.bf16.msra.mxu0 %v226
  %1339 = vmatprep.subr.bf16.mxu0 %v231
  %1340 = vmatpush1.bf16.msra.mxu0 %v230
  %1341 = vmatprep.subr.bf16.mxu0 %v235
  %1342 = vmatpush1.bf16.msra.mxu0 %v234
  %1343 = vmatprep.subr.bf16.mxu0 %v239
  %1344 = vmatpush1.bf16.msra.mxu0 %v238
  %1345 = vmatprep.subr.bf16.mxu0 0
  %1346 = vmatpush1.bf16.msra.mxu0 0
  %1347 = vmatprep.subr.bf16.mxu0 0
  %1348 = vmatpush1.bf16.msra.mxu0 0
  %1349 = vmatprep.subr.bf16.mxu0 0
  %1350 = vmatpush1.bf16.msra.mxu0 0
  %1351 = vmatprep.subr.bf16.mxu0 0
  %1352 = vmatpush1.bf16.msra.mxu0 0
  %1353 = vmatprep.subr.bf16.mxu0 0
  %1354 = vmatpush1.bf16.msra.mxu0 0
  %1355 = vmatprep.subr.bf16.mxu0 0
  %1356 = vmatpush1.bf16.msra.mxu0 0
  %1357 = vmatprep.subr.bf16.mxu0 0
  %1358 = vmatpush1.bf16.msra.mxu0 0
  %1359 = vmatprep.subr.bf16.mxu0 0
  %1360 = vmatpush1.bf16.msra.mxu0 0
  %1361 = vmatprep.mubr.bf16.mxu0 0
  %1362 = vmatmul.mubr.bf16.gmra.mrb[0].mxu0 %v1286
  %v1363 = vpop.f32.mrb[0].mxu0
  %v1364 = vadd.f32 0.0, %v1363
  %v1365 = vpop.f32.mrb[0].mxu0
  %v1366 = vadd.f32 0.0, %v1365
  %v1367 = vpop.f32.mrb[0].mxu0
  %v1368 = vpop.f32.mrb[0].mxu0
  %1369 = vdwg.mxu0
  %v1374 = vrot.slane %v1323, 6
  %v1375 = vrot.slane %v1325, 6
  %v1376 = vrot.slane %v1364, 6
  %v1377 = vrot.slane %v1366, 6
  %v1378 = vrot.slane %v1323, 7
  %v1379 = vrot.slane %v1325, 7
  %v1380 = vrot.slane %v1364, 7
  %v1381 = vrot.slane %v1366, 7
  %v1382 = vrot.slane %v1323, 1
  %v1383 = vrot.slane %v1325, 1
  %v1384 = vrot.slane %v1364, 1
  %v1385 = vrot.slane %v1366, 1
  %v1386 = vrot.slane %v1323, 2
  %v1387 = vrot.slane %v1325, 2
  %v1388 = vrot.slane %v1364, 2
  %v1389 = vrot.slane %v1366, 2
  %v1390 = vrot.slane %v1323, 3
  %v1391 = vrot.slane %v1325, 3
  %v1392 = vrot.slane %v1364, 3
  %v1393 = vrot.slane %v1366, 3
  %v1394 = vrot.slane %v1323, 4
  %v1395 = vrot.slane %v1325, 4
  %v1396 = vrot.slane %v1364, 4
  %v1397 = vrot.slane %v1366, 4
  %v1398 = vrot.slane %v1323, 5
  %v1399 = vrot.slane %v1325, 5
  %v1400 = vrot.slane %v1364, 5
  %v1401 = vrot.slane %v1366, 5
  %v1434 = vadd.f32 %v1224, %v1374
  %v1435 = vadd.f32 %v1225, %v1375
  %v1436 = vadd.f32 %v1226, %v1376
  %v1437 = vadd.f32 %v1227, %v1377
  %v1438 = vadd.f32 %v1228, %v1378
  %v1439 = vadd.f32 %v1229, %v1379
  %v1440 = vadd.f32 %v1230, %v1380
  %v1441 = vadd.f32 %v1231, %v1381
  %v1442 = vadd.f32 %v1232, %v1323
  %v1443 = vadd.f32 %v1233, %v1325
  %v1444 = vadd.f32 %v1234, %v1364
  %v1445 = vadd.f32 %v1235, %v1366
  %v1446 = vadd.f32 %v1236, %v1382
  %v1447 = vadd.f32 %v1237, %v1383
  %v1448 = vadd.f32 %v1238, %v1384
  %v1449 = vadd.f32 %v1239, %v1385
  %v1450 = vadd.f32 %v1240, %v1386
  %v1451 = vadd.f32 %v1241, %v1387
  %v1452 = vadd.f32 %v1242, %v1388
  %v1453 = vadd.f32 %v1243, %v1389
  %v1454 = vadd.f32 %v1244, %v1390
  %v1455 = vadd.f32 %v1245, %v1391
  %v1456 = vadd.f32 %v1246, %v1392
  %v1457 = vadd.f32 %v1247, %v1393
  %v1458 = vadd.f32 %v1248, %v1394
  %v1459 = vadd.f32 %v1249, %v1395
  %v1460 = vadd.f32 %v1250, %v1396
  %v1461 = vadd.f32 %v1251, %v1397
  %v1462 = vadd.f32 %v1252, %v1398
  %v1463 = vadd.f32 %v1253, %v1399
  %v1464 = vadd.f32 %v1254, %v1400
  %v1465 = vadd.f32 %v1255, %v1401
  %v1466 = vxor.u32 %v1434, 2147483648
  %v1467 = vxor.u32 %v1438, 2147483648
  %v1468 = vxor.u32 %v1442, 2147483648
  %v1469 = vxor.u32 %v1446, 2147483648
  %v1470 = vxor.u32 %v1450, 2147483648
  %v1471 = vxor.u32 %v1454, 2147483648
  %v1472 = vxor.u32 %v1458, 2147483648
  %v1473 = vxor.u32 %v1462, 2147483648
  %v1474 = vmul.f32 %v1466, 1.442695
  %v1475 = vpow.pop %v1474
  %v1476 = vmul.f32 %v1467, 1.442695
  %v1477 = vpow.pop %v1476
  %v1478 = vmul.f32 %v1468, 1.442695
  %v1479 = vpow.pop %v1478
  %v1480 = vmul.f32 %v1469, 1.442695
  %v1481 = vpow.pop %v1480
  %v1482 = vmul.f32 %v1470, 1.442695
  %v1483 = vpow.pop %v1482
  %v1484 = vmul.f32 %v1471, 1.442695
  %v1485 = vpow.pop %v1484
  %v1486 = vmul.f32 %v1472, 1.442695
  %v1487 = vpow.pop %v1486
  %v1488 = vmul.f32 %v1473, 1.442695
  %v1489 = vpow.pop %v1488
  %v1490 = vadd.f32 %v1475, 1.0
  %v1491 = vadd.f32 %v1477, 1.0
  %v1492 = vadd.f32 %v1479, 1.0
  %v1493 = vadd.f32 %v1481, 1.0
  %v1494 = vadd.f32 %v1483, 1.0
  %v1495 = vadd.f32 %v1485, 1.0
  %v1496 = vadd.f32 %v1487, 1.0
  %v1497 = vadd.f32 %v1489, 1.0
  %v1498 = vrcp.pop %v1490
  %v1499 = vmul.f32 1.0, %v1498
  %v1500 = vrcp.pop %v1491
  %v1501 = vmul.f32 1.0, %v1500
  %v1502 = vrcp.pop %v1492
  %v1503 = vmul.f32 1.0, %v1502
  %v1504 = vrcp.pop %v1493
  %v1505 = vmul.f32 1.0, %v1504
  %v1506 = vrcp.pop %v1494
  %v1507 = vmul.f32 1.0, %v1506
  %v1508 = vrcp.pop %v1495
  %v1509 = vmul.f32 1.0, %v1508
  %v1510 = vrcp.pop %v1496
  %v1511 = vmul.f32 1.0, %v1510
  %v1512 = vrcp.pop %v1497
  %v1513 = vmul.f32 1.0, %v1512
  %v1514 = vxor.u32 %v1435, 2147483648
  %v1515 = vxor.u32 %v1439, 2147483648
  %v1516 = vxor.u32 %v1443, 2147483648
  %v1517 = vxor.u32 %v1447, 2147483648
  %v1518 = vxor.u32 %v1451, 2147483648
  %v1519 = vxor.u32 %v1455, 2147483648
  %v1520 = vxor.u32 %v1459, 2147483648
  %v1521 = vxor.u32 %v1463, 2147483648
  %v1522 = vmul.f32 %v1514, 1.442695
  %v1523 = vpow.pop %v1522
  %v1524 = vmul.f32 %v1515, 1.442695
  %v1525 = vpow.pop %v1524
  %v1526 = vmul.f32 %v1516, 1.442695
  %v1527 = vpow.pop %v1526
  %v1528 = vmul.f32 %v1517, 1.442695
  %v1529 = vpow.pop %v1528
  %v1530 = vmul.f32 %v1518, 1.442695
  %v1531 = vpow.pop %v1530
  %v1532 = vmul.f32 %v1519, 1.442695
  %v1533 = vpow.pop %v1532
  %v1534 = vmul.f32 %v1520, 1.442695
  %v1535 = vpow.pop %v1534
  %v1536 = vmul.f32 %v1521, 1.442695
  %v1537 = vpow.pop %v1536
  %v1538 = vadd.f32 %v1523, 1.0
  %v1539 = vadd.f32 %v1525, 1.0
  %v1540 = vadd.f32 %v1527, 1.0
  %v1541 = vadd.f32 %v1529, 1.0
  %v1542 = vadd.f32 %v1531, 1.0
  %v1543 = vadd.f32 %v1533, 1.0
  %v1544 = vadd.f32 %v1535, 1.0
  %v1545 = vadd.f32 %v1537, 1.0
  %v1546 = vrcp.pop %v1538
  %v1547 = vmul.f32 1.0, %v1546
  %v1548 = vrcp.pop %v1539
  %v1549 = vmul.f32 1.0, %v1548
  %v1550 = vrcp.pop %v1540
  %v1551 = vmul.f32 1.0, %v1550
  %v1552 = vrcp.pop %v1541
  %v1553 = vmul.f32 1.0, %v1552
  %v1554 = vrcp.pop %v1542
  %v1555 = vmul.f32 1.0, %v1554
  %v1556 = vrcp.pop %v1543
  %v1557 = vmul.f32 1.0, %v1556
  %v1558 = vrcp.pop %v1544
  %v1559 = vmul.f32 1.0, %v1558
  %v1560 = vrcp.pop %v1545
  %v1561 = vmul.f32 1.0, %v1560
  %v1562 = vtanh.pop %v1436
  %v1563 = vtanh.pop %v1440
  %v1564 = vtanh.pop %v1444
  %v1565 = vtanh.pop %v1448
  %v1566 = vtanh.pop %v1452
  %v1567 = vtanh.pop %v1456
  %v1568 = vtanh.pop %v1460
  %v1569 = vtanh.pop %v1464
  %v1570 = vxor.u32 %v1437, 2147483648
  %v1571 = vxor.u32 %v1441, 2147483648
  %v1572 = vxor.u32 %v1445, 2147483648
  %v1573 = vxor.u32 %v1449, 2147483648
  %v1574 = vxor.u32 %v1453, 2147483648
  %v1575 = vxor.u32 %v1457, 2147483648
  %v1576 = vxor.u32 %v1461, 2147483648
  %v1577 = vxor.u32 %v1465, 2147483648
  %v1578 = vmul.f32 %v1570, 1.442695
  %v1579 = vpow.pop %v1578
  %v1580 = vmul.f32 %v1571, 1.442695
  %v1581 = vpow.pop %v1580
  %v1582 = vmul.f32 %v1572, 1.442695
  %v1583 = vpow.pop %v1582
  %v1584 = vmul.f32 %v1573, 1.442695
  %v1585 = vpow.pop %v1584
  %v1586 = vmul.f32 %v1574, 1.442695
  %v1587 = vpow.pop %v1586
  %v1588 = vmul.f32 %v1575, 1.442695
  %v1589 = vpow.pop %v1588
  %v1590 = vmul.f32 %v1576, 1.442695
  %v1591 = vpow.pop %v1590
  %v1592 = vmul.f32 %v1577, 1.442695
  %v1593 = vpow.pop %v1592
  %v1594 = vadd.f32 %v1579, 1.0
  %v1595 = vadd.f32 %v1581, 1.0
  %v1596 = vadd.f32 %v1583, 1.0
  %v1597 = vadd.f32 %v1585, 1.0
  %v1598 = vadd.f32 %v1587, 1.0
  %v1599 = vadd.f32 %v1589, 1.0
  %v1600 = vadd.f32 %v1591, 1.0
  %v1601 = vadd.f32 %v1593, 1.0
  %v1602 = vrcp.pop %v1594
  %v1603 = vmul.f32 1.0, %v1602
  %v1604 = vrcp.pop %v1595
  %v1605 = vmul.f32 1.0, %v1604
  %v1606 = vrcp.pop %v1596
  %v1607 = vmul.f32 1.0, %v1606
  %v1608 = vrcp.pop %v1597
  %v1609 = vmul.f32 1.0, %v1608
  %v1610 = vrcp.pop %v1598
  %v1611 = vmul.f32 1.0, %v1610
  %v1612 = vrcp.pop %v1599
  %v1613 = vmul.f32 1.0, %v1612
  %v1614 = vrcp.pop %v1600
  %v1615 = vmul.f32 1.0, %v1614
  %v1616 = vrcp.pop %v1601
  %v1617 = vmul.f32 1.0, %v1616
  %v1626 = vrot.slane %v1150, 7
  %v1627 = vrot.slane %v1151, 7
  %v1628 = vrot.slane %v1152, 7
  %v1629 = vrot.slane %v1153, 7
  %v1630 = vrot.slane %v1154, 7
  %v1631 = vrot.slane %v1155, 7
  %v1632 = vrot.slane %v1156, 7
  %v1633 = vrot.slane %v1157, 7
  %v1642 = vmul.f32 %v1547, %v1626
  %v1643 = vmul.f32 %v1549, %v1627
  %v1644 = vmul.f32 %v1551, %v1628
  %v1645 = vmul.f32 %v1553, %v1629
  %v1646 = vmul.f32 %v1555, %v1630
  %v1647 = vmul.f32 %v1557, %v1631
  %v1648 = vmul.f32 %v1559, %v1632
  %v1649 = vmul.f32 %v1561, %v1633
  %v1650 = vmul.f32 %v1499, %v1562
  %v1651 = vmul.f32 %v1501, %v1563
  %v1652 = vmul.f32 %v1503, %v1564
  %v1653 = vmul.f32 %v1505, %v1565
  %v1654 = vmul.f32 %v1507, %v1566
  %v1655 = vmul.f32 %v1509, %v1567
  %v1656 = vmul.f32 %v1511, %v1568
  %v1657 = vmul.f32 %v1513, %v1569
  %v1658 = vadd.f32 %v1642, %v1650
  %v1659 = vadd.f32 %v1643, %v1651
  %v1660 = vadd.f32 %v1644, %v1652
  %v1661 = vadd.f32 %v1645, %v1653
  %v1662 = vadd.f32 %v1646, %v1654
  %v1663 = vadd.f32 %v1647, %v1655
  %v1664 = vadd.f32 %v1648, %v1656
  %v1665 = vadd.f32 %v1649, %v1657
  %v1666 = vtanh.pop %v1658
  %v1667 = vtanh.pop %v1659
  %v1668 = vtanh.pop %v1660
  %v1669 = vtanh.pop %v1661
  %v1670 = vtanh.pop %v1662
  %v1671 = vtanh.pop %v1663
  %v1672 = vtanh.pop %v1664
  %v1673 = vtanh.pop %v1665
  %v1674 = vmul.f32 %v1603, %v1666
  %v1675 = vmul.f32 %v1605, %v1667
  %v1676 = vmul.f32 %v1607, %v1668
  %v1677 = vmul.f32 %v1609, %v1669
  %v1678 = vmul.f32 %v1611, %v1670
  %v1679 = vmul.f32 %v1613, %v1671
  %v1680 = vmul.f32 %v1615, %v1672
  %v1681 = vmul.f32 %v1617, %v1673
  %v1682 = vpack.c.bf16 %v1674, %v1674
  %v1683 = vpack.c.bf16 %v1675, %v1675
  %v1684 = vpack.c.bf16 %v1676, %v1676
  %v1685 = vpack.c.bf16 %v1677, %v1677
  %v1686 = vpack.c.bf16 %v1678, %v1678
  %v1687 = vpack.c.bf16 %v1679, %v1679
  %v1688 = vpack.c.bf16 %v1680, %v1680
  %v1689 = vpack.c.bf16 %v1681, %v1681
  %vm1690 = vcmask 1041409
  %vm1691 = vsmask.f32 1280
  %vm1692 = vmand %vm1690, %vm1691
  %v1693 = vld [vmem:[%s4] sm:$0x2]
  %v1694 = vsel %vm1692, %v1682, %v1693
  %1695 = vst [vmem:[%s4] sm:$0x2] %v1694
  %v1696 = vld [vmem:[%s4 + $0x4] sm:$0x2]
  %v1697 = vsel %vm1692, %v1683, %v1696
  %1698 = vst [vmem:[%s4 + $0x4] sm:$0x2] %v1697
  %v1699 = vld [vmem:[%s4 + $0x8] sm:$0x2]
  %v1700 = vsel %vm1692, %v1684, %v1699
  %1701 = vst [vmem:[%s4 + $0x8] sm:$0x2] %v1700
  %v1702 = vld [vmem:[%s4 + $0xc] sm:$0x2]
  %v1703 = vsel %vm1692, %v1685, %v1702
  %1704 = vst [vmem:[%s4 + $0xc] sm:$0x2] %v1703
  %v1705 = vld [vmem:[%s4 + $0x10] sm:$0x2]
  %v1706 = vsel %vm1692, %v1686, %v1705
  %1707 = vst [vmem:[%s4 + $0x10] sm:$0x2] %v1706
  %v1708 = vld [vmem:[%s4 + $0x14] sm:$0x2]
  %v1709 = vsel %vm1692, %v1687, %v1708
  %1710 = vst [vmem:[%s4 + $0x14] sm:$0x2] %v1709
  %v1711 = vld [vmem:[%s4 + $0x18] sm:$0x2]
  %v1712 = vsel %vm1692, %v1688, %v1711
  %1713 = vst [vmem:[%s4 + $0x18] sm:$0x2] %v1712
  %v1714 = vld [vmem:[%s4 + $0x1c] sm:$0x2]
  %v1715 = vsel %vm1692, %v1689, %v1714
  %1716 = vst [vmem:[%s4 + $0x1c] sm:$0x2] %v1715
  %v1717 = vld [vmem:[%s0] sm:$0x22]
  %v1718 = vld [vmem:[%s0 + $0x8] sm:$0x22]
  %v1719 = vld [vmem:[%s0 + $0x10] sm:$0x22]
  %v1720 = vld [vmem:[%s0 + $0x18] sm:$0x22]
  %v1721 = vld [vmem:[%s0 + $0x20] sm:$0x22]
  %v1722 = vld [vmem:[%s0 + $0x28] sm:$0x22]
  %v1723 = vld [vmem:[%s0 + $0x30] sm:$0x22]
  %v1724 = vld [vmem:[%s0 + $0x38] sm:$0x22]
  %v1725 = vld [vmem:[%s0 + $0x40] sm:$0x22]
  %v1726 = vld [vmem:[%s0 + $0x48] sm:$0x22]
  %v1727 = vld [vmem:[%s0 + $0x50] sm:$0x22]
  %v1728 = vld [vmem:[%s0 + $0x58] sm:$0x22]
  %v1729 = vld [vmem:[%s0 + $0x60] sm:$0x22]
  %v1730 = vld [vmem:[%s0 + $0x68] sm:$0x22]
  %v1731 = vld [vmem:[%s0 + $0x70] sm:$0x22]
  %v1732 = vld [vmem:[%s0 + $0x78] sm:$0x22]
  %v1733 = vunpack.c.l.bf16 %v1717
  %v1734 = vunpack.c.h.bf16 %v1717
  %v1735 = vunpack.c.l.bf16 %v1718
  %v1736 = vunpack.c.h.bf16 %v1718
  %v1737 = vunpack.c.l.bf16 %v1719
  %v1738 = vunpack.c.h.bf16 %v1719
  %v1739 = vunpack.c.l.bf16 %v1720
  %v1740 = vunpack.c.h.bf16 %v1720
  %v1741 = vunpack.c.l.bf16 %v1721
  %v1742 = vunpack.c.h.bf16 %v1721
  %v1743 = vunpack.c.l.bf16 %v1722
  %v1744 = vunpack.c.h.bf16 %v1722
  %v1745 = vunpack.c.l.bf16 %v1723
  %v1746 = vunpack.c.h.bf16 %v1723
  %v1747 = vunpack.c.l.bf16 %v1724
  %v1748 = vunpack.c.h.bf16 %v1724
  %v1749 = vunpack.c.l.bf16 %v1725
  %v1750 = vunpack.c.h.bf16 %v1725
  %v1751 = vunpack.c.l.bf16 %v1726
  %v1752 = vunpack.c.h.bf16 %v1726
  %v1753 = vunpack.c.l.bf16 %v1727
  %v1754 = vunpack.c.h.bf16 %v1727
  %v1755 = vunpack.c.l.bf16 %v1728
  %v1756 = vunpack.c.h.bf16 %v1728
  %v1757 = vunpack.c.l.bf16 %v1729
  %v1758 = vunpack.c.h.bf16 %v1729
  %v1759 = vunpack.c.l.bf16 %v1730
  %v1760 = vunpack.c.h.bf16 %v1730
  %v1761 = vunpack.c.l.bf16 %v1731
  %v1762 = vunpack.c.h.bf16 %v1731
  %v1763 = vunpack.c.l.bf16 %v1732
  %v1764 = vunpack.c.h.bf16 %v1732
  %v1773 = vunpack.c.l.b16 %v1682
  %v1774 = vunpack.c.l.b16 %v1683
  %v1775 = vunpack.c.l.b16 %v1684
  %v1776 = vunpack.c.l.b16 %v1685
  %v1777 = vunpack.c.l.b16 %v1686
  %v1778 = vunpack.c.l.b16 %v1687
  %v1779 = vunpack.c.l.b16 %v1688
  %v1780 = vunpack.c.l.b16 %v1689
  %v1781 = vrot.slane %v1773, 2
  %v1782 = vrot.slane %v1774, 1
  %v1783 = vsel %vm758, %v1782, %v1781
  %v1784 = vsel %vm761, %v1775, %v1783
  %v1785 = vrot.slane %v1776, 7
  %v1786 = vsel %vm764, %v1785, %v1784
  %v1787 = vrot.slane %v1777, 6
  %v1788 = vsel %vm767, %v1787, %v1786
  %v1789 = vrot.slane %v1778, 5
  %v1790 = vsel %vm770, %v1789, %v1788
  %v1791 = vrot.slane %v1779, 4
  %v1792 = vsel %vm773, %v1791, %v1790
  %v1793 = vrot.slane %v1780, 3
  %v1794 = vsel %vm776, %v1793, %v1792
  %v1795 = vpack.c.b16 %v1794, %v1794
  %1797 = vmatprep.subr.bf16.mxu0 %v209
  %1798 = vmatpush1.bf16.msra.mxu0 %v208
  %1799 = vmatprep.subr.bf16.mxu0 %v213
  %1800 = vmatpush1.bf16.msra.mxu0 %v212
  %1801 = vmatprep.subr.bf16.mxu0 %v217
  %1802 = vmatpush1.bf16.msra.mxu0 %v216
  %1803 = vmatprep.subr.bf16.mxu0 %v221
  %1804 = vmatpush1.bf16.msra.mxu0 %v220
  %1805 = vmatprep.subr.bf16.mxu0 %v225
  %1806 = vmatpush1.bf16.msra.mxu0 %v224
  %1807 = vmatprep.subr.bf16.mxu0 %v229
  %1808 = vmatpush1.bf16.msra.mxu0 %v228
  %1809 = vmatprep.subr.bf16.mxu0 %v233
  %1810 = vmatpush1.bf16.msra.mxu0 %v232
  %1811 = vmatprep.subr.bf16.mxu0 %v237
  %1812 = vmatpush1.bf16.msra.mxu0 %v236
  %1813 = vmatprep.subr.bf16.mxu0 0
  %1814 = vmatpush1.bf16.msra.mxu0 0
  %1815 = vmatprep.subr.bf16.mxu0 0
  %1816 = vmatpush1.bf16.msra.mxu0 0
  %1817 = vmatprep.subr.bf16.mxu0 0
  %1818 = vmatpush1.bf16.msra.mxu0 0
  %1819 = vmatprep.subr.bf16.mxu0 0
  %1820 = vmatpush1.bf16.msra.mxu0 0
  %1821 = vmatprep.subr.bf16.mxu0 0
  %1822 = vmatpush1.bf16.msra.mxu0 0
  %1823 = vmatprep.subr.bf16.mxu0 0
  %1824 = vmatpush1.bf16.msra.mxu0 0
  %1825 = vmatprep.subr.bf16.mxu0 0
  %1826 = vmatpush1.bf16.msra.mxu0 0
  %1827 = vmatprep.subr.bf16.mxu0 0
  %1828 = vmatpush1.bf16.msra.mxu0 0
  %1829 = vmatprep.mubr.bf16.mxu0 0
  %1830 = vmatmul.mubr.bf16.gmra.mrb[0].mxu0 %v1795
  %v1831 = vpop.f32.mrb[0].mxu0
  %v1832 = vadd.f32 0.0, %v1831
  %v1833 = vpop.f32.mrb[0].mxu0
  %v1834 = vadd.f32 0.0, %v1833
  %v1835 = vpop.f32.mrb[0].mxu0
  %v1836 = vpop.f32.mrb[0].mxu0
  %1837 = vdwg.mxu0
  %1838 = vmatprep.subr.bf16.mxu0 %v211
  %1839 = vmatpush1.bf16.msra.mxu0 %v210
  %1840 = vmatprep.subr.bf16.mxu0 %v215
  %1841 = vmatpush1.bf16.msra.mxu0 %v214
  %1842 = vmatprep.subr.bf16.mxu0 %v219
  %1843 = vmatpush1.bf16.msra.mxu0 %v218
  %1844 = vmatprep.subr.bf16.mxu0 %v223
  %1845 = vmatpush1.bf16.msra.mxu0 %v222
  %1846 = vmatprep.subr.bf16.mxu0 %v227
  %1847 = vmatpush1.bf16.msra.mxu0 %v226
  %1848 = vmatprep.subr.bf16.mxu0 %v231
  %1849 = vmatpush1.bf16.msra.mxu0 %v230
  %1850 = vmatprep.subr.bf16.mxu0 %v235
  %1851 = vmatpush1.bf16.msra.mxu0 %v234
  %1852 = vmatprep.subr.bf16.mxu0 %v239
  %1853 = vmatpush1.bf16.msra.mxu0 %v238
  %1854 = vmatprep.subr.bf16.mxu0 0
  %1855 = vmatpush1.bf16.msra.mxu0 0
  %1856 = vmatprep.subr.bf16.mxu0 0
  %1857 = vmatpush1.bf16.msra.mxu0 0
  %1858 = vmatprep.subr.bf16.mxu0 0
  %1859 = vmatpush1.bf16.msra.mxu0 0
  %1860 = vmatprep.subr.bf16.mxu0 0
  %1861 = vmatpush1.bf16.msra.mxu0 0
  %1862 = vmatprep.subr.bf16.mxu0 0
  %1863 = vmatpush1.bf16.msra.mxu0 0
  %1864 = vmatprep.subr.bf16.mxu0 0
  %1865 = vmatpush1.bf16.msra.mxu0 0
  %1866 = vmatprep.subr.bf16.mxu0 0
  %1867 = vmatpush1.bf16.msra.mxu0 0
  %1868 = vmatprep.subr.bf16.mxu0 0
  %1869 = vmatpush1.bf16.msra.mxu0 0
  %1870 = vmatprep.mubr.bf16.mxu0 0
  %1871 = vmatmul.mubr.bf16.gmra.mrb[0].mxu0 %v1795
  %v1872 = vpop.f32.mrb[0].mxu0
  %v1873 = vadd.f32 0.0, %v1872
  %v1874 = vpop.f32.mrb[0].mxu0
  %v1875 = vadd.f32 0.0, %v1874
  %v1876 = vpop.f32.mrb[0].mxu0
  %v1877 = vpop.f32.mrb[0].mxu0
  %1878 = vdwg.mxu0
  %v1883 = vrot.slane %v1832, 5
  %v1884 = vrot.slane %v1834, 5
  %v1885 = vrot.slane %v1873, 5
  %v1886 = vrot.slane %v1875, 5
  %v1887 = vrot.slane %v1832, 6
  %v1888 = vrot.slane %v1834, 6
  %v1889 = vrot.slane %v1873, 6
  %v1890 = vrot.slane %v1875, 6
  %v1891 = vrot.slane %v1832, 7
  %v1892 = vrot.slane %v1834, 7
  %v1893 = vrot.slane %v1873, 7
  %v1894 = vrot.slane %v1875, 7
  %v1895 = vrot.slane %v1832, 1
  %v1896 = vrot.slane %v1834, 1
  %v1897 = vrot.slane %v1873, 1
  %v1898 = vrot.slane %v1875, 1
  %v1899 = vrot.slane %v1832, 2
  %v1900 = vrot.slane %v1834, 2
  %v1901 = vrot.slane %v1873, 2
  %v1902 = vrot.slane %v1875, 2
  %v1903 = vrot.slane %v1832, 3
  %v1904 = vrot.slane %v1834, 3
  %v1905 = vrot.slane %v1873, 3
  %v1906 = vrot.slane %v1875, 3
  %v1907 = vrot.slane %v1832, 4
  %v1908 = vrot.slane %v1834, 4
  %v1909 = vrot.slane %v1873, 4
  %v1910 = vrot.slane %v1875, 4
  %v1943 = vadd.f32 %v1733, %v1883
  %v1944 = vadd.f32 %v1734, %v1884
  %v1945 = vadd.f32 %v1735, %v1885
  %v1946 = vadd.f32 %v1736, %v1886
  %v1947 = vadd.f32 %v1737, %v1887
  %v1948 = vadd.f32 %v1738, %v1888
  %v1949 = vadd.f32 %v1739, %v1889
  %v1950 = vadd.f32 %v1740, %v1890
  %v1951 = vadd.f32 %v1741, %v1891
  %v1952 = vadd.f32 %v1742, %v1892
  %v1953 = vadd.f32 %v1743, %v1893
  %v1954 = vadd.f32 %v1744, %v1894
  %v1955 = vadd.f32 %v1745, %v1832
  %v1956 = vadd.f32 %v1746, %v1834
  %v1957 = vadd.f32 %v1747, %v1873
  %v1958 = vadd.f32 %v1748, %v1875
  %v1959 = vadd.f32 %v1749, %v1895
  %v1960 = vadd.f32 %v1750, %v1896
  %v1961 = vadd.f32 %v1751, %v1897
  %v1962 = vadd.f32 %v1752, %v1898
  %v1963 = vadd.f32 %v1753, %v1899
  %v1964 = vadd.f32 %v1754, %v1900
  %v1965 = vadd.f32 %v1755, %v1901
  %v1966 = vadd.f32 %v1756, %v1902
  %v1967 = vadd.f32 %v1757, %v1903
  %v1968 = vadd.f32 %v1758, %v1904
  %v1969 = vadd.f32 %v1759, %v1905
  %v1970 = vadd.f32 %v1760, %v1906
  %v1971 = vadd.f32 %v1761, %v1907
  %v1972 = vadd.f32 %v1762, %v1908
  %v1973 = vadd.f32 %v1763, %v1909
  %v1974 = vadd.f32 %v1764, %v1910
  %v1975 = vxor.u32 %v1943, 2147483648
  %v1976 = vxor.u32 %v1947, 2147483648
  %v1977 = vxor.u32 %v1951, 2147483648
  %v1978 = vxor.u32 %v1955, 2147483648
  %v1979 = vxor.u32 %v1959, 2147483648
  %v1980 = vxor.u32 %v1963, 2147483648
  %v1981 = vxor.u32 %v1967, 2147483648
  %v1982 = vxor.u32 %v1971, 2147483648
  %v1983 = vmul.f32 %v1975, 1.442695
  %v1984 = vpow.pop %v1983
  %v1985 = vmul.f32 %v1976, 1.442695
  %v1986 = vpow.pop %v1985
  %v1987 = vmul.f32 %v1977, 1.442695
  %v1988 = vpow.pop %v1987
  %v1989 = vmul.f32 %v1978, 1.442695
  %v1990 = vpow.pop %v1989
  %v1991 = vmul.f32 %v1979, 1.442695
  %v1992 = vpow.pop %v1991
  %v1993 = vmul.f32 %v1980, 1.442695
  %v1994 = vpow.pop %v1993
  %v1995 = vmul.f32 %v1981, 1.442695
  %v1996 = vpow.pop %v1995
  %v1997 = vmul.f32 %v1982, 1.442695
  %v1998 = vpow.pop %v1997
  %v1999 = vadd.f32 %v1984, 1.0
  %v2000 = vadd.f32 %v1986, 1.0
  %v2001 = vadd.f32 %v1988, 1.0
  %v2002 = vadd.f32 %v1990, 1.0
  %v2003 = vadd.f32 %v1992, 1.0
  %v2004 = vadd.f32 %v1994, 1.0
  %v2005 = vadd.f32 %v1996, 1.0
  %v2006 = vadd.f32 %v1998, 1.0
  %v2007 = vrcp.pop %v1999
  %v2008 = vmul.f32 1.0, %v2007
  %v2009 = vrcp.pop %v2000
  %v2010 = vmul.f32 1.0, %v2009
  %v2011 = vrcp.pop %v2001
  %v2012 = vmul.f32 1.0, %v2011
  %v2013 = vrcp.pop %v2002
  %v2014 = vmul.f32 1.0, %v2013
  %v2015 = vrcp.pop %v2003
  %v2016 = vmul.f32 1.0, %v2015
  %v2017 = vrcp.pop %v2004
  %v2018 = vmul.f32 1.0, %v2017
  %v2019 = vrcp.pop %v2005
  %v2020 = vmul.f32 1.0, %v2019
  %v2021 = vrcp.pop %v2006
  %v2022 = vmul.f32 1.0, %v2021
  %v2023 = vxor.u32 %v1944, 2147483648
  %v2024 = vxor.u32 %v1948, 2147483648
  %v2025 = vxor.u32 %v1952, 2147483648
  %v2026 = vxor.u32 %v1956, 2147483648
  %v2027 = vxor.u32 %v1960, 2147483648
  %v2028 = vxor.u32 %v1964, 2147483648
  %v2029 = vxor.u32 %v1968, 2147483648
  %v2030 = vxor.u32 %v1972, 2147483648
  %v2031 = vmul.f32 %v2023, 1.442695
  %v2032 = vpow.pop %v2031
  %v2033 = vmul.f32 %v2024, 1.442695
  %v2034 = vpow.pop %v2033
  %v2035 = vmul.f32 %v2025, 1.442695
  %v2036 = vpow.pop %v2035
  %v2037 = vmul.f32 %v2026, 1.442695
  %v2038 = vpow.pop %v2037
  %v2039 = vmul.f32 %v2027, 1.442695
  %v2040 = vpow.pop %v2039
  %v2041 = vmul.f32 %v2028, 1.442695
  %v2042 = vpow.pop %v2041
  %v2043 = vmul.f32 %v2029, 1.442695
  %v2044 = vpow.pop %v2043
  %v2045 = vmul.f32 %v2030, 1.442695
  %v2046 = vpow.pop %v2045
  %v2047 = vadd.f32 %v2032, 1.0
  %v2048 = vadd.f32 %v2034, 1.0
  %v2049 = vadd.f32 %v2036, 1.0
  %v2050 = vadd.f32 %v2038, 1.0
  %v2051 = vadd.f32 %v2040, 1.0
  %v2052 = vadd.f32 %v2042, 1.0
  %v2053 = vadd.f32 %v2044, 1.0
  %v2054 = vadd.f32 %v2046, 1.0
  %v2055 = vrcp.pop %v2047
  %v2056 = vmul.f32 1.0, %v2055
  %v2057 = vrcp.pop %v2048
  %v2058 = vmul.f32 1.0, %v2057
  %v2059 = vrcp.pop %v2049
  %v2060 = vmul.f32 1.0, %v2059
  %v2061 = vrcp.pop %v2050
  %v2062 = vmul.f32 1.0, %v2061
  %v2063 = vrcp.pop %v2051
  %v2064 = vmul.f32 1.0, %v2063
  %v2065 = vrcp.pop %v2052
  %v2066 = vmul.f32 1.0, %v2065
  %v2067 = vrcp.pop %v2053
  %v2068 = vmul.f32 1.0, %v2067
  %v2069 = vrcp.pop %v2054
  %v2070 = vmul.f32 1.0, %v2069
  %v2071 = vtanh.pop %v1945
  %v2072 = vtanh.pop %v1949
  %v2073 = vtanh.pop %v1953
  %v2074 = vtanh.pop %v1957
  %v2075 = vtanh.pop %v1961
  %v2076 = vtanh.pop %v1965
  %v2077 = vtanh.pop %v1969
  %v2078 = vtanh.pop %v1973
  %v2079 = vxor.u32 %v1946, 2147483648
  %v2080 = vxor.u32 %v1950, 2147483648
  %v2081 = vxor.u32 %v1954, 2147483648
  %v2082 = vxor.u32 %v1958, 2147483648
  %v2083 = vxor.u32 %v1962, 2147483648
  %v2084 = vxor.u32 %v1966, 2147483648
  %v2085 = vxor.u32 %v1970, 2147483648
  %v2086 = vxor.u32 %v1974, 2147483648
  %v2087 = vmul.f32 %v2079, 1.442695
  %v2088 = vpow.pop %v2087
  %v2089 = vmul.f32 %v2080, 1.442695
  %v2090 = vpow.pop %v2089
  %v2091 = vmul.f32 %v2081, 1.442695
  %v2092 = vpow.pop %v2091
  %v2093 = vmul.f32 %v2082, 1.442695
  %v2094 = vpow.pop %v2093
  %v2095 = vmul.f32 %v2083, 1.442695
  %v2096 = vpow.pop %v2095
  %v2097 = vmul.f32 %v2084, 1.442695
  %v2098 = vpow.pop %v2097
  %v2099 = vmul.f32 %v2085, 1.442695
  %v2100 = vpow.pop %v2099
  %v2101 = vmul.f32 %v2086, 1.442695
  %v2102 = vpow.pop %v2101
  %v2103 = vadd.f32 %v2088, 1.0
  %v2104 = vadd.f32 %v2090, 1.0
  %v2105 = vadd.f32 %v2092, 1.0
  %v2106 = vadd.f32 %v2094, 1.0
  %v2107 = vadd.f32 %v2096, 1.0
  %v2108 = vadd.f32 %v2098, 1.0
  %v2109 = vadd.f32 %v2100, 1.0
  %v2110 = vadd.f32 %v2102, 1.0
  %v2111 = vrcp.pop %v2103
  %v2112 = vmul.f32 1.0, %v2111
  %v2113 = vrcp.pop %v2104
  %v2114 = vmul.f32 1.0, %v2113
  %v2115 = vrcp.pop %v2105
  %v2116 = vmul.f32 1.0, %v2115
  %v2117 = vrcp.pop %v2106
  %v2118 = vmul.f32 1.0, %v2117
  %v2119 = vrcp.pop %v2107
  %v2120 = vmul.f32 1.0, %v2119
  %v2121 = vrcp.pop %v2108
  %v2122 = vmul.f32 1.0, %v2121
  %v2123 = vrcp.pop %v2109
  %v2124 = vmul.f32 1.0, %v2123
  %v2125 = vrcp.pop %v2110
  %v2126 = vmul.f32 1.0, %v2125
  %v2135 = vrot.slane %v1658, 7
  %v2136 = vrot.slane %v1659, 7
  %v2137 = vrot.slane %v1660, 7
  %v2138 = vrot.slane %v1661, 7
  %v2139 = vrot.slane %v1662, 7
  %v2140 = vrot.slane %v1663, 7
  %v2141 = vrot.slane %v1664, 7
  %v2142 = vrot.slane %v1665, 7
  %v2151 = vmul.f32 %v2056, %v2135
  %v2152 = vmul.f32 %v2058, %v2136
  %v2153 = vmul.f32 %v2060, %v2137
  %v2154 = vmul.f32 %v2062, %v2138
  %v2155 = vmul.f32 %v2064, %v2139
  %v2156 = vmul.f32 %v2066, %v2140
  %v2157 = vmul.f32 %v2068, %v2141
  %v2158 = vmul.f32 %v2070, %v2142
  %v2159 = vmul.f32 %v2008, %v2071
  %v2160 = vmul.f32 %v2010, %v2072
  %v2161 = vmul.f32 %v2012, %v2073
  %v2162 = vmul.f32 %v2014, %v2074
  %v2163 = vmul.f32 %v2016, %v2075
  %v2164 = vmul.f32 %v2018, %v2076
  %v2165 = vmul.f32 %v2020, %v2077
  %v2166 = vmul.f32 %v2022, %v2078
  %v2167 = vadd.f32 %v2151, %v2159
  %v2168 = vadd.f32 %v2152, %v2160
  %v2169 = vadd.f32 %v2153, %v2161
  %v2170 = vadd.f32 %v2154, %v2162
  %v2171 = vadd.f32 %v2155, %v2163
  %v2172 = vadd.f32 %v2156, %v2164
  %v2173 = vadd.f32 %v2157, %v2165
  %v2174 = vadd.f32 %v2158, %v2166
  %v2175 = vtanh.pop %v2167
  %v2176 = vtanh.pop %v2168
  %v2177 = vtanh.pop %v2169
  %v2178 = vtanh.pop %v2170
  %v2179 = vtanh.pop %v2171
  %v2180 = vtanh.pop %v2172
  %v2181 = vtanh.pop %v2173
  %v2182 = vtanh.pop %v2174
  %v2183 = vmul.f32 %v2112, %v2175
  %v2184 = vmul.f32 %v2114, %v2176
  %v2185 = vmul.f32 %v2116, %v2177
  %v2186 = vmul.f32 %v2118, %v2178
  %v2187 = vmul.f32 %v2120, %v2179
  %v2188 = vmul.f32 %v2122, %v2180
  %v2189 = vmul.f32 %v2124, %v2181
  %v2190 = vmul.f32 %v2126, %v2182
  %v2191 = vpack.c.bf16 %v2183, %v2183
  %v2192 = vpack.c.bf16 %v2184, %v2184
  %v2193 = vpack.c.bf16 %v2185, %v2185
  %v2194 = vpack.c.bf16 %v2186, %v2186
  %v2195 = vpack.c.bf16 %v2187, %v2187
  %v2196 = vpack.c.bf16 %v2188, %v2188
  %v2197 = vpack.c.bf16 %v2189, %v2189
  %v2198 = vpack.c.bf16 %v2190, %v2190
  %vm2199 = vsmask.f32 7942
  %vm2200 = vmand %vm1690, %vm2199
  %v2201 = vld [vmem:[%s4] sm:$0x2]
  %v2202 = vsel %vm2200, %v2191, %v2201
  %2203 = vst [vmem:[%s4] sm:$0x2] %v2202
  %v2204 = vld [vmem:[%s4 + $0x4] sm:$0x2]
  %v2205 = vsel %vm2200, %v2192, %v2204
  %2206 = vst [vmem:[%s4 + $0x4] sm:$0x2] %v2205
  %v2207 = vld [vmem:[%s4 + $0x8] sm:$0x2]
  %v2208 = vsel %vm2200, %v2193, %v2207
  %2209 = vst [vmem:[%s4 + $0x8] sm:$0x2] %v2208
  %v2210 = vld [vmem:[%s4 + $0xc] sm:$0x2]
  %v2211 = vsel %vm2200, %v2194, %v2210
  %2212 = vst [vmem:[%s4 + $0xc] sm:$0x2] %v2211
  %v2213 = vld [vmem:[%s4 + $0x10] sm:$0x2]
  %v2214 = vsel %vm2200, %v2195, %v2213
  %2215 = vst [vmem:[%s4 + $0x10] sm:$0x2] %v2214
  %v2216 = vld [vmem:[%s4 + $0x14] sm:$0x2]
  %v2217 = vsel %vm2200, %v2196, %v2216
  %2218 = vst [vmem:[%s4 + $0x14] sm:$0x2] %v2217
  %v2219 = vld [vmem:[%s4 + $0x18] sm:$0x2]
  %v2220 = vsel %vm2200, %v2197, %v2219
  %2221 = vst [vmem:[%s4 + $0x18] sm:$0x2] %v2220
  %v2222 = vld [vmem:[%s4 + $0x1c] sm:$0x2]
  %v2223 = vsel %vm2200, %v2198, %v2222
  %2224 = vst [vmem:[%s4 + $0x1c] sm:$0x2] %v2223
  %v2225 = vld [vmem:[%s0] sm:$0x44]
  %v2226 = vld [vmem:[%s0 + $0x8] sm:$0x44]
  %v2227 = vld [vmem:[%s0 + $0x10] sm:$0x44]
  %v2228 = vld [vmem:[%s0 + $0x18] sm:$0x44]
  %v2229 = vld [vmem:[%s0 + $0x20] sm:$0x44]
  %v2230 = vld [vmem:[%s0 + $0x28] sm:$0x44]
  %v2231 = vld [vmem:[%s0 + $0x30] sm:$0x44]
  %v2232 = vld [vmem:[%s0 + $0x38] sm:$0x44]
  %v2233 = vld [vmem:[%s0 + $0x40] sm:$0x44]
  %v2234 = vld [vmem:[%s0 + $0x48] sm:$0x44]
  %v2235 = vld [vmem:[%s0 + $0x50] sm:$0x44]
  %v2236 = vld [vmem:[%s0 + $0x58] sm:$0x44]
  %v2237 = vld [vmem:[%s0 + $0x60] sm:$0x44]
  %v2238 = vld [vmem:[%s0 + $0x68] sm:$0x44]
  %v2239 = vld [vmem:[%s0 + $0x70] sm:$0x44]
  %v2240 = vld [vmem:[%s0 + $0x78] sm:$0x44]
  %v2241 = vunpack.c.l.bf16 %v2225
  %v2242 = vunpack.c.h.bf16 %v2225
  %v2243 = vunpack.c.l.bf16 %v2226
  %v2244 = vunpack.c.h.bf16 %v2226
  %v2245 = vunpack.c.l.bf16 %v2227
  %v2246 = vunpack.c.h.bf16 %v2227
  %v2247 = vunpack.c.l.bf16 %v2228
  %v2248 = vunpack.c.h.bf16 %v2228
  %v2249 = vunpack.c.l.bf16 %v2229
  %v2250 = vunpack.c.h.bf16 %v2229
  %v2251 = vunpack.c.l.bf16 %v2230
  %v2252 = vunpack.c.h.bf16 %v2230
  %v2253 = vunpack.c.l.bf16 %v2231
  %v2254 = vunpack.c.h.bf16 %v2231
  %v2255 = vunpack.c.l.bf16 %v2232
  %v2256 = vunpack.c.h.bf16 %v2232
  %v2257 = vunpack.c.l.bf16 %v2233
  %v2258 = vunpack.c.h.bf16 %v2233
  %v2259 = vunpack.c.l.bf16 %v2234
  %v2260 = vunpack.c.h.bf16 %v2234
  %v2261 = vunpack.c.l.bf16 %v2235
  %v2262 = vunpack.c.h.bf16 %v2235
  %v2263 = vunpack.c.l.bf16 %v2236
  %v2264 = vunpack.c.h.bf16 %v2236
  %v2265 = vunpack.c.l.bf16 %v2237
  %v2266 = vunpack.c.h.bf16 %v2237
  %v2267 = vunpack.c.l.bf16 %v2238
  %v2268 = vunpack.c.h.bf16 %v2238
  %v2269 = vunpack.c.l.bf16 %v2239
  %v2270 = vunpack.c.h.bf16 %v2239
  %v2271 = vunpack.c.l.bf16 %v2240
  %v2272 = vunpack.c.h.bf16 %v2240
  %v2281 = vunpack.c.l.b16 %v2191
  %v2282 = vunpack.c.l.b16 %v2192
  %v2283 = vunpack.c.l.b16 %v2193
  %v2284 = vunpack.c.l.b16 %v2194
  %v2285 = vunpack.c.l.b16 %v2195
  %v2286 = vunpack.c.l.b16 %v2196
  %v2287 = vunpack.c.l.b16 %v2197
  %v2288 = vunpack.c.l.b16 %v2198
  %v2289 = vrot.slane %v2281, 3
  %v2290 = vrot.slane %v2282, 2
  %v2291 = vsel %vm758, %v2290, %v2289
  %v2292 = vrot.slane %v2283, 1
  %v2293 = vsel %vm761, %v2292, %v2291
  %v2294 = vsel %vm764, %v2284, %v2293
  %v2295 = vrot.slane %v2285, 7
  %v2296 = vsel %vm767, %v2295, %v2294
  %v2297 = vrot.slane %v2286, 6
  %v2298 = vsel %vm770, %v2297, %v2296
  %v2299 = vrot.slane %v2287, 5
  %v2300 = vsel %vm773, %v2299, %v2298
  %v2301 = vrot.slane %v2288, 4
  %v2302 = vsel %vm776, %v2301, %v2300
  %v2303 = vpack.c.b16 %v2302, %v2302
  %2305 = vmatprep.subr.bf16.mxu0 %v209
  %2306 = vmatpush1.bf16.msra.mxu0 %v208
  %2307 = vmatprep.subr.bf16.mxu0 %v213
  %2308 = vmatpush1.bf16.msra.mxu0 %v212
  %2309 = vmatprep.subr.bf16.mxu0 %v217
  %2310 = vmatpush1.bf16.msra.mxu0 %v216
  %2311 = vmatprep.subr.bf16.mxu0 %v221
  %2312 = vmatpush1.bf16.msra.mxu0 %v220
  %2313 = vmatprep.subr.bf16.mxu0 %v225
  %2314 = vmatpush1.bf16.msra.mxu0 %v224
  %2315 = vmatprep.subr.bf16.mxu0 %v229
  %2316 = vmatpush1.bf16.msra.mxu0 %v228
  %2317 = vmatprep.subr.bf16.mxu0 %v233
  %2318 = vmatpush1.bf16.msra.mxu0 %v232
  %2319 = vmatprep.subr.bf16.mxu0 %v237
  %2320 = vmatpush1.bf16.msra.mxu0 %v236
  %2321 = vmatprep.subr.bf16.mxu0 0
  %2322 = vmatpush1.bf16.msra.mxu0 0
  %2323 = vmatprep.subr.bf16.mxu0 0
  %2324 = vmatpush1.bf16.msra.mxu0 0
  %2325 = vmatprep.subr.bf16.mxu0 0
  %2326 = vmatpush1.bf16.msra.mxu0 0
  %2327 = vmatprep.subr.bf16.mxu0 0
  %2328 = vmatpush1.bf16.msra.mxu0 0
  %2329 = vmatprep.subr.bf16.mxu0 0
  %2330 = vmatpush1.bf16.msra.mxu0 0
  %2331 = vmatprep.subr.bf16.mxu0 0
  %2332 = vmatpush1.bf16.msra.mxu0 0
  %2333 = vmatprep.subr.bf16.mxu0 0
  %2334 = vmatpush1.bf16.msra.mxu0 0
  %2335 = vmatprep.subr.bf16.mxu0 0
  %2336 = vmatpush1.bf16.msra.mxu0 0
  %2337 = vmatprep.mubr.bf16.mxu0 0
  %2338 = vmatmul.mubr.bf16.gmra.mrb[0].mxu0 %v2303
  %v2339 = vpop.f32.mrb[0].mxu0
  %v2340 = vadd.f32 0.0, %v2339
  %v2341 = vpop.f32.mrb[0].mxu0
  %v2342 = vadd.f32 0.0, %v2341
  %v2343 = vpop.f32.mrb[0].mxu0
  %v2344 = vpop.f32.mrb[0].mxu0
  %2345 = vdwg.mxu0
  %2346 = vmatprep.subr.bf16.mxu0 %v211
  %2347 = vmatpush1.bf16.msra.mxu0 %v210
  %2348 = vmatprep.subr.bf16.mxu0 %v215
  %2349 = vmatpush1.bf16.msra.mxu0 %v214
  %2350 = vmatprep.subr.bf16.mxu0 %v219
  %2351 = vmatpush1.bf16.msra.mxu0 %v218
  %2352 = vmatprep.subr.bf16.mxu0 %v223
  %2353 = vmatpush1.bf16.msra.mxu0 %v222
  %2354 = vmatprep.subr.bf16.mxu0 %v227
  %2355 = vmatpush1.bf16.msra.mxu0 %v226
  %2356 = vmatprep.subr.bf16.mxu0 %v231
  %2357 = vmatpush1.bf16.msra.mxu0 %v230
  %2358 = vmatprep.subr.bf16.mxu0 %v235
  %2359 = vmatpush1.bf16.msra.mxu0 %v234
  %2360 = vmatprep.subr.bf16.mxu0 %v239
  %2361 = vmatpush1.bf16.msra.mxu0 %v238
  %2362 = vmatprep.subr.bf16.mxu0 0
  %2363 = vmatpush1.bf16.msra.mxu0 0
  %2364 = vmatprep.subr.bf16.mxu0 0
  %2365 = vmatpush1.bf16.msra.mxu0 0
  %2366 = vmatprep.subr.bf16.mxu0 0
  %2367 = vmatpush1.bf16.msra.mxu0 0
  %2368 = vmatprep.subr.bf16.mxu0 0
  %2369 = vmatpush1.bf16.msra.mxu0 0
  %2370 = vmatprep.subr.bf16.mxu0 0
  %2371 = vmatpush1.bf16.msra.mxu0 0
  %2372 = vmatprep.subr.bf16.mxu0 0
  %2373 = vmatpush1.bf16.msra.mxu0 0
  %2374 = vmatprep.subr.bf16.mxu0 0
  %2375 = vmatpush1.bf16.msra.mxu0 0
  %2376 = vmatprep.subr.bf16.mxu0 0
  %2377 = vmatpush1.bf16.msra.mxu0 0
  %2378 = vmatprep.mubr.bf16.mxu0 0
  %2379 = vmatmul.mubr.bf16.gmra.mrb[0].mxu0 %v2303
  %v2380 = vpop.f32.mrb[0].mxu0
  %v2381 = vadd.f32 0.0, %v2380
  %v2382 = vpop.f32.mrb[0].mxu0
  %v2383 = vadd.f32 0.0, %v2382
  %v2384 = vpop.f32.mrb[0].mxu0
  %v2385 = vpop.f32.mrb[0].mxu0
  %2386 = vdwg.mxu0
  %v2391 = vrot.slane %v2340, 4
  %v2392 = vrot.slane %v2342, 4
  %v2393 = vrot.slane %v2381, 4
  %v2394 = vrot.slane %v2383, 4
  %v2395 = vrot.slane %v2340, 5
  %v2396 = vrot.slane %v2342, 5
  %v2397 = vrot.slane %v2381, 5
  %v2398 = vrot.slane %v2383, 5
  %v2399 = vrot.slane %v2340, 6
  %v2400 = vrot.slane %v2342, 6
  %v2401 = vrot.slane %v2381, 6
  %v2402 = vrot.slane %v2383, 6
  %v2403 = vrot.slane %v2340, 7
  %v2404 = vrot.slane %v2342, 7
  %v2405 = vrot.slane %v2381, 7
  %v2406 = vrot.slane %v2383, 7
  %v2407 = vrot.slane %v2340, 1
  %v2408 = vrot.slane %v2342, 1
  %v2409 = vrot.slane %v2381, 1
  %v2410 = vrot.slane %v2383, 1
  %v2411 = vrot.slane %v2340, 2
  %v2412 = vrot.slane %v2342, 2
  %v2413 = vrot.slane %v2381, 2
  %v2414 = vrot.slane %v2383, 2
  %v2415 = vrot.slane %v2340, 3
  %v2416 = vrot.slane %v2342, 3
  %v2417 = vrot.slane %v2381, 3
  %v2418 = vrot.slane %v2383, 3
  %v2451 = vadd.f32 %v2241, %v2391
  %v2452 = vadd.f32 %v2242, %v2392
  %v2453 = vadd.f32 %v2243, %v2393
  %v2454 = vadd.f32 %v2244, %v2394
  %v2455 = vadd.f32 %v2245, %v2395
  %v2456 = vadd.f32 %v2246, %v2396
  %v2457 = vadd.f32 %v2247, %v2397
  %v2458 = vadd.f32 %v2248, %v2398
  %v2459 = vadd.f32 %v2249, %v2399
  %v2460 = vadd.f32 %v2250, %v2400
  %v2461 = vadd.f32 %v2251, %v2401
  %v2462 = vadd.f32 %v2252, %v2402
  %v2463 = vadd.f32 %v2253, %v2403
  %v2464 = vadd.f32 %v2254, %v2404
  %v2465 = vadd.f32 %v2255, %v2405
  %v2466 = vadd.f32 %v2256, %v2406
  %v2467 = vadd.f32 %v2257, %v2340
  %v2468 = vadd.f32 %v2258, %v2342
  %v2469 = vadd.f32 %v2259, %v2381
  %v2470 = vadd.f32 %v2260, %v2383
  %v2471 = vadd.f32 %v2261, %v2407
  %v2472 = vadd.f32 %v2262, %v2408
  %v2473 = vadd.f32 %v2263, %v2409
  %v2474 = vadd.f32 %v2264, %v2410
  %v2475 = vadd.f32 %v2265, %v2411
  %v2476 = vadd.f32 %v2266, %v2412
  %v2477 = vadd.f32 %v2267, %v2413
  %v2478 = vadd.f32 %v2268, %v2414
  %v2479 = vadd.f32 %v2269, %v2415
  %v2480 = vadd.f32 %v2270, %v2416
  %v2481 = vadd.f32 %v2271, %v2417
  %v2482 = vadd.f32 %v2272, %v2418
  %v2483 = vxor.u32 %v2451, 2147483648
  %v2484 = vxor.u32 %v2455, 2147483648
  %v2485 = vxor.u32 %v2459, 2147483648
  %v2486 = vxor.u32 %v2463, 2147483648
  %v2487 = vxor.u32 %v2467, 2147483648
  %v2488 = vxor.u32 %v2471, 2147483648
  %v2489 = vxor.u32 %v2475, 2147483648
  %v2490 = vxor.u32 %v2479, 2147483648
  %v2491 = vmul.f32 %v2483, 1.442695
  %v2492 = vpow.pop %v2491
  %v2493 = vmul.f32 %v2484, 1.442695
  %v2494 = vpow.pop %v2493
  %v2495 = vmul.f32 %v2485, 1.442695
  %v2496 = vpow.pop %v2495
  %v2497 = vmul.f32 %v2486, 1.442695
  %v2498 = vpow.pop %v2497
  %v2499 = vmul.f32 %v2487, 1.442695
  %v2500 = vpow.pop %v2499
  %v2501 = vmul.f32 %v2488, 1.442695
  %v2502 = vpow.pop %v2501
  %v2503 = vmul.f32 %v2489, 1.442695
  %v2504 = vpow.pop %v2503
  %v2505 = vmul.f32 %v2490, 1.442695
  %v2506 = vpow.pop %v2505
  %v2507 = vadd.f32 %v2492, 1.0
  %v2508 = vadd.f32 %v2494, 1.0
  %v2509 = vadd.f32 %v2496, 1.0
  %v2510 = vadd.f32 %v2498, 1.0
  %v2511 = vadd.f32 %v2500, 1.0
  %v2512 = vadd.f32 %v2502, 1.0
  %v2513 = vadd.f32 %v2504, 1.0
  %v2514 = vadd.f32 %v2506, 1.0
  %v2515 = vrcp.pop %v2507
  %v2516 = vmul.f32 1.0, %v2515
  %v2517 = vrcp.pop %v2508
  %v2518 = vmul.f32 1.0, %v2517
  %v2519 = vrcp.pop %v2509
  %v2520 = vmul.f32 1.0, %v2519
  %v2521 = vrcp.pop %v2510
  %v2522 = vmul.f32 1.0, %v2521
  %v2523 = vrcp.pop %v2511
  %v2524 = vmul.f32 1.0, %v2523
  %v2525 = vrcp.pop %v2512
  %v2526 = vmul.f32 1.0, %v2525
  %v2527 = vrcp.pop %v2513
  %v2528 = vmul.f32 1.0, %v2527
  %v2529 = vrcp.pop %v2514
  %v2530 = vmul.f32 1.0, %v2529
  %v2531 = vxor.u32 %v2452, 2147483648
  %v2532 = vxor.u32 %v2456, 2147483648
  %v2533 = vxor.u32 %v2460, 2147483648
  %v2534 = vxor.u32 %v2464, 2147483648
  %v2535 = vxor.u32 %v2468, 2147483648
  %v2536 = vxor.u32 %v2472, 2147483648
  %v2537 = vxor.u32 %v2476, 2147483648
  %v2538 = vxor.u32 %v2480, 2147483648
  %v2539 = vmul.f32 %v2531, 1.442695
  %v2540 = vpow.pop %v2539
  %v2541 = vmul.f32 %v2532, 1.442695
  %v2542 = vpow.pop %v2541
  %v2543 = vmul.f32 %v2533, 1.442695
  %v2544 = vpow.pop %v2543
  %v2545 = vmul.f32 %v2534, 1.442695
  %v2546 = vpow.pop %v2545
  %v2547 = vmul.f32 %v2535, 1.442695
  %v2548 = vpow.pop %v2547
  %v2549 = vmul.f32 %v2536, 1.442695
  %v2550 = vpow.pop %v2549
  %v2551 = vmul.f32 %v2537, 1.442695
  %v2552 = vpow.pop %v2551
  %v2553 = vmul.f32 %v2538, 1.442695
  %v2554 = vpow.pop %v2553
  %v2555 = vadd.f32 %v2540, 1.0
  %v2556 = vadd.f32 %v2542, 1.0
  %v2557 = vadd.f32 %v2544, 1.0
  %v2558 = vadd.f32 %v2546, 1.0
  %v2559 = vadd.f32 %v2548, 1.0
  %v2560 = vadd.f32 %v2550, 1.0
  %v2561 = vadd.f32 %v2552, 1.0
  %v2562 = vadd.f32 %v2554, 1.0
  %v2563 = vrcp.pop %v2555
  %v2564 = vmul.f32 1.0, %v2563
  %v2565 = vrcp.pop %v2556
  %v2566 = vmul.f32 1.0, %v2565
  %v2567 = vrcp.pop %v2557
  %v2568 = vmul.f32 1.0, %v2567
  %v2569 = vrcp.pop %v2558
  %v2570 = vmul.f32 1.0, %v2569
  %v2571 = vrcp.pop %v2559
  %v2572 = vmul.f32 1.0, %v2571
  %v2573 = vrcp.pop %v2560
  %v2574 = vmul.f32 1.0, %v2573
  %v2575 = vrcp.pop %v2561
  %v2576 = vmul.f32 1.0, %v2575
  %v2577 = vrcp.pop %v2562
  %v2578 = vmul.f32 1.0, %v2577
  %v2579 = vtanh.pop %v2453
  %v2580 = vtanh.pop %v2457
  %v2581 = vtanh.pop %v2461
  %v2582 = vtanh.pop %v2465
  %v2583 = vtanh.pop %v2469
  %v2584 = vtanh.pop %v2473
  %v2585 = vtanh.pop %v2477
  %v2586 = vtanh.pop %v2481
  %v2587 = vxor.u32 %v2454, 2147483648
  %v2588 = vxor.u32 %v2458, 2147483648
  %v2589 = vxor.u32 %v2462, 2147483648
  %v2590 = vxor.u32 %v2466, 2147483648
  %v2591 = vxor.u32 %v2470, 2147483648
  %v2592 = vxor.u32 %v2474, 2147483648
  %v2593 = vxor.u32 %v2478, 2147483648
  %v2594 = vxor.u32 %v2482, 2147483648
  %v2595 = vmul.f32 %v2587, 1.442695
  %v2596 = vpow.pop %v2595
  %v2597 = vmul.f32 %v2588, 1.442695
  %v2598 = vpow.pop %v2597
  %v2599 = vmul.f32 %v2589, 1.442695
  %v2600 = vpow.pop %v2599
  %v2601 = vmul.f32 %v2590, 1.442695
  %v2602 = vpow.pop %v2601
  %v2603 = vmul.f32 %v2591, 1.442695
  %v2604 = vpow.pop %v2603
  %v2605 = vmul.f32 %v2592, 1.442695
  %v2606 = vpow.pop %v2605
  %v2607 = vmul.f32 %v2593, 1.442695
  %v2608 = vpow.pop %v2607
  %v2609 = vmul.f32 %v2594, 1.442695
  %v2610 = vpow.pop %v2609
  %v2611 = vadd.f32 %v2596, 1.0
  %v2612 = vadd.f32 %v2598, 1.0
  %v2613 = vadd.f32 %v2600, 1.0
  %v2614 = vadd.f32 %v2602, 1.0
  %v2615 = vadd.f32 %v2604, 1.0
  %v2616 = vadd.f32 %v2606, 1.0
  %v2617 = vadd.f32 %v2608, 1.0
  %v2618 = vadd.f32 %v2610, 1.0
  %v2619 = vrcp.pop %v2611
  %v2620 = vmul.f32 1.0, %v2619
  %v2621 = vrcp.pop %v2612
  %v2622 = vmul.f32 1.0, %v2621
  %v2623 = vrcp.pop %v2613
  %v2624 = vmul.f32 1.0, %v2623
  %v2625 = vrcp.pop %v2614
  %v2626 = vmul.f32 1.0, %v2625
  %v2627 = vrcp.pop %v2615
  %v2628 = vmul.f32 1.0, %v2627
  %v2629 = vrcp.pop %v2616
  %v2630 = vmul.f32 1.0, %v2629
  %v2631 = vrcp.pop %v2617
  %v2632 = vmul.f32 1.0, %v2631
  %v2633 = vrcp.pop %v2618
  %v2634 = vmul.f32 1.0, %v2633
  %v2643 = vrot.slane %v2167, 7
  %v2644 = vrot.slane %v2168, 7
  %v2645 = vrot.slane %v2169, 7
  %v2646 = vrot.slane %v2170, 7
  %v2647 = vrot.slane %v2171, 7
  %v2648 = vrot.slane %v2172, 7
  %v2649 = vrot.slane %v2173, 7
  %v2650 = vrot.slane %v2174, 7
  %v2659 = vmul.f32 %v2564, %v2643
  %v2660 = vmul.f32 %v2566, %v2644
  %v2661 = vmul.f32 %v2568, %v2645
  %v2662 = vmul.f32 %v2570, %v2646
  %v2663 = vmul.f32 %v2572, %v2647
  %v2664 = vmul.f32 %v2574, %v2648
  %v2665 = vmul.f32 %v2576, %v2649
  %v2666 = vmul.f32 %v2578, %v2650
  %v2667 = vmul.f32 %v2516, %v2579
  %v2668 = vmul.f32 %v2518, %v2580
  %v2669 = vmul.f32 %v2520, %v2581
  %v2670 = vmul.f32 %v2522, %v2582
  %v2671 = vmul.f32 %v2524, %v2583
  %v2672 = vmul.f32 %v2526, %v2584
  %v2673 = vmul.f32 %v2528, %v2585
  %v2674 = vmul.f32 %v2530, %v2586
  %v2675 = vadd.f32 %v2659, %v2667
  %v2676 = vadd.f32 %v2660, %v2668
  %v2677 = vadd.f32 %v2661, %v2669
  %v2678 = vadd.f32 %v2662, %v2670
  %v2679 = vadd.f32 %v2663, %v2671
  %v2680 = vadd.f32 %v2664, %v2672
  %v2681 = vadd.f32 %v2665, %v2673
  %v2682 = vadd.f32 %v2666, %v2674
  %v2683 = vtanh.pop %v2675
  %v2684 = vtanh.pop %v2676
  %v2685 = vtanh.pop %v2677
  %v2686 = vtanh.pop %v2678
  %v2687 = vtanh.pop %v2679
  %v2688 = vtanh.pop %v2680
  %v2689 = vtanh.pop %v2681
  %v2690 = vtanh.pop %v2682
  %v2691 = vmul.f32 %v2620, %v2683
  %v2692 = vmul.f32 %v2622, %v2684
  %v2693 = vmul.f32 %v2624, %v2685
  %v2694 = vmul.f32 %v2626, %v2686
  %v2695 = vmul.f32 %v2628, %v2687
  %v2696 = vmul.f32 %v2630, %v2688
  %v2697 = vmul.f32 %v2632, %v2689
  %v2698 = vmul.f32 %v2634, %v2690
  %v2699 = vpack.c.bf16 %v2691, %v2691
  %v2700 = vpack.c.bf16 %v2692, %v2692
  %v2701 = vpack.c.bf16 %v2693, %v2693
  %v2702 = vpack.c.bf16 %v2694, %v2694
  %v2703 = vpack.c.bf16 %v2695, %v2695
  %v2704 = vpack.c.bf16 %v2696, %v2696
  %v2705 = vpack.c.bf16 %v2697, %v2697
  %v2706 = vpack.c.bf16 %v2698, %v2698
  %vm2707 = vcmask 1042434
  %vm2708 = vsmask.f32 2304
  %vm2709 = vmand %vm2707, %vm2708
  %v2710 = vld [vmem:[%s4] sm:$0x4]
  %v2711 = vsel %vm2709, %v2699, %v2710
  %2712 = vst [vmem:[%s4] sm:$0x4] %v2711
  %v2713 = vld [vmem:[%s4 + $0x4] sm:$0x4]
  %v2714 = vsel %vm2709, %v2700, %v2713
  %2715 = vst [vmem:[%s4 + $0x4] sm:$0x4] %v2714
  %v2716 = vld [vmem:[%s4 + $0x8] sm:$0x4]
  %v2717 = vsel %vm2709, %v2701, %v2716
  %2718 = vst [vmem:[%s4 + $0x8] sm:$0x4] %v2717
  %v2719 = vld [vmem:[%s4 + $0xc] sm:$0x4]
  %v2720 = vsel %vm2709, %v2702, %v2719
  %2721 = vst [vmem:[%s4 + $0xc] sm:$0x4] %v2720
  %v2722 = vld [vmem:[%s4 + $0x10] sm:$0x4]
  %v2723 = vsel %vm2709, %v2703, %v2722
  %2724 = vst [vmem:[%s4 + $0x10] sm:$0x4] %v2723
  %v2725 = vld [vmem:[%s4 + $0x14] sm:$0x4]
  %v2726 = vsel %vm2709, %v2704, %v2725
  %2727 = vst [vmem:[%s4 + $0x14] sm:$0x4] %v2726
  %v2728 = vld [vmem:[%s4 + $0x18] sm:$0x4]
  %v2729 = vsel %vm2709, %v2705, %v2728
  %2730 = vst [vmem:[%s4 + $0x18] sm:$0x4] %v2729
  %v2731 = vld [vmem:[%s4 + $0x1c] sm:$0x4]
  %v2732 = vsel %vm2709, %v2706, %v2731
  %2733 = vst [vmem:[%s4 + $0x1c] sm:$0x4] %v2732
  %v2734 = vld [vmem:[%s0] sm:$0x44]
  %v2735 = vld [vmem:[%s0 + $0x8] sm:$0x44]
  %v2736 = vld [vmem:[%s0 + $0x10] sm:$0x44]
  %v2737 = vld [vmem:[%s0 + $0x18] sm:$0x44]
  %v2738 = vld [vmem:[%s0 + $0x20] sm:$0x44]
  %v2739 = vld [vmem:[%s0 + $0x28] sm:$0x44]
  %v2740 = vld [vmem:[%s0 + $0x30] sm:$0x44]
  %v2741 = vld [vmem:[%s0 + $0x38] sm:$0x44]
  %v2742 = vld [vmem:[%s0 + $0x40] sm:$0x44]
  %v2743 = vld [vmem:[%s0 + $0x48] sm:$0x44]
  %v2744 = vld [vmem:[%s0 + $0x50] sm:$0x44]
  %v2745 = vld [vmem:[%s0 + $0x58] sm:$0x44]
  %v2746 = vld [vmem:[%s0 + $0x60] sm:$0x44]
  %v2747 = vld [vmem:[%s0 + $0x68] sm:$0x44]
  %v2748 = vld [vmem:[%s0 + $0x70] sm:$0x44]
  %v2749 = vld [vmem:[%s0 + $0x78] sm:$0x44]
  %v2750 = vunpack.c.l.bf16 %v2734
  %v2751 = vunpack.c.h.bf16 %v2734
  %v2752 = vunpack.c.l.bf16 %v2735
  %v2753 = vunpack.c.h.bf16 %v2735
  %v2754 = vunpack.c.l.bf16 %v2736
  %v2755 = vunpack.c.h.bf16 %v2736
  %v2756 = vunpack.c.l.bf16 %v2737
  %v2757 = vunpack.c.h.bf16 %v2737
  %v2758 = vunpack.c.l.bf16 %v2738
  %v2759 = vunpack.c.h.bf16 %v2738
  %v2760 = vunpack.c.l.bf16 %v2739
  %v2761 = vunpack.c.h.bf16 %v2739
  %v2762 = vunpack.c.l.bf16 %v2740
  %v2763 = vunpack.c.h.bf16 %v2740
  %v2764 = vunpack.c.l.bf16 %v2741
  %v2765 = vunpack.c.h.bf16 %v2741
  %v2766 = vunpack.c.l.bf16 %v2742
  %v2767 = vunpack.c.h.bf16 %v2742
  %v2768 = vunpack.c.l.bf16 %v2743
  %v2769 = vunpack.c.h.bf16 %v2743
  %v2770 = vunpack.c.l.bf16 %v2744
  %v2771 = vunpack.c.h.bf16 %v2744
  %v2772 = vunpack.c.l.bf16 %v2745
  %v2773 = vunpack.c.h.bf16 %v2745
  %v2774 = vunpack.c.l.bf16 %v2746
  %v2775 = vunpack.c.h.bf16 %v2746
  %v2776 = vunpack.c.l.bf16 %v2747
  %v2777 = vunpack.c.h.bf16 %v2747
  %v2778 = vunpack.c.l.bf16 %v2748
  %v2779 = vunpack.c.h.bf16 %v2748
  %v2780 = vunpack.c.l.bf16 %v2749
  %v2781 = vunpack.c.h.bf16 %v2749
  %v2790 = vunpack.c.l.b16 %v2699
  %v2791 = vunpack.c.l.b16 %v2700
  %v2792 = vunpack.c.l.b16 %v2701
  %v2793 = vunpack.c.l.b16 %v2702
  %v2794 = vunpack.c.l.b16 %v2703
  %v2795 = vunpack.c.l.b16 %v2704
  %v2796 = vunpack.c.l.b16 %v2705
  %v2797 = vunpack.c.l.b16 %v2706
  %v2798 = vrot.slane %v2790, 4
  %v2799 = vrot.slane %v2791, 3
  %v2800 = vsel %vm758, %v2799, %v2798
  %v2801 = vrot.slane %v2792, 2
  %v2802 = vsel %vm761, %v2801, %v2800
  %v2803 = vrot.slane %v2793, 1
  %v2804 = vsel %vm764, %v2803, %v2802
  %v2805 = vsel %vm767, %v2794, %v2804
  %v2806 = vrot.slane %v2795, 7
  %v2807 = vsel %vm770, %v2806, %v2805
  %v2808 = vrot.slane %v2796, 6
  %v2809 = vsel %vm773, %v2808, %v2807
  %v2810 = vrot.slane %v2797, 5
  %v2811 = vsel %vm776, %v2810, %v2809
  %v2812 = vpack.c.b16 %v2811, %v2811
  %2814 = vmatprep.subr.bf16.mxu0 %v209
  %2815 = vmatpush1.bf16.msra.mxu0 %v208
  %2816 = vmatprep.subr.bf16.mxu0 %v213
  %2817 = vmatpush1.bf16.msra.mxu0 %v212
  %2818 = vmatprep.subr.bf16.mxu0 %v217
  %2819 = vmatpush1.bf16.msra.mxu0 %v216
  %2820 = vmatprep.subr.bf16.mxu0 %v221
  %2821 = vmatpush1.bf16.msra.mxu0 %v220
  %2822 = vmatprep.subr.bf16.mxu0 %v225
  %2823 = vmatpush1.bf16.msra.mxu0 %v224
  %2824 = vmatprep.subr.bf16.mxu0 %v229
  %2825 = vmatpush1.bf16.msra.mxu0 %v228
  %2826 = vmatprep.subr.bf16.mxu0 %v233
  %2827 = vmatpush1.bf16.msra.mxu0 %v232
  %2828 = vmatprep.subr.bf16.mxu0 %v237
  %2829 = vmatpush1.bf16.msra.mxu0 %v236
  %2830 = vmatprep.subr.bf16.mxu0 0
  %2831 = vmatpush1.bf16.msra.mxu0 0
  %2832 = vmatprep.subr.bf16.mxu0 0
  %2833 = vmatpush1.bf16.msra.mxu0 0
  %2834 = vmatprep.subr.bf16.mxu0 0
  %2835 = vmatpush1.bf16.msra.mxu0 0
  %2836 = vmatprep.subr.bf16.mxu0 0
  %2837 = vmatpush1.bf16.msra.mxu0 0
  %2838 = vmatprep.subr.bf16.mxu0 0
  %2839 = vmatpush1.bf16.msra.mxu0 0
  %2840 = vmatprep.subr.bf16.mxu0 0
  %2841 = vmatpush1.bf16.msra.mxu0 0
  %2842 = vmatprep.subr.bf16.mxu0 0
  %2843 = vmatpush1.bf16.msra.mxu0 0
  %2844 = vmatprep.subr.bf16.mxu0 0
  %2845 = vmatpush1.bf16.msra.mxu0 0
  %2846 = vmatprep.mubr.bf16.mxu0 0
  %2847 = vmatmul.mubr.bf16.gmra.mrb[0].mxu0 %v2812
  %v2848 = vpop.f32.mrb[0].mxu0
  %v2849 = vadd.f32 0.0, %v2848
  %v2850 = vpop.f32.mrb[0].mxu0
  %v2851 = vadd.f32 0.0, %v2850
  %v2852 = vpop.f32.mrb[0].mxu0
  %v2853 = vpop.f32.mrb[0].mxu0
  %2854 = vdwg.mxu0
  %2855 = vmatprep.subr.bf16.mxu0 %v211
  %2856 = vmatpush1.bf16.msra.mxu0 %v210
  %2857 = vmatprep.subr.bf16.mxu0 %v215
  %2858 = vmatpush1.bf16.msra.mxu0 %v214
  %2859 = vmatprep.subr.bf16.mxu0 %v219
  %2860 = vmatpush1.bf16.msra.mxu0 %v218
  %2861 = vmatprep.subr.bf16.mxu0 %v223
  %2862 = vmatpush1.bf16.msra.mxu0 %v222
  %2863 = vmatprep.subr.bf16.mxu0 %v227
  %2864 = vmatpush1.bf16.msra.mxu0 %v226
  %2865 = vmatprep.subr.bf16.mxu0 %v231
  %2866 = vmatpush1.bf16.msra.mxu0 %v230
  %2867 = vmatprep.subr.bf16.mxu0 %v235
  %2868 = vmatpush1.bf16.msra.mxu0 %v234
  %2869 = vmatprep.subr.bf16.mxu0 %v239
  %2870 = vmatpush1.bf16.msra.mxu0 %v238
  %2871 = vmatprep.subr.bf16.mxu0 0
  %2872 = vmatpush1.bf16.msra.mxu0 0
  %2873 = vmatprep.subr.bf16.mxu0 0
  %2874 = vmatpush1.bf16.msra.mxu0 0
  %2875 = vmatprep.subr.bf16.mxu0 0
  %2876 = vmatpush1.bf16.msra.mxu0 0
  %2877 = vmatprep.subr.bf16.mxu0 0
  %2878 = vmatpush1.bf16.msra.mxu0 0
  %2879 = vmatprep.subr.bf16.mxu0 0
  %2880 = vmatpush1.bf16.msra.mxu0 0
  %2881 = vmatprep.subr.bf16.mxu0 0
  %2882 = vmatpush1.bf16.msra.mxu0 0
  %2883 = vmatprep.subr.bf16.mxu0 0
  %2884 = vmatpush1.bf16.msra.mxu0 0
  %2885 = vmatprep.subr.bf16.mxu0 0
  %2886 = vmatpush1.bf16.msra.mxu0 0
  %2887 = vmatprep.mubr.bf16.mxu0 0
  %2888 = vmatmul.mubr.bf16.gmra.mrb[0].mxu0 %v2812
  %v2889 = vpop.f32.mrb[0].mxu0
  %v2890 = vadd.f32 0.0, %v2889
  %v2891 = vpop.f32.mrb[0].mxu0
  %v2892 = vadd.f32 0.0, %v2891
  %v2893 = vpop.f32.mrb[0].mxu0
  %v2894 = vpop.f32.mrb[0].mxu0
  %2895 = vdwg.mxu0
  %v2900 = vrot.slane %v2849, 3
  %v2901 = vrot.slane %v2851, 3
  %v2902 = vrot.slane %v2890, 3
  %v2903 = vrot.slane %v2892, 3
  %v2904 = vrot.slane %v2849, 4
  %v2905 = vrot.slane %v2851, 4
  %v2906 = vrot.slane %v2890, 4
  %v2907 = vrot.slane %v2892, 4
  %v2908 = vrot.slane %v2849, 5
  %v2909 = vrot.slane %v2851, 5
  %v2910 = vrot.slane %v2890, 5
  %v2911 = vrot.slane %v2892, 5
  %v2912 = vrot.slane %v2849, 6
  %v2913 = vrot.slane %v2851, 6
  %v2914 = vrot.slane %v2890, 6
  %v2915 = vrot.slane %v2892, 6
  %v2916 = vrot.slane %v2849, 7
  %v2917 = vrot.slane %v2851, 7
  %v2918 = vrot.slane %v2890, 7
  %v2919 = vrot.slane %v2892, 7
  %v2920 = vrot.slane %v2849, 1
  %v2921 = vrot.slane %v2851, 1
  %v2922 = vrot.slane %v2890, 1
  %v2923 = vrot.slane %v2892, 1
  %v2924 = vrot.slane %v2849, 2
  %v2925 = vrot.slane %v2851, 2
  %v2926 = vrot.slane %v2890, 2
  %v2927 = vrot.slane %v2892, 2
  %v2960 = vadd.f32 %v2750, %v2900
  %v2961 = vadd.f32 %v2751, %v2901
  %v2962 = vadd.f32 %v2752, %v2902
  %v2963 = vadd.f32 %v2753, %v2903
  %v2964 = vadd.f32 %v2754, %v2904
  %v2965 = vadd.f32 %v2755, %v2905
  %v2966 = vadd.f32 %v2756, %v2906
  %v2967 = vadd.f32 %v2757, %v2907
  %v2968 = vadd.f32 %v2758, %v2908
  %v2969 = vadd.f32 %v2759, %v2909
  %v2970 = vadd.f32 %v2760, %v2910
  %v2971 = vadd.f32 %v2761, %v2911
  %v2972 = vadd.f32 %v2762, %v2912
  %v2973 = vadd.f32 %v2763, %v2913
  %v2974 = vadd.f32 %v2764, %v2914
  %v2975 = vadd.f32 %v2765, %v2915
  %v2976 = vadd.f32 %v2766, %v2916
  %v2977 = vadd.f32 %v2767, %v2917
  %v2978 = vadd.f32 %v2768, %v2918
  %v2979 = vadd.f32 %v2769, %v2919
  %v2980 = vadd.f32 %v2770, %v2849
  %v2981 = vadd.f32 %v2771, %v2851
  %v2982 = vadd.f32 %v2772, %v2890
  %v2983 = vadd.f32 %v2773, %v2892
  %v2984 = vadd.f32 %v2774, %v2920
  %v2985 = vadd.f32 %v2775, %v2921
  %v2986 = vadd.f32 %v2776, %v2922
  %v2987 = vadd.f32 %v2777, %v2923
  %v2988 = vadd.f32 %v2778, %v2924
  %v2989 = vadd.f32 %v2779, %v2925
  %v2990 = vadd.f32 %v2780, %v2926
  %v2991 = vadd.f32 %v2781, %v2927
  %v2992 = vxor.u32 %v2960, 2147483648
  %v2993 = vxor.u32 %v2964, 2147483648
  %v2994 = vxor.u32 %v2968, 2147483648
  %v2995 = vxor.u32 %v2972, 2147483648
  %v2996 = vxor.u32 %v2976, 2147483648
  %v2997 = vxor.u32 %v2980, 2147483648
  %v2998 = vxor.u32 %v2984, 2147483648
  %v2999 = vxor.u32 %v2988, 2147483648
  %v3000 = vmul.f32 %v2992, 1.442695
  %v3001 = vpow.pop %v3000
  %v3002 = vmul.f32 %v2993, 1.442695
  %v3003 = vpow.pop %v3002
  %v3004 = vmul.f32 %v2994, 1.442695
  %v3005 = vpow.pop %v3004
  %v3006 = vmul.f32 %v2995, 1.442695
  %v3007 = vpow.pop %v3006
  %v3008 = vmul.f32 %v2996, 1.442695
  %v3009 = vpow.pop %v3008
  %v3010 = vmul.f32 %v2997, 1.442695
  %v3011 = vpow.pop %v3010
  %v3012 = vmul.f32 %v2998, 1.442695
  %v3013 = vpow.pop %v3012
  %v3014 = vmul.f32 %v2999, 1.442695
  %v3015 = vpow.pop %v3014
  %v3016 = vadd.f32 %v3001, 1.0
  %v3017 = vadd.f32 %v3003, 1.0
  %v3018 = vadd.f32 %v3005, 1.0
  %v3019 = vadd.f32 %v3007, 1.0
  %v3020 = vadd.f32 %v3009, 1.0
  %v3021 = vadd.f32 %v3011, 1.0
  %v3022 = vadd.f32 %v3013, 1.0
  %v3023 = vadd.f32 %v3015, 1.0
  %v3024 = vrcp.pop %v3016
  %v3025 = vmul.f32 1.0, %v3024
  %v3026 = vrcp.pop %v3017
  %v3027 = vmul.f32 1.0, %v3026
  %v3028 = vrcp.pop %v3018
  %v3029 = vmul.f32 1.0, %v3028
  %v3030 = vrcp.pop %v3019
  %v3031 = vmul.f32 1.0, %v3030
  %v3032 = vrcp.pop %v3020
  %v3033 = vmul.f32 1.0, %v3032
  %v3034 = vrcp.pop %v3021
  %v3035 = vmul.f32 1.0, %v3034
  %v3036 = vrcp.pop %v3022
  %v3037 = vmul.f32 1.0, %v3036
  %v3038 = vrcp.pop %v3023
  %v3039 = vmul.f32 1.0, %v3038
  %v3040 = vxor.u32 %v2961, 2147483648
  %v3041 = vxor.u32 %v2965, 2147483648
  %v3042 = vxor.u32 %v2969, 2147483648
  %v3043 = vxor.u32 %v2973, 2147483648
  %v3044 = vxor.u32 %v2977, 2147483648
  %v3045 = vxor.u32 %v2981, 2147483648
  %v3046 = vxor.u32 %v2985, 2147483648
  %v3047 = vxor.u32 %v2989, 2147483648
  %v3048 = vmul.f32 %v3040, 1.442695
  %v3049 = vpow.pop %v3048
  %v3050 = vmul.f32 %v3041, 1.442695
  %v3051 = vpow.pop %v3050
  %v3052 = vmul.f32 %v3042, 1.442695
  %v3053 = vpow.pop %v3052
  %v3054 = vmul.f32 %v3043, 1.442695
  %v3055 = vpow.pop %v3054
  %v3056 = vmul.f32 %v3044, 1.442695
  %v3057 = vpow.pop %v3056
  %v3058 = vmul.f32 %v3045, 1.442695
  %v3059 = vpow.pop %v3058
  %v3060 = vmul.f32 %v3046, 1.442695
  %v3061 = vpow.pop %v3060
  %v3062 = vmul.f32 %v3047, 1.442695
  %v3063 = vpow.pop %v3062
  %v3064 = vadd.f32 %v3049, 1.0
  %v3065 = vadd.f32 %v3051, 1.0
  %v3066 = vadd.f32 %v3053, 1.0
  %v3067 = vadd.f32 %v3055, 1.0
  %v3068 = vadd.f32 %v3057, 1.0
  %v3069 = vadd.f32 %v3059, 1.0
  %v3070 = vadd.f32 %v3061, 1.0
  %v3071 = vadd.f32 %v3063, 1.0
  %v3072 = vrcp.pop %v3064
  %v3073 = vmul.f32 1.0, %v3072
  %v3074 = vrcp.pop %v3065
  %v3075 = vmul.f32 1.0, %v3074
  %v3076 = vrcp.pop %v3066
  %v3077 = vmul.f32 1.0, %v3076
  %v3078 = vrcp.pop %v3067
  %v3079 = vmul.f32 1.0, %v3078
  %v3080 = vrcp.pop %v3068
  %v3081 = vmul.f32 1.0, %v3080
  %v3082 = vrcp.pop %v3069
  %v3083 = vmul.f32 1.0, %v3082
  %v3084 = vrcp.pop %v3070
  %v3085 = vmul.f32 1.0, %v3084
  %v3086 = vrcp.pop %v3071
  %v3087 = vmul.f32 1.0, %v3086
  %v3088 = vtanh.pop %v2962
  %v3089 = vtanh.pop %v2966
  %v3090 = vtanh.pop %v2970
  %v3091 = vtanh.pop %v2974
  %v3092 = vtanh.pop %v2978
  %v3093 = vtanh.pop %v2982
  %v3094 = vtanh.pop %v2986
  %v3095 = vtanh.pop %v2990
  %v3096 = vxor.u32 %v2963, 2147483648
  %v3097 = vxor.u32 %v2967, 2147483648
  %v3098 = vxor.u32 %v2971, 2147483648
  %v3099 = vxor.u32 %v2975, 2147483648
  %v3100 = vxor.u32 %v2979, 2147483648
  %v3101 = vxor.u32 %v2983, 2147483648
  %v3102 = vxor.u32 %v2987, 2147483648
  %v3103 = vxor.u32 %v2991, 2147483648
  %v3104 = vmul.f32 %v3096, 1.442695
  %v3105 = vpow.pop %v3104
  %v3106 = vmul.f32 %v3097, 1.442695
  %v3107 = vpow.pop %v3106
  %v3108 = vmul.f32 %v3098, 1.442695
  %v3109 = vpow.pop %v3108
  %v3110 = vmul.f32 %v3099, 1.442695
  %v3111 = vpow.pop %v3110
  %v3112 = vmul.f32 %v3100, 1.442695
  %v3113 = vpow.pop %v3112
  %v3114 = vmul.f32 %v3101, 1.442695
  %v3115 = vpow.pop %v3114
  %v3116 = vmul.f32 %v3102, 1.442695
  %v3117 = vpow.pop %v3116
  %v3118 = vmul.f32 %v3103, 1.442695
  %v3119 = vpow.pop %v3118
  %v3120 = vadd.f32 %v3105, 1.0
  %v3121 = vadd.f32 %v3107, 1.0
  %v3122 = vadd.f32 %v3109, 1.0
  %v3123 = vadd.f32 %v3111, 1.0
  %v3124 = vadd.f32 %v3113, 1.0
  %v3125 = vadd.f32 %v3115, 1.0
  %v3126 = vadd.f32 %v3117, 1.0
  %v3127 = vadd.f32 %v3119, 1.0
  %v3128 = vrcp.pop %v3120
  %v3129 = vmul.f32 1.0, %v3128
  %v3130 = vrcp.pop %v3121
  %v3131 = vmul.f32 1.0, %v3130
  %v3132 = vrcp.pop %v3122
  %v3133 = vmul.f32 1.0, %v3132
  %v3134 = vrcp.pop %v3123
  %v3135 = vmul.f32 1.0, %v3134
  %v3136 = vrcp.pop %v3124
  %v3137 = vmul.f32 1.0, %v3136
  %v3138 = vrcp.pop %v3125
  %v3139 = vmul.f32 1.0, %v3138
  %v3140 = vrcp.pop %v3126
  %v3141 = vmul.f32 1.0, %v3140
  %v3142 = vrcp.pop %v3127
  %v3143 = vmul.f32 1.0, %v3142
  %v3152 = vrot.slane %v2675, 7
  %v3153 = vrot.slane %v2676, 7
  %v3154 = vrot.slane %v2677, 7
  %v3155 = vrot.slane %v2678, 7
  %v3156 = vrot.slane %v2679, 7
  %v3157 = vrot.slane %v2680, 7
  %v3158 = vrot.slane %v2681, 7
  %v3159 = vrot.slane %v2682, 7
  %v3168 = vmul.f32 %v3073, %v3152
  %v3169 = vmul.f32 %v3075, %v3153
  %v3170 = vmul.f32 %v3077, %v3154
  %v3171 = vmul.f32 %v3079, %v3155
  %v3172 = vmul.f32 %v3081, %v3156
  %v3173 = vmul.f32 %v3083, %v3157
  %v3174 = vmul.f32 %v3085, %v3158
  %v3175 = vmul.f32 %v3087, %v3159
  %v3176 = vmul.f32 %v3025, %v3088
  %v3177 = vmul.f32 %v3027, %v3089
  %v3178 = vmul.f32 %v3029, %v3090
  %v3179 = vmul.f32 %v3031, %v3091
  %v3180 = vmul.f32 %v3033, %v3092
  %v3181 = vmul.f32 %v3035, %v3093
  %v3182 = vmul.f32 %v3037, %v3094
  %v3183 = vmul.f32 %v3039, %v3095
  %v3184 = vadd.f32 %v3168, %v3176
  %v3185 = vadd.f32 %v3169, %v3177
  %v3186 = vadd.f32 %v3170, %v3178
  %v3187 = vadd.f32 %v3171, %v3179
  %v3188 = vadd.f32 %v3172, %v3180
  %v3189 = vadd.f32 %v3173, %v3181
  %v3190 = vadd.f32 %v3174, %v3182
  %v3191 = vadd.f32 %v3175, %v3183
  %v3192 = vtanh.pop %v3184
  %v3193 = vtanh.pop %v3185
  %v3194 = vtanh.pop %v3186
  %v3195 = vtanh.pop %v3187
  %v3196 = vtanh.pop %v3188
  %v3197 = vtanh.pop %v3189
  %v3198 = vtanh.pop %v3190
  %v3199 = vtanh.pop %v3191
  %v3200 = vmul.f32 %v3129, %v3192
  %v3201 = vmul.f32 %v3131, %v3193
  %v3202 = vmul.f32 %v3133, %v3194
  %v3203 = vmul.f32 %v3135, %v3195
  %v3204 = vmul.f32 %v3137, %v3196
  %v3205 = vmul.f32 %v3139, %v3197
  %v3206 = vmul.f32 %v3141, %v3198
  %v3207 = vmul.f32 %v3143, %v3199
  %v3208 = vpack.c.bf16 %v3200, %v3200
  %v3209 = vpack.c.bf16 %v3201, %v3201
  %v3210 = vpack.c.bf16 %v3202, %v3202
  %v3211 = vpack.c.bf16 %v3203, %v3203
  %v3212 = vpack.c.bf16 %v3204, %v3204
  %v3213 = vpack.c.bf16 %v3205, %v3205
  %v3214 = vpack.c.bf16 %v3206, %v3206
  %v3215 = vpack.c.bf16 %v3207, %v3207
  %vm3216 = vsmask.f32 7946
  %vm3217 = vmand %vm2707, %vm3216
  %v3218 = vld [vmem:[%s4] sm:$0x4]
  %v3219 = vsel %vm3217, %v3208, %v3218
  %3220 = vst [vmem:[%s4] sm:$0x4] %v3219
  %v3221 = vld [vmem:[%s4 + $0x4] sm:$0x4]
  %v3222 = vsel %vm3217, %v3209, %v3221
  %3223 = vst [vmem:[%s4 + $0x4] sm:$0x4] %v3222
  %v3224 = vld [vmem:[%s4 + $0x8] sm:$0x4]
  %v3225 = vsel %vm3217, %v3210, %v3224
  %3226 = vst [vmem:[%s4 + $0x8] sm:$0x4] %v3225
  %v3227 = vld [vmem:[%s4 + $0xc] sm:$0x4]
  %v3228 = vsel %vm3217, %v3211, %v3227
  %3229 = vst [vmem:[%s4 + $0xc] sm:$0x4] %v3228
  %v3230 = vld [vmem:[%s4 + $0x10] sm:$0x4]
  %v3231 = vsel %vm3217, %v3212, %v3230
  %3232 = vst [vmem:[%s4 + $0x10] sm:$0x4] %v3231
  %v3233 = vld [vmem:[%s4 + $0x14] sm:$0x4]
  %v3234 = vsel %vm3217, %v3213, %v3233
  %3235 = vst [vmem:[%s4 + $0x14] sm:$0x4] %v3234
  %v3236 = vld [vmem:[%s4 + $0x18] sm:$0x4]
  %v3237 = vsel %vm3217, %v3214, %v3236
  %3238 = vst [vmem:[%s4 + $0x18] sm:$0x4] %v3237
  %v3239 = vld [vmem:[%s4 + $0x1c] sm:$0x4]
  %v3240 = vsel %vm3217, %v3215, %v3239
  %3241 = vst [vmem:[%s4 + $0x1c] sm:$0x4] %v3240
  %v3242 = vld [vmem:[%s0] sm:$0x88]
  %v3243 = vld [vmem:[%s0 + $0x8] sm:$0x88]
  %v3244 = vld [vmem:[%s0 + $0x10] sm:$0x88]
  %v3245 = vld [vmem:[%s0 + $0x18] sm:$0x88]
  %v3246 = vld [vmem:[%s0 + $0x20] sm:$0x88]
  %v3247 = vld [vmem:[%s0 + $0x28] sm:$0x88]
  %v3248 = vld [vmem:[%s0 + $0x30] sm:$0x88]
  %v3249 = vld [vmem:[%s0 + $0x38] sm:$0x88]
  %v3250 = vld [vmem:[%s0 + $0x40] sm:$0x88]
  %v3251 = vld [vmem:[%s0 + $0x48] sm:$0x88]
  %v3252 = vld [vmem:[%s0 + $0x50] sm:$0x88]
  %v3253 = vld [vmem:[%s0 + $0x58] sm:$0x88]
  %v3254 = vld [vmem:[%s0 + $0x60] sm:$0x88]
  %v3255 = vld [vmem:[%s0 + $0x68] sm:$0x88]
  %v3256 = vld [vmem:[%s0 + $0x70] sm:$0x88]
  %v3257 = vld [vmem:[%s0 + $0x78] sm:$0x88]
  %v3258 = vunpack.c.l.bf16 %v3242
  %v3259 = vunpack.c.h.bf16 %v3242
  %v3260 = vunpack.c.l.bf16 %v3243
  %v3261 = vunpack.c.h.bf16 %v3243
  %v3262 = vunpack.c.l.bf16 %v3244
  %v3263 = vunpack.c.h.bf16 %v3244
  %v3264 = vunpack.c.l.bf16 %v3245
  %v3265 = vunpack.c.h.bf16 %v3245
  %v3266 = vunpack.c.l.bf16 %v3246
  %v3267 = vunpack.c.h.bf16 %v3246
  %v3268 = vunpack.c.l.bf16 %v3247
  %v3269 = vunpack.c.h.bf16 %v3247
  %v3270 = vunpack.c.l.bf16 %v3248
  %v3271 = vunpack.c.h.bf16 %v3248
  %v3272 = vunpack.c.l.bf16 %v3249
  %v3273 = vunpack.c.h.bf16 %v3249
  %v3274 = vunpack.c.l.bf16 %v3250
  %v3275 = vunpack.c.h.bf16 %v3250
  %v3276 = vunpack.c.l.bf16 %v3251
  %v3277 = vunpack.c.h.bf16 %v3251
  %v3278 = vunpack.c.l.bf16 %v3252
  %v3279 = vunpack.c.h.bf16 %v3252
  %v3280 = vunpack.c.l.bf16 %v3253
  %v3281 = vunpack.c.h.bf16 %v3253
  %v3282 = vunpack.c.l.bf16 %v3254
  %v3283 = vunpack.c.h.bf16 %v3254
  %v3284 = vunpack.c.l.bf16 %v3255
  %v3285 = vunpack.c.h.bf16 %v3255
  %v3286 = vunpack.c.l.bf16 %v3256
  %v3287 = vunpack.c.h.bf16 %v3256
  %v3288 = vunpack.c.l.bf16 %v3257
  %v3289 = vunpack.c.h.bf16 %v3257
  %v3298 = vunpack.c.l.b16 %v3208
  %v3299 = vunpack.c.l.b16 %v3209
  %v3300 = vunpack.c.l.b16 %v3210
  %v3301 = vunpack.c.l.b16 %v3211
  %v3302 = vunpack.c.l.b16 %v3212
  %v3303 = vunpack.c.l.b16 %v3213
  %v3304 = vunpack.c.l.b16 %v3214
  %v3305 = vunpack.c.l.b16 %v3215
  %v3306 = vrot.slane %v3298, 5
  %v3307 = vrot.slane %v3299, 4
  %v3308 = vsel %vm758, %v3307, %v3306
  %v3309 = vrot.slane %v3300, 3
  %v3310 = vsel %vm761, %v3309, %v3308
  %v3311 = vrot.slane %v3301, 2
  %v3312 = vsel %vm764, %v3311, %v3310
  %v3313 = vrot.slane %v3302, 1
  %v3314 = vsel %vm767, %v3313, %v3312
  %v3315 = vsel %vm770, %v3303, %v3314
  %v3316 = vrot.slane %v3304, 7
  %v3317 = vsel %vm773, %v3316, %v3315
  %v3318 = vrot.slane %v3305, 6
  %v3319 = vsel %vm776, %v3318, %v3317
  %v3320 = vpack.c.b16 %v3319, %v3319
  %3322 = vmatprep.subr.bf16.mxu0 %v209
  %3323 = vmatpush1.bf16.msra.mxu0 %v208
  %3324 = vmatprep.subr.bf16.mxu0 %v213
  %3325 = vmatpush1.bf16.msra.mxu0 %v212
  %3326 = vmatprep.subr.bf16.mxu0 %v217
  %3327 = vmatpush1.bf16.msra.mxu0 %v216
  %3328 = vmatprep.subr.bf16.mxu0 %v221
  %3329 = vmatpush1.bf16.msra.mxu0 %v220
  %3330 = vmatprep.subr.bf16.mxu0 %v225
  %3331 = vmatpush1.bf16.msra.mxu0 %v224
  %3332 = vmatprep.subr.bf16.mxu0 %v229
  %3333 = vmatpush1.bf16.msra.mxu0 %v228
  %3334 = vmatprep.subr.bf16.mxu0 %v233
  %3335 = vmatpush1.bf16.msra.mxu0 %v232
  %3336 = vmatprep.subr.bf16.mxu0 %v237
  %3337 = vmatpush1.bf16.msra.mxu0 %v236
  %3338 = vmatprep.subr.bf16.mxu0 0
  %3339 = vmatpush1.bf16.msra.mxu0 0
  %3340 = vmatprep.subr.bf16.mxu0 0
  %3341 = vmatpush1.bf16.msra.mxu0 0
  %3342 = vmatprep.subr.bf16.mxu0 0
  %3343 = vmatpush1.bf16.msra.mxu0 0
  %3344 = vmatprep.subr.bf16.mxu0 0
  %3345 = vmatpush1.bf16.msra.mxu0 0
  %3346 = vmatprep.subr.bf16.mxu0 0
  %3347 = vmatpush1.bf16.msra.mxu0 0
  %3348 = vmatprep.subr.bf16.mxu0 0
  %3349 = vmatpush1.bf16.msra.mxu0 0
  %3350 = vmatprep.subr.bf16.mxu0 0
  %3351 = vmatpush1.bf16.msra.mxu0 0
  %3352 = vmatprep.subr.bf16.mxu0 0
  %3353 = vmatpush1.bf16.msra.mxu0 0
  %3354 = vmatprep.mubr.bf16.mxu0 0
  %3355 = vmatmul.mubr.bf16.gmra.mrb[0].mxu0 %v3320
  %v3356 = vpop.f32.mrb[0].mxu0
  %v3357 = vadd.f32 0.0, %v3356
  %v3358 = vpop.f32.mrb[0].mxu0
  %v3359 = vadd.f32 0.0, %v3358
  %v3360 = vpop.f32.mrb[0].mxu0
  %v3361 = vpop.f32.mrb[0].mxu0
  %3362 = vdwg.mxu0
  %3363 = vmatprep.subr.bf16.mxu0 %v211
  %3364 = vmatpush1.bf16.msra.mxu0 %v210
  %3365 = vmatprep.subr.bf16.mxu0 %v215
  %3366 = vmatpush1.bf16.msra.mxu0 %v214
  %3367 = vmatprep.subr.bf16.mxu0 %v219
  %3368 = vmatpush1.bf16.msra.mxu0 %v218
  %3369 = vmatprep.subr.bf16.mxu0 %v223
  %3370 = vmatpush1.bf16.msra.mxu0 %v222
  %3371 = vmatprep.subr.bf16.mxu0 %v227
  %3372 = vmatpush1.bf16.msra.mxu0 %v226
  %3373 = vmatprep.subr.bf16.mxu0 %v231
  %3374 = vmatpush1.bf16.msra.mxu0 %v230
  %3375 = vmatprep.subr.bf16.mxu0 %v235
  %3376 = vmatpush1.bf16.msra.mxu0 %v234
  %3377 = vmatprep.subr.bf16.mxu0 %v239
  %3378 = vmatpush1.bf16.msra.mxu0 %v238
  %3379 = vmatprep.subr.bf16.mxu0 0
  %3380 = vmatpush1.bf16.msra.mxu0 0
  %3381 = vmatprep.subr.bf16.mxu0 0
  %3382 = vmatpush1.bf16.msra.mxu0 0
  %3383 = vmatprep.subr.bf16.mxu0 0
  %3384 = vmatpush1.bf16.msra.mxu0 0
  %3385 = vmatprep.subr.bf16.mxu0 0
  %3386 = vmatpush1.bf16.msra.mxu0 0
  %3387 = vmatprep.subr.bf16.mxu0 0
  %3388 = vmatpush1.bf16.msra.mxu0 0
  %3389 = vmatprep.subr.bf16.mxu0 0
  %3390 = vmatpush1.bf16.msra.mxu0 0
  %3391 = vmatprep.subr.bf16.mxu0 0
  %3392 = vmatpush1.bf16.msra.mxu0 0
  %3393 = vmatprep.subr.bf16.mxu0 0
  %3394 = vmatpush1.bf16.msra.mxu0 0
  %3395 = vmatprep.mubr.bf16.mxu0 0
  %3396 = vmatmul.mubr.bf16.gmra.mrb[0].mxu0 %v3320
  %v3397 = vpop.f32.mrb[0].mxu0
  %v3398 = vadd.f32 0.0, %v3397
  %v3399 = vpop.f32.mrb[0].mxu0
  %v3400 = vadd.f32 0.0, %v3399
  %v3401 = vpop.f32.mrb[0].mxu0
  %v3402 = vpop.f32.mrb[0].mxu0
  %3403 = vdwg.mxu0
  %v3408 = vrot.slane %v3357, 2
  %v3409 = vrot.slane %v3359, 2
  %v3410 = vrot.slane %v3398, 2
  %v3411 = vrot.slane %v3400, 2
  %v3412 = vrot.slane %v3357, 3
  %v3413 = vrot.slane %v3359, 3
  %v3414 = vrot.slane %v3398, 3
  %v3415 = vrot.slane %v3400, 3
  %v3416 = vrot.slane %v3357, 4
  %v3417 = vrot.slane %v3359, 4
  %v3418 = vrot.slane %v3398, 4
  %v3419 = vrot.slane %v3400, 4
  %v3420 = vrot.slane %v3357, 5
  %v3421 = vrot.slane %v3359, 5
  %v3422 = vrot.slane %v3398, 5
  %v3423 = vrot.slane %v3400, 5
  %v3424 = vrot.slane %v3357, 6
  %v3425 = vrot.slane %v3359, 6
  %v3426 = vrot.slane %v3398, 6
  %v3427 = vrot.slane %v3400, 6
  %v3428 = vrot.slane %v3357, 7
  %v3429 = vrot.slane %v3359, 7
  %v3430 = vrot.slane %v3398, 7
  %v3431 = vrot.slane %v3400, 7
  %v3432 = vrot.slane %v3357, 1
  %v3433 = vrot.slane %v3359, 1
  %v3434 = vrot.slane %v3398, 1
  %v3435 = vrot.slane %v3400, 1
  %v3468 = vadd.f32 %v3258, %v3408
  %v3469 = vadd.f32 %v3259, %v3409
  %v3470 = vadd.f32 %v3260, %v3410
  %v3471 = vadd.f32 %v3261, %v3411
  %v3472 = vadd.f32 %v3262, %v3412
  %v3473 = vadd.f32 %v3263, %v3413
  %v3474 = vadd.f32 %v3264, %v3414
  %v3475 = vadd.f32 %v3265, %v3415
  %v3476 = vadd.f32 %v3266, %v3416
  %v3477 = vadd.f32 %v3267, %v3417
  %v3478 = vadd.f32 %v3268, %v3418
  %v3479 = vadd.f32 %v3269, %v3419
  %v3480 = vadd.f32 %v3270, %v3420
  %v3481 = vadd.f32 %v3271, %v3421
  %v3482 = vadd.f32 %v3272, %v3422
  %v3483 = vadd.f32 %v3273, %v3423
  %v3484 = vadd.f32 %v3274, %v3424
  %v3485 = vadd.f32 %v3275, %v3425
  %v3486 = vadd.f32 %v3276, %v3426
  %v3487 = vadd.f32 %v3277, %v3427
  %v3488 = vadd.f32 %v3278, %v3428
  %v3489 = vadd.f32 %v3279, %v3429
  %v3490 = vadd.f32 %v3280, %v3430
  %v3491 = vadd.f32 %v3281, %v3431
  %v3492 = vadd.f32 %v3282, %v3357
  %v3493 = vadd.f32 %v3283, %v3359
  %v3494 = vadd.f32 %v3284, %v3398
  %v3495 = vadd.f32 %v3285, %v3400
  %v3496 = vadd.f32 %v3286, %v3432
  %v3497 = vadd.f32 %v3287, %v3433
  %v3498 = vadd.f32 %v3288, %v3434
  %v3499 = vadd.f32 %v3289, %v3435
  %v3500 = vxor.u32 %v3468, 2147483648
  %v3501 = vxor.u32 %v3472, 2147483648
  %v3502 = vxor.u32 %v3476, 2147483648
  %v3503 = vxor.u32 %v3480, 2147483648
  %v3504 = vxor.u32 %v3484, 2147483648
  %v3505 = vxor.u32 %v3488, 2147483648
  %v3506 = vxor.u32 %v3492, 2147483648
  %v3507 = vxor.u32 %v3496, 2147483648
  %v3508 = vmul.f32 %v3500, 1.442695
  %v3509 = vpow.pop %v3508
  %v3510 = vmul.f32 %v3501, 1.442695
  %v3511 = vpow.pop %v3510
  %v3512 = vmul.f32 %v3502, 1.442695
  %v3513 = vpow.pop %v3512
  %v3514 = vmul.f32 %v3503, 1.442695
  %v3515 = vpow.pop %v3514
  %v3516 = vmul.f32 %v3504, 1.442695
  %v3517 = vpow.pop %v3516
  %v3518 = vmul.f32 %v3505, 1.442695
  %v3519 = vpow.pop %v3518
  %v3520 = vmul.f32 %v3506, 1.442695
  %v3521 = vpow.pop %v3520
  %v3522 = vmul.f32 %v3507, 1.442695
  %v3523 = vpow.pop %v3522
  %v3524 = vadd.f32 %v3509, 1.0
  %v3525 = vadd.f32 %v3511, 1.0
  %v3526 = vadd.f32 %v3513, 1.0
  %v3527 = vadd.f32 %v3515, 1.0
  %v3528 = vadd.f32 %v3517, 1.0
  %v3529 = vadd.f32 %v3519, 1.0
  %v3530 = vadd.f32 %v3521, 1.0
  %v3531 = vadd.f32 %v3523, 1.0
  %v3532 = vrcp.pop %v3524
  %v3533 = vmul.f32 1.0, %v3532
  %v3534 = vrcp.pop %v3525
  %v3535 = vmul.f32 1.0, %v3534
  %v3536 = vrcp.pop %v3526
  %v3537 = vmul.f32 1.0, %v3536
  %v3538 = vrcp.pop %v3527
  %v3539 = vmul.f32 1.0, %v3538
  %v3540 = vrcp.pop %v3528
  %v3541 = vmul.f32 1.0, %v3540
  %v3542 = vrcp.pop %v3529
  %v3543 = vmul.f32 1.0, %v3542
  %v3544 = vrcp.pop %v3530
  %v3545 = vmul.f32 1.0, %v3544
  %v3546 = vrcp.pop %v3531
  %v3547 = vmul.f32 1.0, %v3546
  %v3548 = vxor.u32 %v3469, 2147483648
  %v3549 = vxor.u32 %v3473, 2147483648
  %v3550 = vxor.u32 %v3477, 2147483648
  %v3551 = vxor.u32 %v3481, 2147483648
  %v3552 = vxor.u32 %v3485, 2147483648
  %v3553 = vxor.u32 %v3489, 2147483648
  %v3554 = vxor.u32 %v3493, 2147483648
  %v3555 = vxor.u32 %v3497, 2147483648
  %v3556 = vmul.f32 %v3548, 1.442695
  %v3557 = vpow.pop %v3556
  %v3558 = vmul.f32 %v3549, 1.442695
  %v3559 = vpow.pop %v3558
  %v3560 = vmul.f32 %v3550, 1.442695
  %v3561 = vpow.pop %v3560
  %v3562 = vmul.f32 %v3551, 1.442695
  %v3563 = vpow.pop %v3562
  %v3564 = vmul.f32 %v3552, 1.442695
  %v3565 = vpow.pop %v3564
  %v3566 = vmul.f32 %v3553, 1.442695
  %v3567 = vpow.pop %v3566
  %v3568 = vmul.f32 %v3554, 1.442695
  %v3569 = vpow.pop %v3568
  %v3570 = vmul.f32 %v3555, 1.442695
  %v3571 = vpow.pop %v3570
  %v3572 = vadd.f32 %v3557, 1.0
  %v3573 = vadd.f32 %v3559, 1.0
  %v3574 = vadd.f32 %v3561, 1.0
  %v3575 = vadd.f32 %v3563, 1.0
  %v3576 = vadd.f32 %v3565, 1.0
  %v3577 = vadd.f32 %v3567, 1.0
  %v3578 = vadd.f32 %v3569, 1.0
  %v3579 = vadd.f32 %v3571, 1.0
  %v3580 = vrcp.pop %v3572
  %v3581 = vmul.f32 1.0, %v3580
  %v3582 = vrcp.pop %v3573
  %v3583 = vmul.f32 1.0, %v3582
  %v3584 = vrcp.pop %v3574
  %v3585 = vmul.f32 1.0, %v3584
  %v3586 = vrcp.pop %v3575
  %v3587 = vmul.f32 1.0, %v3586
  %v3588 = vrcp.pop %v3576
  %v3589 = vmul.f32 1.0, %v3588
  %v3590 = vrcp.pop %v3577
  %v3591 = vmul.f32 1.0, %v3590
  %v3592 = vrcp.pop %v3578
  %v3593 = vmul.f32 1.0, %v3592
  %v3594 = vrcp.pop %v3579
  %v3595 = vmul.f32 1.0, %v3594
  %v3596 = vtanh.pop %v3470
  %v3597 = vtanh.pop %v3474
  %v3598 = vtanh.pop %v3478
  %v3599 = vtanh.pop %v3482
  %v3600 = vtanh.pop %v3486
  %v3601 = vtanh.pop %v3490
  %v3602 = vtanh.pop %v3494
  %v3603 = vtanh.pop %v3498
  %v3604 = vxor.u32 %v3471, 2147483648
  %v3605 = vxor.u32 %v3475, 2147483648
  %v3606 = vxor.u32 %v3479, 2147483648
  %v3607 = vxor.u32 %v3483, 2147483648
  %v3608 = vxor.u32 %v3487, 2147483648
  %v3609 = vxor.u32 %v3491, 2147483648
  %v3610 = vxor.u32 %v3495, 2147483648
  %v3611 = vxor.u32 %v3499, 2147483648
  %v3612 = vmul.f32 %v3604, 1.442695
  %v3613 = vpow.pop %v3612
  %v3614 = vmul.f32 %v3605, 1.442695
  %v3615 = vpow.pop %v3614
  %v3616 = vmul.f32 %v3606, 1.442695
  %v3617 = vpow.pop %v3616
  %v3618 = vmul.f32 %v3607, 1.442695
  %v3619 = vpow.pop %v3618
  %v3620 = vmul.f32 %v3608, 1.442695
  %v3621 = vpow.pop %v3620
  %v3622 = vmul.f32 %v3609, 1.442695
  %v3623 = vpow.pop %v3622
  %v3624 = vmul.f32 %v3610, 1.442695
  %v3625 = vpow.pop %v3624
  %v3626 = vmul.f32 %v3611, 1.442695
  %v3627 = vpow.pop %v3626
  %v3628 = vadd.f32 %v3613, 1.0
  %v3629 = vadd.f32 %v3615, 1.0
  %v3630 = vadd.f32 %v3617, 1.0
  %v3631 = vadd.f32 %v3619, 1.0
  %v3632 = vadd.f32 %v3621, 1.0
  %v3633 = vadd.f32 %v3623, 1.0
  %v3634 = vadd.f32 %v3625, 1.0
  %v3635 = vadd.f32 %v3627, 1.0
  %v3636 = vrcp.pop %v3628
  %v3637 = vmul.f32 1.0, %v3636
  %v3638 = vrcp.pop %v3629
  %v3639 = vmul.f32 1.0, %v3638
  %v3640 = vrcp.pop %v3630
  %v3641 = vmul.f32 1.0, %v3640
  %v3642 = vrcp.pop %v3631
  %v3643 = vmul.f32 1.0, %v3642
  %v3644 = vrcp.pop %v3632
  %v3645 = vmul.f32 1.0, %v3644
  %v3646 = vrcp.pop %v3633
  %v3647 = vmul.f32 1.0, %v3646
  %v3648 = vrcp.pop %v3634
  %v3649 = vmul.f32 1.0, %v3648
  %v3650 = vrcp.pop %v3635
  %v3651 = vmul.f32 1.0, %v3650
  %v3660 = vrot.slane %v3184, 7
  %v3661 = vrot.slane %v3185, 7
  %v3662 = vrot.slane %v3186, 7
  %v3663 = vrot.slane %v3187, 7
  %v3664 = vrot.slane %v3188, 7
  %v3665 = vrot.slane %v3189, 7
  %v3666 = vrot.slane %v3190, 7
  %v3667 = vrot.slane %v3191, 7
  %v3676 = vmul.f32 %v3581, %v3660
  %v3677 = vmul.f32 %v3583, %v3661
  %v3678 = vmul.f32 %v3585, %v3662
  %v3679 = vmul.f32 %v3587, %v3663
  %v3680 = vmul.f32 %v3589, %v3664
  %v3681 = vmul.f32 %v3591, %v3665
  %v3682 = vmul.f32 %v3593, %v3666
  %v3683 = vmul.f32 %v3595, %v3667
  %v3684 = vmul.f32 %v3533, %v3596
  %v3685 = vmul.f32 %v3535, %v3597
  %v3686 = vmul.f32 %v3537, %v3598
  %v3687 = vmul.f32 %v3539, %v3599
  %v3688 = vmul.f32 %v3541, %v3600
  %v3689 = vmul.f32 %v3543, %v3601
  %v3690 = vmul.f32 %v3545, %v3602
  %v3691 = vmul.f32 %v3547, %v3603
  %v3692 = vadd.f32 %v3676, %v3684
  %v3693 = vadd.f32 %v3677, %v3685
  %v3694 = vadd.f32 %v3678, %v3686
  %v3695 = vadd.f32 %v3679, %v3687
  %v3696 = vadd.f32 %v3680, %v3688
  %v3697 = vadd.f32 %v3681, %v3689
  %v3698 = vadd.f32 %v3682, %v3690
  %v3699 = vadd.f32 %v3683, %v3691
  %v3700 = vtanh.pop %v3692
  %v3701 = vtanh.pop %v3693
  %v3702 = vtanh.pop %v3694
  %v3703 = vtanh.pop %v3695
  %v3704 = vtanh.pop %v3696
  %v3705 = vtanh.pop %v3697
  %v3706 = vtanh.pop %v3698
  %v3707 = vtanh.pop %v3699
  %v3708 = vmul.f32 %v3637, %v3700
  %v3709 = vmul.f32 %v3639, %v3701
  %v3710 = vmul.f32 %v3641, %v3702
  %v3711 = vmul.f32 %v3643, %v3703
  %v3712 = vmul.f32 %v3645, %v3704
  %v3713 = vmul.f32 %v3647, %v3705
  %v3714 = vmul.f32 %v3649, %v3706
  %v3715 = vmul.f32 %v3651, %v3707
  %v3716 = vpack.c.bf16 %v3708, %v3708
  %v3717 = vpack.c.bf16 %v3709, %v3709
  %v3718 = vpack.c.bf16 %v3710, %v3710
  %v3719 = vpack.c.bf16 %v3711, %v3711
  %v3720 = vpack.c.bf16 %v3712, %v3712
  %v3721 = vpack.c.bf16 %v3713, %v3713
  %v3722 = vpack.c.bf16 %v3714, %v3714
  %v3723 = vpack.c.bf16 %v3715, %v3715
  %vm3724 = vcmask 1043459
  %vm3725 = vsmask.f32 3328
  %vm3726 = vmand %vm3724, %vm3725
  %v3727 = vld [vmem:[%s4] sm:$0x8]
  %v3728 = vsel %vm3726, %v3716, %v3727
  %3729 = vst [vmem:[%s4] sm:$0x8] %v3728
  %v3730 = vld [vmem:[%s4 + $0x4] sm:$0x8]
  %v3731 = vsel %vm3726, %v3717, %v3730
  %3732 = vst [vmem:[%s4 + $0x4] sm:$0x8] %v3731
  %v3733 = vld [vmem:[%s4 + $0x8] sm:$0x8]
  %v3734 = vsel %vm3726, %v3718, %v3733
  %3735 = vst [vmem:[%s4 + $0x8] sm:$0x8] %v3734
  %v3736 = vld [vmem:[%s4 + $0xc] sm:$0x8]
  %v3737 = vsel %vm3726, %v3719, %v3736
  %3738 = vst [vmem:[%s4 + $0xc] sm:$0x8] %v3737
  %v3739 = vld [vmem:[%s4 + $0x10] sm:$0x8]
  %v3740 = vsel %vm3726, %v3720, %v3739
  %3741 = vst [vmem:[%s4 + $0x10] sm:$0x8] %v3740
  %v3742 = vld [vmem:[%s4 + $0x14] sm:$0x8]
  %v3743 = vsel %vm3726, %v3721, %v3742
  %3744 = vst [vmem:[%s4 + $0x14] sm:$0x8] %v3743
  %v3745 = vld [vmem:[%s4 + $0x18] sm:$0x8]
  %v3746 = vsel %vm3726, %v3722, %v3745
  %3747 = vst [vmem:[%s4 + $0x18] sm:$0x8] %v3746
  %v3748 = vld [vmem:[%s4 + $0x1c] sm:$0x8]
  %v3749 = vsel %vm3726, %v3723, %v3748
  %3750 = vst [vmem:[%s4 + $0x1c] sm:$0x8] %v3749
  %v3751 = vld [vmem:[%s0] sm:$0x88]
  %v3752 = vld [vmem:[%s0 + $0x8] sm:$0x88]
  %v3753 = vld [vmem:[%s0 + $0x10] sm:$0x88]
  %v3754 = vld [vmem:[%s0 + $0x18] sm:$0x88]
  %v3755 = vld [vmem:[%s0 + $0x20] sm:$0x88]
  %v3756 = vld [vmem:[%s0 + $0x28] sm:$0x88]
  %v3757 = vld [vmem:[%s0 + $0x30] sm:$0x88]
  %v3758 = vld [vmem:[%s0 + $0x38] sm:$0x88]
  %v3759 = vld [vmem:[%s0 + $0x40] sm:$0x88]
  %v3760 = vld [vmem:[%s0 + $0x48] sm:$0x88]
  %v3761 = vld [vmem:[%s0 + $0x50] sm:$0x88]
  %v3762 = vld [vmem:[%s0 + $0x58] sm:$0x88]
  %v3763 = vld [vmem:[%s0 + $0x60] sm:$0x88]
  %v3764 = vld [vmem:[%s0 + $0x68] sm:$0x88]
  %v3765 = vld [vmem:[%s0 + $0x70] sm:$0x88]
  %v3766 = vld [vmem:[%s0 + $0x78] sm:$0x88]
  %v3767 = vunpack.c.l.bf16 %v3751
  %v3768 = vunpack.c.h.bf16 %v3751
  %v3769 = vunpack.c.l.bf16 %v3752
  %v3770 = vunpack.c.h.bf16 %v3752
  %v3771 = vunpack.c.l.bf16 %v3753
  %v3772 = vunpack.c.h.bf16 %v3753
  %v3773 = vunpack.c.l.bf16 %v3754
  %v3774 = vunpack.c.h.bf16 %v3754
  %v3775 = vunpack.c.l.bf16 %v3755
  %v3776 = vunpack.c.h.bf16 %v3755
  %v3777 = vunpack.c.l.bf16 %v3756
  %v3778 = vunpack.c.h.bf16 %v3756
  %v3779 = vunpack.c.l.bf16 %v3757
  %v3780 = vunpack.c.h.bf16 %v3757
  %v3781 = vunpack.c.l.bf16 %v3758
  %v3782 = vunpack.c.h.bf16 %v3758
  %v3783 = vunpack.c.l.bf16 %v3759
  %v3784 = vunpack.c.h.bf16 %v3759
  %v3785 = vunpack.c.l.bf16 %v3760
  %v3786 = vunpack.c.h.bf16 %v3760
  %v3787 = vunpack.c.l.bf16 %v3761
  %v3788 = vunpack.c.h.bf16 %v3761
  %v3789 = vunpack.c.l.bf16 %v3762
  %v3790 = vunpack.c.h.bf16 %v3762
  %v3791 = vunpack.c.l.bf16 %v3763
  %v3792 = vunpack.c.h.bf16 %v3763
  %v3793 = vunpack.c.l.bf16 %v3764
  %v3794 = vunpack.c.h.bf16 %v3764
  %v3795 = vunpack.c.l.bf16 %v3765
  %v3796 = vunpack.c.h.bf16 %v3765
  %v3797 = vunpack.c.l.bf16 %v3766
  %v3798 = vunpack.c.h.bf16 %v3766
  %v3807 = vunpack.c.l.b16 %v3716
  %v3808 = vunpack.c.l.b16 %v3717
  %v3809 = vunpack.c.l.b16 %v3718
  %v3810 = vunpack.c.l.b16 %v3719
  %v3811 = vunpack.c.l.b16 %v3720
  %v3812 = vunpack.c.l.b16 %v3721
  %v3813 = vunpack.c.l.b16 %v3722
  %v3814 = vunpack.c.l.b16 %v3723
  %v3815 = vrot.slane %v3807, 6
  %v3816 = vrot.slane %v3808, 5
  %v3817 = vsel %vm758, %v3816, %v3815
  %v3818 = vrot.slane %v3809, 4
  %v3819 = vsel %vm761, %v3818, %v3817
  %v3820 = vrot.slane %v3810, 3
  %v3821 = vsel %vm764, %v3820, %v3819
  %v3822 = vrot.slane %v3811, 2
  %v3823 = vsel %vm767, %v3822, %v3821
  %v3824 = vrot.slane %v3812, 1
  %v3825 = vsel %vm770, %v3824, %v3823
  %v3826 = vsel %vm773, %v3813, %v3825
  %v3827 = vrot.slane %v3814, 7
  %v3828 = vsel %vm776, %v3827, %v3826
  %v3829 = vpack.c.b16 %v3828, %v3828
  %3831 = vmatprep.subr.bf16.mxu0 %v209
  %3832 = vmatpush1.bf16.msra.mxu0 %v208
  %3833 = vmatprep.subr.bf16.mxu0 %v213
  %3834 = vmatpush1.bf16.msra.mxu0 %v212
  %3835 = vmatprep.subr.bf16.mxu0 %v217
  %3836 = vmatpush1.bf16.msra.mxu0 %v216
  %3837 = vmatprep.subr.bf16.mxu0 %v221
  %3838 = vmatpush1.bf16.msra.mxu0 %v220
  %3839 = vmatprep.subr.bf16.mxu0 %v225
  %3840 = vmatpush1.bf16.msra.mxu0 %v224
  %3841 = vmatprep.subr.bf16.mxu0 %v229
  %3842 = vmatpush1.bf16.msra.mxu0 %v228
  %3843 = vmatprep.subr.bf16.mxu0 %v233
  %3844 = vmatpush1.bf16.msra.mxu0 %v232
  %3845 = vmatprep.subr.bf16.mxu0 %v237
  %3846 = vmatpush1.bf16.msra.mxu0 %v236
  %3847 = vmatprep.subr.bf16.mxu0 0
  %3848 = vmatpush1.bf16.msra.mxu0 0
  %3849 = vmatprep.subr.bf16.mxu0 0
  %3850 = vmatpush1.bf16.msra.mxu0 0
  %3851 = vmatprep.subr.bf16.mxu0 0
  %3852 = vmatpush1.bf16.msra.mxu0 0
  %3853 = vmatprep.subr.bf16.mxu0 0
  %3854 = vmatpush1.bf16.msra.mxu0 0
  %3855 = vmatprep.subr.bf16.mxu0 0
  %3856 = vmatpush1.bf16.msra.mxu0 0
  %3857 = vmatprep.subr.bf16.mxu0 0
  %3858 = vmatpush1.bf16.msra.mxu0 0
  %3859 = vmatprep.subr.bf16.mxu0 0
  %3860 = vmatpush1.bf16.msra.mxu0 0
  %3861 = vmatprep.subr.bf16.mxu0 0
  %3862 = vmatpush1.bf16.msra.mxu0 0
  %3863 = vmatprep.mubr.bf16.mxu0 0
  %3864 = vmatmul.mubr.bf16.gmra.mrb[0].mxu0 %v3829
  %v3865 = vpop.f32.mrb[0].mxu0
  %v3866 = vadd.f32 0.0, %v3865
  %v3867 = vpop.f32.mrb[0].mxu0
  %v3868 = vadd.f32 0.0, %v3867
  %v3869 = vpop.f32.mrb[0].mxu0
  %v3870 = vpop.f32.mrb[0].mxu0
  %3871 = vdwg.mxu0
  %3872 = vmatprep.subr.bf16.mxu0 %v211
  %3873 = vmatpush1.bf16.msra.mxu0 %v210
  %3874 = vmatprep.subr.bf16.mxu0 %v215
  %3875 = vmatpush1.bf16.msra.mxu0 %v214
  %3876 = vmatprep.subr.bf16.mxu0 %v219
  %3877 = vmatpush1.bf16.msra.mxu0 %v218
  %3878 = vmatprep.subr.bf16.mxu0 %v223
  %3879 = vmatpush1.bf16.msra.mxu0 %v222
  %3880 = vmatprep.subr.bf16.mxu0 %v227
  %3881 = vmatpush1.bf16.msra.mxu0 %v226
  %3882 = vmatprep.subr.bf16.mxu0 %v231
  %3883 = vmatpush1.bf16.msra.mxu0 %v230
  %3884 = vmatprep.subr.bf16.mxu0 %v235
  %3885 = vmatpush1.bf16.msra.mxu0 %v234
  %3886 = vmatprep.subr.bf16.mxu0 %v239
  %3887 = vmatpush1.bf16.msra.mxu0 %v238
  %3888 = vmatprep.subr.bf16.mxu0 0
  %3889 = vmatpush1.bf16.msra.mxu0 0
  %3890 = vmatprep.subr.bf16.mxu0 0
  %3891 = vmatpush1.bf16.msra.mxu0 0
  %3892 = vmatprep.subr.bf16.mxu0 0
  %3893 = vmatpush1.bf16.msra.mxu0 0
  %3894 = vmatprep.subr.bf16.mxu0 0
  %3895 = vmatpush1.bf16.msra.mxu0 0
  %3896 = vmatprep.subr.bf16.mxu0 0
  %3897 = vmatpush1.bf16.msra.mxu0 0
  %3898 = vmatprep.subr.bf16.mxu0 0
  %3899 = vmatpush1.bf16.msra.mxu0 0
  %3900 = vmatprep.subr.bf16.mxu0 0
  %3901 = vmatpush1.bf16.msra.mxu0 0
  %3902 = vmatprep.subr.bf16.mxu0 0
  %3903 = vmatpush1.bf16.msra.mxu0 0
  %3904 = vmatprep.mubr.bf16.mxu0 0
  %3905 = vmatmul.mubr.bf16.gmra.mrb[0].mxu0 %v3829
  %v3906 = vpop.f32.mrb[0].mxu0
  %v3907 = vadd.f32 0.0, %v3906
  %v3908 = vpop.f32.mrb[0].mxu0
  %v3909 = vadd.f32 0.0, %v3908
  %v3910 = vpop.f32.mrb[0].mxu0
  %v3911 = vpop.f32.mrb[0].mxu0
  %3912 = vdwg.mxu0
  %v3917 = vrot.slane %v3866, 1
  %v3918 = vrot.slane %v3868, 1
  %v3919 = vrot.slane %v3907, 1
  %v3920 = vrot.slane %v3909, 1
  %v3921 = vrot.slane %v3866, 2
  %v3922 = vrot.slane %v3868, 2
  %v3923 = vrot.slane %v3907, 2
  %v3924 = vrot.slane %v3909, 2
  %v3925 = vrot.slane %v3866, 3
  %v3926 = vrot.slane %v3868, 3
  %v3927 = vrot.slane %v3907, 3
  %v3928 = vrot.slane %v3909, 3
  %v3929 = vrot.slane %v3866, 4
  %v3930 = vrot.slane %v3868, 4
  %v3931 = vrot.slane %v3907, 4
  %v3932 = vrot.slane %v3909, 4
  %v3933 = vrot.slane %v3866, 5
  %v3934 = vrot.slane %v3868, 5
  %v3935 = vrot.slane %v3907, 5
  %v3936 = vrot.slane %v3909, 5
  %v3937 = vrot.slane %v3866, 6
  %v3938 = vrot.slane %v3868, 6
  %v3939 = vrot.slane %v3907, 6
  %v3940 = vrot.slane %v3909, 6
  %v3941 = vrot.slane %v3866, 7
  %v3942 = vrot.slane %v3868, 7
  %v3943 = vrot.slane %v3907, 7
  %v3944 = vrot.slane %v3909, 7
  %v3977 = vadd.f32 %v3767, %v3917
  %v3978 = vadd.f32 %v3768, %v3918
  %v3979 = vadd.f32 %v3769, %v3919
  %v3980 = vadd.f32 %v3770, %v3920
  %v3981 = vadd.f32 %v3771, %v3921
  %v3982 = vadd.f32 %v3772, %v3922
  %v3983 = vadd.f32 %v3773, %v3923
  %v3984 = vadd.f32 %v3774, %v3924
  %v3985 = vadd.f32 %v3775, %v3925
  %v3986 = vadd.f32 %v3776, %v3926
  %v3987 = vadd.f32 %v3777, %v3927
  %v3988 = vadd.f32 %v3778, %v3928
  %v3989 = vadd.f32 %v3779, %v3929
  %v3990 = vadd.f32 %v3780, %v3930
  %v3991 = vadd.f32 %v3781, %v3931
  %v3992 = vadd.f32 %v3782, %v3932
  %v3993 = vadd.f32 %v3783, %v3933
  %v3994 = vadd.f32 %v3784, %v3934
  %v3995 = vadd.f32 %v3785, %v3935
  %v3996 = vadd.f32 %v3786, %v3936
  %v3997 = vadd.f32 %v3787, %v3937
  %v3998 = vadd.f32 %v3788, %v3938
  %v3999 = vadd.f32 %v3789, %v3939
  %v4000 = vadd.f32 %v3790, %v3940
  %v4001 = vadd.f32 %v3791, %v3941
  %v4002 = vadd.f32 %v3792, %v3942
  %v4003 = vadd.f32 %v3793, %v3943
  %v4004 = vadd.f32 %v3794, %v3944
  %v4005 = vadd.f32 %v3795, %v3866
  %v4006 = vadd.f32 %v3796, %v3868
  %v4007 = vadd.f32 %v3797, %v3907
  %v4008 = vadd.f32 %v3798, %v3909
  %v4009 = vxor.u32 %v3977, 2147483648
  %v4010 = vxor.u32 %v3981, 2147483648
  %v4011 = vxor.u32 %v3985, 2147483648
  %v4012 = vxor.u32 %v3989, 2147483648
  %v4013 = vxor.u32 %v3993, 2147483648
  %v4014 = vxor.u32 %v3997, 2147483648
  %v4015 = vxor.u32 %v4001, 2147483648
  %v4016 = vxor.u32 %v4005, 2147483648
  %v4017 = vmul.f32 %v4009, 1.442695
  %v4018 = vpow.pop %v4017
  %v4019 = vmul.f32 %v4010, 1.442695
  %v4020 = vpow.pop %v4019
  %v4021 = vmul.f32 %v4011, 1.442695
  %v4022 = vpow.pop %v4021
  %v4023 = vmul.f32 %v4012, 1.442695
  %v4024 = vpow.pop %v4023
  %v4025 = vmul.f32 %v4013, 1.442695
  %v4026 = vpow.pop %v4025
  %v4027 = vmul.f32 %v4014, 1.442695
  %v4028 = vpow.pop %v4027
  %v4029 = vmul.f32 %v4015, 1.442695
  %v4030 = vpow.pop %v4029
  %v4031 = vmul.f32 %v4016, 1.442695
  %v4032 = vpow.pop %v4031
  %v4033 = vadd.f32 %v4018, 1.0
  %v4034 = vadd.f32 %v4020, 1.0
  %v4035 = vadd.f32 %v4022, 1.0
  %v4036 = vadd.f32 %v4024, 1.0
  %v4037 = vadd.f32 %v4026, 1.0
  %v4038 = vadd.f32 %v4028, 1.0
  %v4039 = vadd.f32 %v4030, 1.0
  %v4040 = vadd.f32 %v4032, 1.0
  %v4041 = vrcp.pop %v4033
  %v4042 = vmul.f32 1.0, %v4041
  %v4043 = vrcp.pop %v4034
  %v4044 = vmul.f32 1.0, %v4043
  %v4045 = vrcp.pop %v4035
  %v4046 = vmul.f32 1.0, %v4045
  %v4047 = vrcp.pop %v4036
  %v4048 = vmul.f32 1.0, %v4047
  %v4049 = vrcp.pop %v4037
  %v4050 = vmul.f32 1.0, %v4049
  %v4051 = vrcp.pop %v4038
  %v4052 = vmul.f32 1.0, %v4051
  %v4053 = vrcp.pop %v4039
  %v4054 = vmul.f32 1.0, %v4053
  %v4055 = vrcp.pop %v4040
  %v4056 = vmul.f32 1.0, %v4055
  %v4057 = vxor.u32 %v3978, 2147483648
  %v4058 = vxor.u32 %v3982, 2147483648
  %v4059 = vxor.u32 %v3986, 2147483648
  %v4060 = vxor.u32 %v3990, 2147483648
  %v4061 = vxor.u32 %v3994, 2147483648
  %v4062 = vxor.u32 %v3998, 2147483648
  %v4063 = vxor.u32 %v4002, 2147483648
  %v4064 = vxor.u32 %v4006, 2147483648
  %v4065 = vmul.f32 %v4057, 1.442695
  %v4066 = vpow.pop %v4065
  %v4067 = vmul.f32 %v4058, 1.442695
  %v4068 = vpow.pop %v4067
  %v4069 = vmul.f32 %v4059, 1.442695
  %v4070 = vpow.pop %v4069
  %v4071 = vmul.f32 %v4060, 1.442695
  %v4072 = vpow.pop %v4071
  %v4073 = vmul.f32 %v4061, 1.442695
  %v4074 = vpow.pop %v4073
  %v4075 = vmul.f32 %v4062, 1.442695
  %v4076 = vpow.pop %v4075
  %v4077 = vmul.f32 %v4063, 1.442695
  %v4078 = vpow.pop %v4077
  %v4079 = vmul.f32 %v4064, 1.442695
  %v4080 = vpow.pop %v4079
  %v4081 = vadd.f32 %v4066, 1.0
  %v4082 = vadd.f32 %v4068, 1.0
  %v4083 = vadd.f32 %v4070, 1.0
  %v4084 = vadd.f32 %v4072, 1.0
  %v4085 = vadd.f32 %v4074, 1.0
  %v4086 = vadd.f32 %v4076, 1.0
  %v4087 = vadd.f32 %v4078, 1.0
  %v4088 = vadd.f32 %v4080, 1.0
  %v4089 = vrcp.pop %v4081
  %v4090 = vmul.f32 1.0, %v4089
  %v4091 = vrcp.pop %v4082
  %v4092 = vmul.f32 1.0, %v4091
  %v4093 = vrcp.pop %v4083
  %v4094 = vmul.f32 1.0, %v4093
  %v4095 = vrcp.pop %v4084
  %v4096 = vmul.f32 1.0, %v4095
  %v4097 = vrcp.pop %v4085
  %v4098 = vmul.f32 1.0, %v4097
  %v4099 = vrcp.pop %v4086
  %v4100 = vmul.f32 1.0, %v4099
  %v4101 = vrcp.pop %v4087
  %v4102 = vmul.f32 1.0, %v4101
  %v4103 = vrcp.pop %v4088
  %v4104 = vmul.f32 1.0, %v4103
  %v4105 = vtanh.pop %v3979
  %v4106 = vtanh.pop %v3983
  %v4107 = vtanh.pop %v3987
  %v4108 = vtanh.pop %v3991
  %v4109 = vtanh.pop %v3995
  %v4110 = vtanh.pop %v3999
  %v4111 = vtanh.pop %v4003
  %v4112 = vtanh.pop %v4007
  %v4113 = vxor.u32 %v3980, 2147483648
  %v4114 = vxor.u32 %v3984, 2147483648
  %v4115 = vxor.u32 %v3988, 2147483648
  %v4116 = vxor.u32 %v3992, 2147483648
  %v4117 = vxor.u32 %v3996, 2147483648
  %v4118 = vxor.u32 %v4000, 2147483648
  %v4119 = vxor.u32 %v4004, 2147483648
  %v4120 = vxor.u32 %v4008, 2147483648
  %v4121 = vmul.f32 %v4113, 1.442695
  %v4122 = vpow.pop %v4121
  %v4123 = vmul.f32 %v4114, 1.442695
  %v4124 = vpow.pop %v4123
  %v4125 = vmul.f32 %v4115, 1.442695
  %v4126 = vpow.pop %v4125
  %v4127 = vmul.f32 %v4116, 1.442695
  %v4128 = vpow.pop %v4127
  %v4129 = vmul.f32 %v4117, 1.442695
  %v4130 = vpow.pop %v4129
  %v4131 = vmul.f32 %v4118, 1.442695
  %v4132 = vpow.pop %v4131
  %v4133 = vmul.f32 %v4119, 1.442695
  %v4134 = vpow.pop %v4133
  %v4135 = vmul.f32 %v4120, 1.442695
  %v4136 = vpow.pop %v4135
  %v4137 = vadd.f32 %v4122, 1.0
  %v4138 = vadd.f32 %v4124, 1.0
  %v4139 = vadd.f32 %v4126, 1.0
  %v4140 = vadd.f32 %v4128, 1.0
  %v4141 = vadd.f32 %v4130, 1.0
  %v4142 = vadd.f32 %v4132, 1.0
  %v4143 = vadd.f32 %v4134, 1.0
  %v4144 = vadd.f32 %v4136, 1.0
  %v4145 = vrcp.pop %v4137
  %v4146 = vmul.f32 1.0, %v4145
  %v4147 = vrcp.pop %v4138
  %v4148 = vmul.f32 1.0, %v4147
  %v4149 = vrcp.pop %v4139
  %v4150 = vmul.f32 1.0, %v4149
  %v4151 = vrcp.pop %v4140
  %v4152 = vmul.f32 1.0, %v4151
  %v4153 = vrcp.pop %v4141
  %v4154 = vmul.f32 1.0, %v4153
  %v4155 = vrcp.pop %v4142
  %v4156 = vmul.f32 1.0, %v4155
  %v4157 = vrcp.pop %v4143
  %v4158 = vmul.f32 1.0, %v4157
  %v4159 = vrcp.pop %v4144
  %v4160 = vmul.f32 1.0, %v4159
  %v4169 = vrot.slane %v3692, 7
  %v4170 = vrot.slane %v3693, 7
  %v4171 = vrot.slane %v3694, 7
  %v4172 = vrot.slane %v3695, 7
  %v4173 = vrot.slane %v3696, 7
  %v4174 = vrot.slane %v3697, 7
  %v4175 = vrot.slane %v3698, 7
  %v4176 = vrot.slane %v3699, 7
  %v4185 = vmul.f32 %v4090, %v4169
  %v4186 = vmul.f32 %v4092, %v4170
  %v4187 = vmul.f32 %v4094, %v4171
  %v4188 = vmul.f32 %v4096, %v4172
  %v4189 = vmul.f32 %v4098, %v4173
  %v4190 = vmul.f32 %v4100, %v4174
  %v4191 = vmul.f32 %v4102, %v4175
  %v4192 = vmul.f32 %v4104, %v4176
  %v4193 = vmul.f32 %v4042, %v4105
  %v4194 = vmul.f32 %v4044, %v4106
  %v4195 = vmul.f32 %v4046, %v4107
  %v4196 = vmul.f32 %v4048, %v4108
  %v4197 = vmul.f32 %v4050, %v4109
  %v4198 = vmul.f32 %v4052, %v4110
  %v4199 = vmul.f32 %v4054, %v4111
  %v4200 = vmul.f32 %v4056, %v4112
  %v4201 = vadd.f32 %v4185, %v4193
  %v4202 = vadd.f32 %v4186, %v4194
  %v4203 = vadd.f32 %v4187, %v4195
  %v4204 = vadd.f32 %v4188, %v4196
  %v4205 = vadd.f32 %v4189, %v4197
  %v4206 = vadd.f32 %v4190, %v4198
  %v4207 = vadd.f32 %v4191, %v4199
  %v4208 = vadd.f32 %v4192, %v4200
  %v4209 = vtanh.pop %v4201
  %v4210 = vtanh.pop %v4202
  %v4211 = vtanh.pop %v4203
  %v4212 = vtanh.pop %v4204
  %v4213 = vtanh.pop %v4205
  %v4214 = vtanh.pop %v4206
  %v4215 = vtanh.pop %v4207
  %v4216 = vtanh.pop %v4208
  %v4217 = vmul.f32 %v4146, %v4209
  %v4218 = vmul.f32 %v4148, %v4210
  %v4219 = vmul.f32 %v4150, %v4211
  %v4220 = vmul.f32 %v4152, %v4212
  %v4221 = vmul.f32 %v4154, %v4213
  %v4222 = vmul.f32 %v4156, %v4214
  %v4223 = vmul.f32 %v4158, %v4215
  %v4224 = vmul.f32 %v4160, %v4216
  %v4225 = vpack.c.bf16 %v4217, %v4217
  %v4226 = vpack.c.bf16 %v4218, %v4218
  %v4227 = vpack.c.bf16 %v4219, %v4219
  %v4228 = vpack.c.bf16 %v4220, %v4220
  %v4229 = vpack.c.bf16 %v4221, %v4221
  %v4230 = vpack.c.bf16 %v4222, %v4222
  %v4231 = vpack.c.bf16 %v4223, %v4223
  %v4232 = vpack.c.bf16 %v4224, %v4224
  %vm4233 = vsmask.f32 7950
  %vm4234 = vmand %vm3724, %vm4233
  %v4235 = vld [vmem:[%s4] sm:$0x8]
  %v4236 = vsel %vm4234, %v4225, %v4235
  %4237 = vst [vmem:[%s4] sm:$0x8] %v4236
  %v4238 = vld [vmem:[%s4 + $0x4] sm:$0x8]
  %v4239 = vsel %vm4234, %v4226, %v4238
  %4240 = vst [vmem:[%s4 + $0x4] sm:$0x8] %v4239
  %v4241 = vld [vmem:[%s4 + $0x8] sm:$0x8]
  %v4242 = vsel %vm4234, %v4227, %v4241
  %4243 = vst [vmem:[%s4 + $0x8] sm:$0x8] %v4242
  %v4244 = vld [vmem:[%s4 + $0xc] sm:$0x8]
  %v4245 = vsel %vm4234, %v4228, %v4244
  %4246 = vst [vmem:[%s4 + $0xc] sm:$0x8] %v4245
  %v4247 = vld [vmem:[%s4 + $0x10] sm:$0x8]
  %v4248 = vsel %vm4234, %v4229, %v4247
  %4249 = vst [vmem:[%s4 + $0x10] sm:$0x8] %v4248
  %v4250 = vld [vmem:[%s4 + $0x14] sm:$0x8]
  %v4251 = vsel %vm4234, %v4230, %v4250
  %4252 = vst [vmem:[%s4 + $0x14] sm:$0x8] %v4251
  %v4253 = vld [vmem:[%s4 + $0x18] sm:$0x8]
  %v4254 = vsel %vm4234, %v4231, %v4253
  %4255 = vst [vmem:[%s4 + $0x18] sm:$0x8] %v4254
  %v4256 = vld [vmem:[%s4 + $0x1c] sm:$0x8]
  %v4257 = vsel %vm4234, %v4232, %v4256
  %4258 = vst [vmem:[%s4 + $0x1c] sm:$0x8] %v4257
  %v4267 = vrot.slane %v4218, 7
  %v4268 = vrot.slane %v4219, 6
  %v4269 = vsel %vm758, %v4268, %v4267
  %v4270 = vrot.slane %v4220, 5
  %v4271 = vsel %vm761, %v4270, %v4269
  %v4272 = vrot.slane %v4221, 4
  %v4273 = vsel %vm764, %v4272, %v4271
  %v4274 = vrot.slane %v4222, 3
  %v4275 = vsel %vm767, %v4274, %v4273
  %v4276 = vrot.slane %v4223, 2
  %v4277 = vsel %vm770, %v4276, %v4275
  %v4278 = vrot.slane %v4224, 1
  %v4279 = vsel %vm773, %v4278, %v4277
  %4282 = vst [vmem:[%s5 - $0x7] sm:$0x80] %v4217
  %4283 = vst [vmem:[%s5 + $0x1] sm:$0x7f] %v4279
  %v4292 = vrot.slane %v4202, 7
  %v4293 = vrot.slane %v4203, 6
  %v4294 = vsel %vm758, %v4293, %v4292
  %v4295 = vrot.slane %v4204, 5
  %v4296 = vsel %vm761, %v4295, %v4294
  %v4297 = vrot.slane %v4205, 4
  %v4298 = vsel %vm764, %v4297, %v4296
  %v4299 = vrot.slane %v4206, 3
  %v4300 = vsel %vm767, %v4299, %v4298
  %v4301 = vrot.slane %v4207, 2
  %v4302 = vsel %vm770, %v4301, %v4300
  %v4303 = vrot.slane %v4208, 1
  %v4304 = vsel %vm773, %v4303, %v4302
  %4307 = vst [vmem:[%s6 - $0x7] sm:$0x80] %v4201
  %4308 = vst [vmem:[%s6 + $0x1] sm:$0x7f] %v4304
  // Predicated region
  $region22: #{rnn_forward_pallas.4} parent=0 // pred_check
    _
  $region23: #{rnn_forward_pallas.4} parent=0 // pred_check_branch
    %4310 = sbr.rel (0) target = $region25
  $region24: #{rnn_forward_pallas.4} parent=0 // pred_region
    _
  $region25: #{rnn_forward_pallas.4} parent=0 // pred_fallthru
    _
  // Predicated region
  $region26: #{rnn_forward_pallas.4} parent=0 // pred_check
    _
  $region27: #{rnn_forward_pallas.4} parent=0 // pred_check_branch
    %4312 = sbr.rel (0) target = $region29
  $region28: #{rnn_forward_pallas.4} parent=0 // pred_region
    _
  $region29: #{rnn_forward_pallas.4} parent=0 // pred_fallthru
    _
  // Predicated region
  $region30: #{rnn_forward_pallas.4} parent=0 // pred_check
    _
  $region31: #{rnn_forward_pallas.4} parent=0 // pred_check_branch
    %4314 = sbr.rel (0) target = $region33
  $region32: #{rnn_forward_pallas.4} parent=0 // pred_region
    _
  $region33: #{rnn_forward_pallas.4} parent=0 // pred_fallthru
    _
  // Predicated region
  $region34: #{rnn_forward_pallas.4} parent=0 // pred_check
    _
  $region35: #{rnn_forward_pallas.4} parent=0 // pred_check_branch
    %4316 = sbr.rel (0) target = $region37
  $region36: #{rnn_forward_pallas.4} parent=0 // pred_region
    _
  $region37: #{rnn_forward_pallas.4} parent=0 // pred_fallthru
    _
  // Predicated region
  $region38: #{rnn_forward_pallas.4} parent=0 // pred_check
    _
  $region39: #{rnn_forward_pallas.4} parent=0 // pred_check_branch
    %4318 = sbr.rel (0) target = $region41
  $region40: #{rnn_forward_pallas.4} parent=0 // pred_region
    _
  $region41: #{rnn_forward_pallas.4} parent=0 // pred_fallthru
    _
  // Predicated region
  $region42: #{rnn_forward_pallas.4} parent=0 // pred_check
    _
  $region43: #{rnn_forward_pallas.4} parent=0 // pred_check_branch
    %4320 = sbr.rel (0) target = $region45
  $region44: #{rnn_forward_pallas.4} parent=0 // pred_region
    _
  $region45: #{rnn_forward_pallas.4} parent=0 // pred_fallthru
    _

</llo_original>
